<compile_context>
chip_gen: v6e
topology: v6e:2x2x1
jax: 0.10.0
libtpu: 0.0.40
codegen_flags: <defaults>
</compile_context>

<pallas_src>
import functools
import math

import numpy as np
import jax
import jax.numpy as jnp
from jax.experimental import pallas as pl
from jax.experimental.pallas import tpu as pltpu

EPSILON = 1.1920928955078125e-07   # torch.finfo(torch.float).eps (torchaudio kaldi EPSILON)
PREEMPHASIS = 0.97                 # kaldi.fbank default preemphasis_coefficient


def _round_up(x, m):
    return ((x + m - 1) // m) * m


def _mel_scale(freq):
    return 1127.0 * np.log1p(freq / 700.0)


def _get_mel_banks(num_bins, padded_window_size, sample_freq, low_freq, high_freq):
    """kaldi get_mel_banks with vtln_warp == 1.0. Returns (num_bins, padded//2) float64."""
    num_fft_bins = padded_window_size // 2
    fft_bin_width = sample_freq / padded_window_size
    mel_low = _mel_scale(low_freq)
    mel_high = _mel_scale(high_freq)
    mel_delta = (mel_high - mel_low) / (num_bins + 1)
    b = np.arange(num_bins, dtype=np.float64)[:, None]
    left_mel = mel_low + b * mel_delta
    center_mel = mel_low + (b + 1.0) * mel_delta
    right_mel = mel_low + (b + 2.0) * mel_delta
    mel = _mel_scale(fft_bin_width * np.arange(num_fft_bins, dtype=np.float64))[None, :]
    up_slope = (mel - left_mel) / (center_mel - left_mel)
    down_slope = (right_mel - mel) / (right_mel - center_mel)
    return np.maximum(0.0, np.minimum(up_slope, down_slope))


def _physical_vmem_bytes():
    """Per-core VMEM capacity; conservative (v7x-sized) default if the query fails."""
    try:
        info = pltpu.get_tpu_info()
        cap = getattr(info, "vmem_capacity_bytes", None)
        if cap:
            return int(cap)
    except Exception:
        pass
    return 64 << 20


def _pick_frame_tile(num_frames, big_vmem):
    """Frame-tile size: low last-tile padding waste, >= ~8 grid steps when possible."""
    nf8 = _round_up(max(num_frames, 1), 8)
    if nf8 <= 256:
        return nf8                          # one full-array tile, no tiling waste
    cands = (512, 256, 128, 64, 32, 16) if big_vmem else (256, 128, 64, 32, 16)
    best_key, best_tf = None, cands[-1]
    for tf in cands:
        f_pad = _round_up(nf8, tf)
        waste = (f_pad - num_frames) / f_pad
        steps = f_pad // tf
        # priority: low last-tile waste, then enough steps for megacore sharding /
        # pipeline overlap, then the largest tile (fewest per-step overheads).
        key = (waste > 0.10, steps < 8, -tf)
        if best_key is None or key < best_key:
            best_key, best_tf = key, tf
    return best_tf


def _fbank_kernel(frames_ref, cos_ref, sin_ref, mel_ref, o_ref, *, use_log):
    """One frame tile: folded-DFT matmuls (bf16 x bf16 -> f32) -> power -> mel -> log."""
    x = frames_ref[...]                                                        # (TF, Wp) bf16
    re = jnp.dot(x, cos_ref[...], preferred_element_type=jnp.float32)          # (TF, NFp) f32
    power = re * re
    im = jnp.dot(x, sin_ref[...], preferred_element_type=jnp.float32)          # (TF, NFp) f32
    power = power + im * im                                                    # (TF, NFp) f32
    # Mel projection kept in f32 (~10x smaller matmul; protects low-energy bins).
    mel_e = jnp.dot(power, mel_ref[...], preferred_element_type=jnp.float32)   # (TF, Mp)
    if use_log:
        mel_e = jnp.log(jnp.maximum(mel_e, EPSILON))
    o_ref[...] = mel_e


class MelSpecTransform:
    """JAX/Pallas port of the PyTorch MelSpecTransform (kaldi.fbank forward path)."""

    def __init__(self, sr, n_mels, clip_length, target_time_bins=1024,
                 frame_length=None, hop_length=None, f_min=20, f_max=None, log=True):
        self.sr = sr
        self.n_mels = n_mels
        self.target_time_bins = target_time_bins
        self.clip_length = clip_length
        self.f_min = f_min
        self.f_max = sr // 2 if f_max is None else f_max
        self.log = log
        self.hop_length = hop_length if hop_length is not None else clip_length * 1000 / target_time_bins
        self.frame_length = frame_length if frame_length is not None else 2.5 * self.hop_length

        # kaldi frame geometry (snip_edges=True, round_to_power_of_two=True).
        # Note: int() truncation matches torchaudio's kaldi implementation.
        self.window_shift = int(sr * self.hop_length * 0.001)
        self.window_size = int(sr * self.frame_length * 0.001)
        self.padded_window_size = 1 << (self.window_size - 1).bit_length()
        self.n_freq = self.padded_window_size // 2 + 1

        # lane-padded sizes for the kernel
        self.w_pad = _round_up(self.window_size, 128)
        self.nf_pad = _round_up(self.n_freq, 128)
        self.mel_pad = _round_up(self.n_mels, 128)     # lane-dense output

        # ---- fold DC removal + preemphasis + hanning window into the DFT matrix (f64) ----
        W = self.window_size
        n = np.arange(W, dtype=np.float64)
        win = 0.5 - 0.5 * np.cos(2.0 * math.pi * n / (W - 1))      # kaldi 'hanning'

        k = np.arange(self.n_freq, dtype=np.float64)
        ang = 2.0 * math.pi * np.outer(n, k) / self.padded_window_size
        cs = np.concatenate([np.cos(ang), np.sin(ang)], axis=1)    # (W, 2*n_freq)

        m1 = win[:, None] * cs                                     # window (diagonal)
        m2 = m1.copy()                                             # preemphasis (replicate edge)
        m2[:-1] -= PREEMPHASIS * m1[1:]
        m2[0] -= PREEMPHASIS * m1[0]
        t = m2 - m2.mean(axis=0, keepdims=True)                    # per-frame DC removal (rank-1)

        cos_full = np.zeros((self.w_pad, self.nf_pad), dtype=np.float64)
        sin_full = np.zeros((self.w_pad, self.nf_pad), dtype=np.float64)
        cos_full[:W, :self.n_freq] = t[:, :self.n_freq]
        sin_full[:W, :self.n_freq] = t[:, self.n_freq:]
        # bf16 constants -> native-rate MXU with f32 accumulation in the kernel.
        self.cos_m = jnp.asarray(cos_full, dtype=jnp.bfloat16)     # (Wp, NFp) bf16
        self.sin_m = jnp.asarray(sin_full, dtype=jnp.bfloat16)     # (Wp, NFp) bf16

        # mel filterbank: (NFp, Mp) f32; Nyquist row + all padded rows/cols are zero
        mel = _get_mel_banks(n_mels, self.padded_window_size, float(sr),
                             float(self.f_min), float(self.f_max))  # (M, padded//2)
        mel = np.pad(mel, ((0, 0), (0, 1)))                         # (M, n_freq)
        mel_full = np.zeros((self.nf_pad, self.mel_pad), dtype=np.float64)
        mel_full[:self.n_freq, :self.n_mels] = mel.T
        self.mel_m = jnp.asarray(mel_full, dtype=jnp.float32)       # (NFp, Mp) f32

        self._single_buffer_consts = None   # resolved on first call (pl.Buffered support)

    # ---------------------------------------------------------------- pallas call
    def _run_pallas(self, frames, tf, f_pad, vmem_limit, single_buffer_consts):
        const_kwargs = {}
        if single_buffer_consts:
            # constants have a fixed block index -> one resident VMEM buffer suffices
            const_kwargs["pipeline_mode"] = pl.Buffered(1)
        in_specs = [
            pl.BlockSpec((tf, self.w_pad), lambda i: (i, 0)),                        # streamed
            pl.BlockSpec((self.w_pad, self.nf_pad), lambda i: (0, 0), **const_kwargs),   # cos
            pl.BlockSpec((self.w_pad, self.nf_pad), lambda i: (0, 0), **const_kwargs),   # sin
            pl.BlockSpec((self.nf_pad, self.mel_pad), lambda i: (0, 0), **const_kwargs), # mel
        ]
        out_specs = pl.BlockSpec((tf, self.mel_pad), lambda i: (i, 0))               # lane-dense
        kernel = functools.partial(_fbank_kernel, use_log=self.log)
        return pl.pallas_call(
            kernel,
            out_shape=jax.ShapeDtypeStruct((f_pad, self.mel_pad), jnp.float32),
            grid=(f_pad // tf,),
            in_specs=in_specs,
            out_specs=out_specs,
            compiler_params=pltpu.CompilerParams(
                dimension_semantics=("parallel",),
                vmem_limit_bytes=vmem_limit),
        )(frames, self.cos_m, self.sin_m, self.mel_m)

    # ---------------------------------------------------------------- forward
    def __call__(self, waveform):
        # waveform: (channels, samples) float32
        wave = waveform - jnp.mean(waveform)       # module's global mean subtraction
        wave = wave[0]                             # kaldi.fbank uses channel 0
        num_samples = wave.shape[0]
        num_frames = 1 + (num_samples - self.window_size) // self.window_shift

        # strided frame extraction (kaldi _get_strided) -- plain-JAX gather glue
        # TODO(synk): stream the raw waveform per frame tile instead of this ~2.5x-expanded
        # HBM round-trip (each tile only needs one contiguous waveform span).
        idx = (jnp.arange(num_frames)[:, None] * self.window_shift
               + jnp.arange(self.window_size)[None, :])
        frames = wave[idx].astype(jnp.bfloat16)                              # (F, W) bf16

        phys_vmem = _physical_vmem_bytes()
        tf = _pick_frame_tile(num_frames, big_vmem=phys_vmem >= (96 << 20))
        f_pad = _round_up(max(num_frames, 1), tf)
        frames = jnp.pad(frames, ((0, f_pad - num_frames),
                                  (0, self.w_pad - self.window_size)))       # (Fp, Wp)

        # VMEM budget: constants (x2 covers the double-buffered fallback), double-buffered
        # streamed tiles, in-kernel f32 intermediates, headroom; cap ~3/4 of physical VMEM.
        const_bytes = 2 * (self.cos_m.size + self.sin_m.size) + 4 * self.mel_m.size
        tile_bytes = tf * (2 * self.w_pad + 4 * self.mel_pad)
        interm_bytes = 4 * tf * (3 * self.nf_pad + self.mel_pad)
        needed = 2 * const_bytes + 2 * tile_bytes + interm_bytes + (4 << 20)
        cap = max((3 * phys_vmem) // 4, 32 << 20)
        vmem_limit = int(min(max(needed, 32 << 20), cap))

        if self._single_buffer_consts is None:
            self._single_buffer_consts = hasattr(pl, "Buffered")
        try:
            spec = self._run_pallas(frames, tf, f_pad, vmem_limit,
                                    self._single_buffer_consts)
        except Exception:
            if not self._single_buffer_consts:
                raise
            # pl.Buffered(1) (single-buffered constants) unsupported on this build:
            # fall back to default double-buffered constant BlockSpecs.
            self._single_buffer_consts = False
            spec = self._run_pallas(frames, tf, f_pad, vmem_limit, False)

        # slice valid frames / mel bins, then pad or truncate time to target_time_bins
        valid = min(num_frames, self.target_time_bins)
        spec = spec[:valid, :self.n_mels]
        if valid < self.target_time_bins:
            spec = jnp.concatenate(
                [spec, jnp.zeros((self.target_time_bins - valid, self.n_mels), spec.dtype)],
                axis=0)
        return spec[None]  # (1, target_time_bins, n_mels)


def _reference_logmel(mod, waveform_np):
    """Stepwise (unfused) kaldi.fbank reference in float64 numpy."""
    wave = (waveform_np - waveform_np.mean())[0].astype(np.float64)
    W, shift, Npad = mod.window_size, mod.window_shift, mod.padded_window_size
    num_frames = 1 + (wave.shape[0] - W) // shift
    idx = np.arange(num_frames)[:, None] * shift + np.arange(W)[None, :]
    frames = wave[idx]
    frames = frames - frames.mean(axis=1, keepdims=True)                  # remove_dc_offset
    prev = np.concatenate([frames[:, :1], frames[:, :-1]], axis=1)        # replicate-edge
    frames = frames - PREEMPHASIS * prev                                  # preemphasis
    n = np.arange(W, dtype=np.float64)
    win = 0.5 - 0.5 * np.cos(2.0 * math.pi * n / (W - 1))
    frames = frames * win
    frames = np.pad(frames, ((0, 0), (0, Npad - W)))
    power = np.abs(np.fft.rfft(frames, axis=1)) ** 2
    mel = np.asarray(mod.mel_m)[:mod.n_freq, :mod.n_mels].astype(np.float64)
    out = power @ mel
    if mod.log:
        out = np.log(np.maximum(out, EPSILON))
    valid = min(num_frames, mod.target_time_bins)
    res = np.zeros((mod.target_time_bins, mod.n_mels))
    res[:valid] = out[:valid]
    return res[None]


if __name__ == "__main__":
    # Small, self-consistent config:
    #   sr=2000 Hz, 1 s clip, 8 target time bins
    #   -> hop = 125 ms (250 samples), frame = 312.5 ms (625 samples),
    #      padded FFT size = 1024, num_frames = 6 (zero-padded to 8 frames, one tile).
    sr = 2000
    n_mels = 16
    clip_length = 1
    target_time_bins = 8

    mod = MelSpecTransform(sr=sr, n_mels=n_mels, clip_length=clip_length,
                           target_time_bins=target_time_bins)

    key = jax.random.PRNGKey(0)
    waveform = jax.random.normal(key, (1, sr * clip_length), dtype=jnp.float32)

    out = mod(waveform)
    out = jax.block_until_ready(out)

    assert out.shape == (1, target_time_bins, n_mels), out.shape
    assert out.dtype == jnp.float32
    assert bool(jnp.all(jnp.isfinite(out)))

    # correctness check vs the stepwise (unfused) f64 kaldi pipeline; tolerance loosened
    # from 5e-2 to 1e-1 because the kernel now uses bf16 MXU inputs (f32 accumulation).
    ref = _reference_logmel(mod, np.asarray(waveform))
    max_err = float(np.max(np.abs(np.asarray(out, dtype=np.float64) - ref)))
    assert max_err < 1e-1, f"log-mel mismatch vs reference: max abs err {max_err}"

    print("KERNEL_OK")
</pallas_src>

<mosaic_0001>
module attributes {stable_mosaic.version = 11 : i64} {
  func.func @_fbank_kernel(%arg0: i32, %arg1: memref<8x640xbf16, #tpu.memory_space<vmem>>, %arg2: memref<640x640xbf16, #tpu.memory_space<vmem>>, %arg3: memref<640x640xbf16, #tpu.memory_space<vmem>>, %arg4: memref<640x128xf32, #tpu.memory_space<vmem>>, %arg5: memref<8x128xf32, #tpu.memory_space<vmem>>) attributes {dimension_semantics = [#tpu.dimension_semantics<parallel>], iteration_bounds = array<i64: 1>, scalar_prefetch = 0 : i64, scratch_operands = 0 : i64, tpu.core_type = #tpu.core_type<tc>, window_params = [{transform_indices = @transform_0, window_bounds = array<i64: 8, 640>}, {pipeline_mode = #tpu.pipeline_mode<synchronous>, transform_indices = @transform_1, window_bounds = array<i64: 640, 640>}, {pipeline_mode = #tpu.pipeline_mode<synchronous>, transform_indices = @transform_2, window_bounds = array<i64: 640, 640>}, {pipeline_mode = #tpu.pipeline_mode<synchronous>, transform_indices = @transform_3, window_bounds = array<i64: 640, 128>}, {transform_indices = @transform_4, window_bounds = array<i64: 8, 128>}]} {
    %c0 = arith.constant 0 : index
    %c0_0 = arith.constant 0 : index
    %0 = vector.load %arg1[%c0, %c0_0] : memref<8x640xbf16, #tpu.memory_space<vmem>>, vector<8x640xbf16>
    %c0_1 = arith.constant 0 : index
    %c0_2 = arith.constant 0 : index
    %1 = vector.load %arg2[%c0_1, %c0_2] : memref<640x640xbf16, #tpu.memory_space<vmem>>, vector<640x640xbf16>
    %cst = arith.constant dense<0.000000e+00> : vector<8x640xf32>
    %2 = tpu.matmul %0, %1, %cst {dimension_numbers = #tpu.dot_dimension_numbers<[1], [0], [0], [1], [0, 0, 1, 1], [], []>} : vector<8x640xbf16>, vector<640x640xbf16>, vector<8x640xf32> -> vector<8x640xf32>
    %3 = arith.mulf %2, %2 : vector<8x640xf32>
    %c0_3 = arith.constant 0 : index
    %c0_4 = arith.constant 0 : index
    %4 = vector.load %arg3[%c0_3, %c0_4] : memref<640x640xbf16, #tpu.memory_space<vmem>>, vector<640x640xbf16>
    %cst_5 = arith.constant dense<0.000000e+00> : vector<8x640xf32>
    %5 = tpu.matmul %0, %4, %cst_5 {dimension_numbers = #tpu.dot_dimension_numbers<[1], [0], [0], [1], [0, 0, 1, 1], [], []>} : vector<8x640xbf16>, vector<640x640xbf16>, vector<8x640xf32> -> vector<8x640xf32>
    %6 = arith.mulf %5, %5 : vector<8x640xf32>
    %7 = arith.addf %3, %6 : vector<8x640xf32>
    %c0_6 = arith.constant 0 : index
    %c0_7 = arith.constant 0 : index
    %8 = vector.load %arg4[%c0_6, %c0_7] : memref<640x128xf32, #tpu.memory_space<vmem>>, vector<640x128xf32>
    %cst_8 = arith.constant dense<0.000000e+00> : vector<8x128xf32>
    %9 = tpu.matmul %7, %8, %cst_8 {dimension_numbers = #tpu.dot_dimension_numbers<[1], [0], [0], [1], [0, 0, 1, 1], [], []>} : vector<8x640xf32>, vector<640x128xf32>, vector<8x128xf32> -> vector<8x128xf32>
    %cst_9 = arith.constant 1.1920929E-7 : f32
    %10 = vector.broadcast %cst_9 : f32 to vector<8x128xf32>
    %11 = arith.maximumf %9, %10 : vector<8x128xf32>
    %12 = math.log %11 : vector<8x128xf32>
    %c0_10 = arith.constant 0 : index
    %c0_11 = arith.constant 0 : index
    %13 = vector.load %arg5[%c0_10, %c0_11] : memref<8x128xf32, #tpu.memory_space<vmem>>, vector<8x128xf32>
    tpu.vector_store %arg5[%c0_10, %c0_11], %12 {strides = array<i32>} : memref<8x128xf32, #tpu.memory_space<vmem>>, vector<8x128xf32>,
    return
  }
  func.func @transform_0(%arg0: i32) -> (i32, i32) {
    %c0_i32 = arith.constant 0 : i32
    %c0_i32_0 = arith.constant 0 : i32
    return %arg0, %c0_i32 : i32, i32
  }
  func.func @transform_1(%arg0: i32) -> (i32, i32) {
    %c0_i32 = arith.constant 0 : i32
    %c0_i32_0 = arith.constant 0 : i32
    %c0_i32_1 = arith.constant 0 : i32
    return %c0_i32, %c0_i32_0 : i32, i32
  }
  func.func @transform_2(%arg0: i32) -> (i32, i32) {
    %c0_i32 = arith.constant 0 : i32
    %c0_i32_0 = arith.constant 0 : i32
    %c0_i32_1 = arith.constant 0 : i32
    return %c0_i32, %c0_i32_0 : i32, i32
  }
  func.func @transform_3(%arg0: i32) -> (i32, i32) {
    %c0_i32 = arith.constant 0 : i32
    %c0_i32_0 = arith.constant 0 : i32
    %c0_i32_1 = arith.constant 0 : i32
    return %c0_i32, %c0_i32_0 : i32, i32
  }
  func.func @transform_4(%arg0: i32) -> (i32, i32) {
    %c0_i32 = arith.constant 0 : i32
    %c0_i32_0 = arith.constant 0 : i32
    return %arg0, %c0_i32 : i32, i32
  }
}

module attributes {stable_mosaic.version = 11 : i64} {
  func.func @_fbank_kernel(%arg0: i32, %arg1: memref<8x640xbf16, #tpu.memory_space<vmem>>, %arg2: memref<640x640xbf16, #tpu.memory_space<vmem>>, %arg3: memref<640x640xbf16, #tpu.memory_space<vmem>>, %arg4: memref<640x128xf32, #tpu.memory_space<vmem>>, %arg5: memref<8x128xf32, #tpu.memory_space<vmem>>) attributes {dimension_semantics = [#tpu.dimension_semantics<parallel>], iteration_bounds = array<i64: 1>, scalar_prefetch = 0 : i64, scratch_operands = 0 : i64, tpu.core_type = #tpu.core_type<tc>, window_params = [{transform_indices = @transform_0, window_bounds = array<i64: 8, 640>}, {pipeline_mode = #tpu.pipeline_mode<synchronous>, transform_indices = @transform_1, window_bounds = array<i64: 640, 640>}, {pipeline_mode = #tpu.pipeline_mode<synchronous>, transform_indices = @transform_2, window_bounds = array<i64: 640, 640>}, {pipeline_mode = #tpu.pipeline_mode<synchronous>, transform_indices = @transform_3, window_bounds = array<i64: 640, 128>}, {transform_indices = @transform_4, window_bounds = array<i64: 8, 128>}]} {
    %c0 = arith.constant 0 : index
    %c0_0 = arith.constant 0 : index
    %0 = vector.load %arg1[%c0, %c0_0] : memref<8x640xbf16, #tpu.memory_space<vmem>>, vector<8x640xbf16>
    %c0_1 = arith.constant 0 : index
    %c0_2 = arith.constant 0 : index
    %1 = vector.load %arg2[%c0_1, %c0_2] : memref<640x640xbf16, #tpu.memory_space<vmem>>, vector<640x640xbf16>
    %cst = arith.constant dense<0.000000e+00> : vector<8x640xf32>
    %2 = tpu.matmul %0, %1, %cst {dimension_numbers = #tpu.dot_dimension_numbers<[1], [0], [0], [1], [0, 0, 1, 1], [], []>} : vector<8x640xbf16>, vector<640x640xbf16>, vector<8x640xf32> -> vector<8x640xf32>
    %3 = arith.mulf %2, %2 : vector<8x640xf32>
    %c0_3 = arith.constant 0 : index
    %c0_4 = arith.constant 0 : index
    %4 = vector.load %arg3[%c0_3, %c0_4] : memref<640x640xbf16, #tpu.memory_space<vmem>>, vector<640x640xbf16>
    %cst_5 = arith.constant dense<0.000000e+00> : vector<8x640xf32>
    %5 = tpu.matmul %0, %4, %cst_5 {dimension_numbers = #tpu.dot_dimension_numbers<[1], [0], [0], [1], [0, 0, 1, 1], [], []>} : vector<8x640xbf16>, vector<640x640xbf16>, vector<8x640xf32> -> vector<8x640xf32>
    %6 = arith.mulf %5, %5 : vector<8x640xf32>
    %7 = arith.addf %3, %6 : vector<8x640xf32>
    %c0_6 = arith.constant 0 : index
    %c0_7 = arith.constant 0 : index
    %8 = vector.load %arg4[%c0_6, %c0_7] : memref<640x128xf32, #tpu.memory_space<vmem>>, vector<640x128xf32>
    %cst_8 = arith.constant dense<0.000000e+00> : vector<8x128xf32>
    %9 = tpu.matmul %7, %8, %cst_8 {dimension_numbers = #tpu.dot_dimension_numbers<[1], [0], [0], [1], [0, 0, 1, 1], [], []>} : vector<8x640xf32>, vector<640x128xf32>, vector<8x128xf32> -> vector<8x128xf32>
    %cst_9 = arith.constant 1.1920929E-7 : f32
    %10 = vector.broadcast %cst_9 : f32 to vector<8x128xf32>
    %11 = arith.maximumf %9, %10 : vector<8x128xf32>
    %12 = math.log %11 : vector<8x128xf32>
    %c0_10 = arith.constant 0 : index
    %c0_11 = arith.constant 0 : index
    %13 = vector.load %arg5[%c0_10, %c0_11] : memref<8x128xf32, #tpu.memory_space<vmem>>, vector<8x128xf32>
    tpu.vector_store %arg5[%c0_10, %c0_11], %12 {strides = array<i32>} : memref<8x128xf32, #tpu.memory_space<vmem>>, vector<8x128xf32>,
    return
  }
  func.func @transform_0(%arg0: i32) -> (i32, i32) {
    %c0_i32 = arith.constant 0 : i32
    %c0_i32_0 = arith.constant 0 : i32
    return %arg0, %c0_i32 : i32, i32
  }
  func.func @transform_1(%arg0: i32) -> (i32, i32) {
    %c0_i32 = arith.constant 0 : i32
    %c0_i32_0 = arith.constant 0 : i32
    %c0_i32_1 = arith.constant 0 : i32
    return %c0_i32, %c0_i32_0 : i32, i32
  }
  func.func @transform_2(%arg0: i32) -> (i32, i32) {
    %c0_i32 = arith.constant 0 : i32
    %c0_i32_0 = arith.constant 0 : i32
    %c0_i32_1 = arith.constant 0 : i32
    return %c0_i32, %c0_i32_0 : i32, i32
  }
  func.func @transform_3(%arg0: i32) -> (i32, i32) {
    %c0_i32 = arith.constant 0 : i32
    %c0_i32_0 = arith.constant 0 : i32
    %c0_i32_1 = arith.constant 0 : i32
    return %c0_i32, %c0_i32_0 : i32, i32
  }
  func.func @transform_4(%arg0: i32) -> (i32, i32) {
    %c0_i32 = arith.constant 0 : i32
    %c0_i32_0 = arith.constant 0 : i32
    return %arg0, %c0_i32 : i32, i32
  }
}

</mosaic_0001>

<llo_original>
// kernel: tpu_custom_call.1
$region0: #{tpu_custom_call.1}
  #allocation0 [shape = 'u32[]', space=smem, size = 0x4, offset = 0x4, fixed_abs, tag = 'smem constant byte address 0x4 - core index']
  #allocation1 [shape = 'u32[144,128]{1,0:T(1,128)}', space=vmem, size = 0x12000, scoped, tag = 'internal scratch']
  %s0 = inlined_call_operand.hbm [shape: bf16[8,640], index: 0, kind: input, shape index: {}]
  %s1 = inlined_call_operand.hbm [shape: bf16[640,640], index: 1, kind: input, shape index: {}]
  %s2 = inlined_call_operand.hbm [shape: bf16[640,640], index: 2, kind: input, shape index: {}]
  %s3 = inlined_call_operand.hbm [shape: f32[640,128], index: 3, kind: input, shape index: {}]
  %s4 = inlined_call_operand.hbm [shape: f32[8,128], index: 4, kind: output, shape index: {}]
  %s5 = sld [smem:[#allocation0]]
  $region42: #{tpu_custom_call.1} parent=0
    _
  %s7 = ssub.s32 1, %s5
  %s8 = scalar_select 0, %s7, %s5
  $region1: #{tpu_custom_call.1} parent=0
    #allocation2 [shape = 'u8[10240]{0}', space=vmem, size = 0x2800, scoped, tag = 'input window, operand 0, single buffered']
    #allocation3 [shape = 's32[1]{0}', space=sflag, size = 0x4, scoped, tag = 'scoped memory for tpu_custom_call.1']
    #allocation4 [shape = 's32[1]{0}', space=sflag, size = 0x4, scoped, tag = 'scoped memory for tpu_custom_call.1']
    #allocation5 [shape = 'u8[819200]{0}', space=vmem, size = 0xc8000, scoped, tag = 'input window, operand 1, single buffered']
    #allocation6 [shape = 's32[1]{0}', space=sflag, size = 0x4, scoped, tag = 'scoped memory for tpu_custom_call.1']
    #allocation7 [shape = 'u8[819200]{0}', space=vmem, size = 0xc8000, scoped, tag = 'input window, operand 2, single buffered']
    #allocation8 [shape = 'u8[327680]{0}', space=vmem, size = 0x50000, scoped, tag = 'input window, operand 3, single buffered']
    #allocation9 [shape = 's32[1]{0}', space=sflag, size = 0x4, scoped, tag = 'scoped memory for tpu_custom_call.1']
    #allocation10 [shape = 'u8[4096]{0}', space=vmem, size = 0x1000, scoped, tag = 'output window, operand 0, single buffered']
    %9 = vsyncpa [#allocation3], 0
    %10 = vsyncpa [#allocation6], 0
    %11 = vsyncpa [#allocation9], 0
    %12 = vsyncpa [#allocation4], 0
    // Predicated region
    $region2: #{tpu_custom_call.1} parent=1 // pred_check
      _
    $region3: #{tpu_custom_call.1} parent=1 // pred_check_branch
      %14 = sbr.rel (0) target = $region5
    $region4: #{tpu_custom_call.1} parent=1 // pred_region
      %s16 = ssub.s32 320, 320
      %17 = vsyncadd [#allocation3], %s16
      %s19 = sshll.u32 [#allocation2], 4
      %s20 = int_to_ptr.vmem [resolvable:$true] %s19
      %22 = dma.hbm_to_vmem [thread:$0]  %s0, 320, %s20, [#allocation3]
    $region5: #{tpu_custom_call.1} parent=1 // pred_fallthru
      _
    // Predicated region
    $region6: #{tpu_custom_call.1} parent=1 // pred_check
      _
    $region7: #{tpu_custom_call.1} parent=1 // pred_check_branch
      %24 = sbr.rel (0) target = $region9
    $region8: #{tpu_custom_call.1} parent=1 // pred_region
      %s26 = ssub.s32 25600, 25600
      %27 = vsyncadd [#allocation6], %s26
      %s28 = sshll.u32 [#allocation5], 4
      %s29 = int_to_ptr.vmem [resolvable:$true] %s28
      %34 = dma.hbm_to_vmem [thread:$0]  %s1, 25600, %s29, [#allocation6], 320, 320, 20
    $region9: #{tpu_custom_call.1} parent=1 // pred_fallthru
      _
    // Predicated region
    $region10: #{tpu_custom_call.1} parent=1 // pred_check
      _
    $region11: #{tpu_custom_call.1} parent=1 // pred_check_branch
      %36 = sbr.rel (0) target = $region13
    $region12: #{tpu_custom_call.1} parent=1 // pred_region
      %s38 = ssub.s32 25600, 25600
      %39 = vsyncadd [#allocation6], %s38
      %s40 = sshll.u32 [#allocation7], 4
      %s41 = int_to_ptr.vmem [resolvable:$true] %s40
      %46 = dma.hbm_to_vmem [thread:$0]  %s2, 25600, %s41, [#allocation6], 320, 320, 20
    $region13: #{tpu_custom_call.1} parent=1 // pred_fallthru
      _
    // Predicated region
    $region14: #{tpu_custom_call.1} parent=1 // pred_check
      _
    $region15: #{tpu_custom_call.1} parent=1 // pred_check_branch
      %48 = sbr.rel (0) target = $region17
    $region16: #{tpu_custom_call.1} parent=1 // pred_region
      %s50 = ssub.s32 10240, 10240
      %51 = vsyncadd [#allocation9], %s50
      %s52 = sshll.u32 [#allocation8], 4
      %s53 = int_to_ptr.vmem [resolvable:$true] %s52
      %58 = dma.hbm_to_vmem [thread:$0]  %s3, 10240, %s53, [#allocation9], 128, 128, 8
    $region17: #{tpu_custom_call.1} parent=1 // pred_fallthru
      _
    // Predicated region
    $region18: #{tpu_custom_call.1} parent=1 // pred_check
      _
    $region19: #{tpu_custom_call.1} parent=1 // pred_check_branch
      %60 = sbr.rel (0) target = $region21
    $region20: #{tpu_custom_call.1} parent=1 // pred_region
      %61 = dma.done [#allocation3], 320
    $region21: #{tpu_custom_call.1} parent=1 // pred_fallthru
      _
    // Predicated region
    $region22: #{tpu_custom_call.1} parent=1 // pred_check
      _
    $region23: #{tpu_custom_call.1} parent=1 // pred_check_branch
      %63 = sbr.rel (0) target = $region25
    $region24: #{tpu_custom_call.1} parent=1 // pred_region
      %64 = dma.done [#allocation6], 25600
    $region25: #{tpu_custom_call.1} parent=1 // pred_fallthru
      _
    // Predicated region
    $region26: #{tpu_custom_call.1} parent=1 // pred_check
      _
    $region27: #{tpu_custom_call.1} parent=1 // pred_check_branch
      %66 = sbr.rel (0) target = $region29
    $region28: #{tpu_custom_call.1} parent=1 // pred_region
      %67 = dma.done [#allocation6], 25600
    $region29: #{tpu_custom_call.1} parent=1 // pred_fallthru
      _
    // Predicated region
    $region30: #{tpu_custom_call.1} parent=1 // pred_check
      _
    $region31: #{tpu_custom_call.1} parent=1 // pred_check_branch
      %69 = sbr.rel (0) target = $region33
    $region32: #{tpu_custom_call.1} parent=1 // pred_region
      %70 = dma.done [#allocation9], 10240
    $region33: #{tpu_custom_call.1} parent=1 // pred_fallthru
      _
    %v72 = vld [vmem:[#allocation2] sm:$0xff]
    %v73 = vld [vmem:[#allocation2 + $0x8] sm:$0xff]
    %v74 = vld [vmem:[#allocation2 + $0x10] sm:$0xf]
    %v75 = vld [vmem:[#allocation5] sm:$0xff]
    %v76 = vld [vmem:[#allocation5 + $0x8] sm:$0xff]
    %v77 = vld [vmem:[#allocation5 + $0x10] sm:$0xf]
    %v78 = vld [vmem:[#allocation5 + $0x14] sm:$0xff]
    %v79 = vld [vmem:[#allocation5 + $0x1c] sm:$0xff]
    %v80 = vld [vmem:[#allocation5 + $0x24] sm:$0xf]
    %v81 = vld [vmem:[#allocation5 + $0x28] sm:$0xff]
    %v82 = vld [vmem:[#allocation5 + $0x30] sm:$0xff]
    %v83 = vld [vmem:[#allocation5 + $0x38] sm:$0xf]
    %v84 = vld [vmem:[#allocation5 + $0x3c] sm:$0xff]
    %v85 = vld [vmem:[#allocation5 + $0x44] sm:$0xff]
    %v86 = vld [vmem:[#allocation5 + $0x4c] sm:$0xf]
    %v87 = vld [vmem:[#allocation5 + $0x50] sm:$0xff]
    %v88 = vld [vmem:[#allocation5 + $0x58] sm:$0xff]
    %v89 = vld [vmem:[#allocation5 + $0x60] sm:$0xf]
    %v90 = vld [vmem:[#allocation5 + $0x64] sm:$0xff]
    %v91 = vld [vmem:[#allocation5 + $0x6c] sm:$0xff]
    %v92 = vld [vmem:[#allocation5 + $0x74] sm:$0xf]
    %v93 = vld [vmem:[#allocation5 + $0x78] sm:$0xff]
    %v94 = vld [vmem:[#allocation5 + $0x80] sm:$0xff]
    %v95 = vld [vmem:[#allocation5 + $0x88] sm:$0xf]
    %v96 = vld [vmem:[#allocation5 + $0x8c] sm:$0xff]
    %v97 = vld [vmem:[#allocation5 + $0x94] sm:$0xff]
    %v98 = vld [vmem:[#allocation5 + $0x9c] sm:$0xf]
    %v99 = vld [vmem:[#allocation5 + $0xa0] sm:$0xff]
    %v100 = vld [vmem:[#allocation5 + $0xa8] sm:$0xff]
    %v101 = vld [vmem:[#allocation5 + $0xb0] sm:$0xf]
    %v102 = vld [vmem:[#allocation5 + $0xb4] sm:$0xff]
    %v103 = vld [vmem:[#allocation5 + $0xbc] sm:$0xff]
    %v104 = vld [vmem:[#allocation5 + $0xc4] sm:$0xf]
    %v105 = vld [vmem:[#allocation5 + $0xc8] sm:$0xff]
    %v106 = vld [vmem:[#allocation5 + $0xd0] sm:$0xff]
    %v107 = vld [vmem:[#allocation5 + $0xd8] sm:$0xf]
    %v108 = vld [vmem:[#allocation5 + $0xdc] sm:$0xff]
    %v109 = vld [vmem:[#allocation5 + $0xe4] sm:$0xff]
    %v110 = vld [vmem:[#allocation5 + $0xec] sm:$0xf]
    %v111 = vld [vmem:[#allocation5 + $0xf0] sm:$0xff]
    %v112 = vld [vmem:[#allocation5 + $0xf8] sm:$0xff]
    %v113 = vld [vmem:[#allocation5 + $0x100] sm:$0xf]
    %v114 = vld [vmem:[#allocation5 + $0x104] sm:$0xff]
    %v115 = vld [vmem:[#allocation5 + $0x10c] sm:$0xff]
    %v116 = vld [vmem:[#allocation5 + $0x114] sm:$0xf]
    %v117 = vld [vmem:[#allocation5 + $0x118] sm:$0xff]
    %v118 = vld [vmem:[#allocation5 + $0x120] sm:$0xff]
    %v119 = vld [vmem:[#allocation5 + $0x128] sm:$0xf]
    %v120 = vld [vmem:[#allocation5 + $0x12c] sm:$0xff]
    %v121 = vld [vmem:[#allocation5 + $0x134] sm:$0xff]
    %v122 = vld [vmem:[#allocation5 + $0x13c] sm:$0xf]
    %v123 = vld [vmem:[#allocation5 + $0x140] sm:$0xff]
    %v124 = vld [vmem:[#allocation5 + $0x148] sm:$0xff]
    %v125 = vld [vmem:[#allocation5 + $0x150] sm:$0xf]
    %v126 = vld [vmem:[#allocation5 + $0x154] sm:$0xff]
    %v127 = vld [vmem:[#allocation5 + $0x15c] sm:$0xff]
    %v128 = vld [vmem:[#allocation5 + $0x164] sm:$0xf]
    %v129 = vld [vmem:[#allocation5 + $0x168] sm:$0xff]
    %v130 = vld [vmem:[#allocation5 + $0x170] sm:$0xff]
    %v131 = vld [vmem:[#allocation5 + $0x178] sm:$0xf]
    %v132 = vld [vmem:[#allocation5 + $0x17c] sm:$0xff]
    %v133 = vld [vmem:[#allocation5 + $0x184] sm:$0xff]
    %v134 = vld [vmem:[#allocation5 + $0x18c] sm:$0xf]
    %v135 = vld [vmem:[#allocation5 + $0x190] sm:$0xff]
    %v136 = vld [vmem:[#allocation5 + $0x198] sm:$0xff]
    %v137 = vld [vmem:[#allocation5 + $0x1a0] sm:$0xf]
    %v138 = vld [vmem:[#allocation5 + $0x1a4] sm:$0xff]
    %v139 = vld [vmem:[#allocation5 + $0x1ac] sm:$0xff]
    %v140 = vld [vmem:[#allocation5 + $0x1b4] sm:$0xf]
    %v141 = vld [vmem:[#allocation5 + $0x1b8] sm:$0xff]
    %v142 = vld [vmem:[#allocation5 + $0x1c0] sm:$0xff]
    %v143 = vld [vmem:[#allocation5 + $0x1c8] sm:$0xf]
    %v144 = vld [vmem:[#allocation5 + $0x1cc] sm:$0xff]
    %v145 = vld [vmem:[#allocation5 + $0x1d4] sm:$0xff]
    %v146 = vld [vmem:[#allocation5 + $0x1dc] sm:$0xf]
    %v147 = vld [vmem:[#allocation5 + $0x1e0] sm:$0xff]
    %v148 = vld [vmem:[#allocation5 + $0x1e8] sm:$0xff]
    %v149 = vld [vmem:[#allocation5 + $0x1f0] sm:$0xf]
    %v150 = vld [vmem:[#allocation5 + $0x1f4] sm:$0xff]
    %v151 = vld [vmem:[#allocation5 + $0x1fc] sm:$0xff]
    %v152 = vld [vmem:[#allocation5 + $0x204] sm:$0xf]
    %v153 = vld [vmem:[#allocation5 + $0x208] sm:$0xff]
    %v154 = vld [vmem:[#allocation5 + $0x210] sm:$0xff]
    %v155 = vld [vmem:[#allocation5 + $0x218] sm:$0xf]
    %v156 = vld [vmem:[#allocation5 + $0x21c] sm:$0xff]
    %v157 = vld [vmem:[#allocation5 + $0x224] sm:$0xff]
    %v158 = vld [vmem:[#allocation5 + $0x22c] sm:$0xf]
    %v159 = vld [vmem:[#allocation5 + $0x230] sm:$0xff]
    %v160 = vld [vmem:[#allocation5 + $0x238] sm:$0xff]
    %v161 = vld [vmem:[#allocation5 + $0x240] sm:$0xf]
    %v162 = vld [vmem:[#allocation5 + $0x244] sm:$0xff]
    %v163 = vld [vmem:[#allocation5 + $0x24c] sm:$0xff]
    %v164 = vld [vmem:[#allocation5 + $0x254] sm:$0xf]
    %v165 = vld [vmem:[#allocation5 + $0x258] sm:$0xff]
    %v166 = vld [vmem:[#allocation5 + $0x260] sm:$0xff]
    %v167 = vld [vmem:[#allocation5 + $0x268] sm:$0xf]
    %v168 = vld [vmem:[#allocation5 + $0x26c] sm:$0xff]
    %v169 = vld [vmem:[#allocation5 + $0x274] sm:$0xff]
    %v170 = vld [vmem:[#allocation5 + $0x27c] sm:$0xf]
    %v171 = vld [vmem:[#allocation5 + $0x280] sm:$0xff]
    %v172 = vld [vmem:[#allocation5 + $0x288] sm:$0xff]
    %v173 = vld [vmem:[#allocation5 + $0x290] sm:$0xf]
    %v174 = vld [vmem:[#allocation5 + $0x294] sm:$0xff]
    %v175 = vld [vmem:[#allocation5 + $0x29c] sm:$0xff]
    %v176 = vld [vmem:[#allocation5 + $0x2a4] sm:$0xf]
    %v177 = vld [vmem:[#allocation5 + $0x2a8] sm:$0xff]
    %v178 = vld [vmem:[#allocation5 + $0x2b0] sm:$0xff]
    %v179 = vld [vmem:[#allocation5 + $0x2b8] sm:$0xf]
    %v180 = vld [vmem:[#allocation5 + $0x2bc] sm:$0xff]
    %v181 = vld [vmem:[#allocation5 + $0x2c4] sm:$0xff]
    %v182 = vld [vmem:[#allocation5 + $0x2cc] sm:$0xf]
    %v183 = vld [vmem:[#allocation5 + $0x2d0] sm:$0xff]
    %v184 = vld [vmem:[#allocation5 + $0x2d8] sm:$0xff]
    %v185 = vld [vmem:[#allocation5 + $0x2e0] sm:$0xf]
    %v186 = vld [vmem:[#allocation5 + $0x2e4] sm:$0xff]
    %v187 = vld [vmem:[#allocation5 + $0x2ec] sm:$0xff]
    %v188 = vld [vmem:[#allocation5 + $0x2f4] sm:$0xf]
    %v189 = vld [vmem:[#allocation5 + $0x2f8] sm:$0xff]
    %v190 = vld [vmem:[#allocation5 + $0x300] sm:$0xff]
    %v191 = vld [vmem:[#allocation5 + $0x308] sm:$0xf]
    %v192 = vld [vmem:[#allocation5 + $0x30c] sm:$0xff]
    %v193 = vld [vmem:[#allocation5 + $0x314] sm:$0xff]
    %v194 = vld [vmem:[#allocation5 + $0x31c] sm:$0xf]
    %v195 = vld [vmem:[#allocation5 + $0x320] sm:$0xff]
    %v196 = vld [vmem:[#allocation5 + $0x328] sm:$0xff]
    %v197 = vld [vmem:[#allocation5 + $0x330] sm:$0xf]
    %v198 = vld [vmem:[#allocation5 + $0x334] sm:$0xff]
    %v199 = vld [vmem:[#allocation5 + $0x33c] sm:$0xff]
    %v200 = vld [vmem:[#allocation5 + $0x344] sm:$0xf]
    %v201 = vld [vmem:[#allocation5 + $0x348] sm:$0xff]
    %v202 = vld [vmem:[#allocation5 + $0x350] sm:$0xff]
    %v203 = vld [vmem:[#allocation5 + $0x358] sm:$0xf]
    %v204 = vld [vmem:[#allocation5 + $0x35c] sm:$0xff]
    %v205 = vld [vmem:[#allocation5 + $0x364] sm:$0xff]
    %v206 = vld [vmem:[#allocation5 + $0x36c] sm:$0xf]
    %v207 = vld [vmem:[#allocation5 + $0x370] sm:$0xff]
    %v208 = vld [vmem:[#allocation5 + $0x378] sm:$0xff]
    %v209 = vld [vmem:[#allocation5 + $0x380] sm:$0xf]
    %v210 = vld [vmem:[#allocation5 + $0x384] sm:$0xff]
    %v211 = vld [vmem:[#allocation5 + $0x38c] sm:$0xff]
    %v212 = vld [vmem:[#allocation5 + $0x394] sm:$0xf]
    %v213 = vld [vmem:[#allocation5 + $0x398] sm:$0xff]
    %v214 = vld [vmem:[#allocation5 + $0x3a0] sm:$0xff]
    %v215 = vld [vmem:[#allocation5 + $0x3a8] sm:$0xf]
    %v216 = vld [vmem:[#allocation5 + $0x3ac] sm:$0xff]
    %v217 = vld [vmem:[#allocation5 + $0x3b4] sm:$0xff]
    %v218 = vld [vmem:[#allocation5 + $0x3bc] sm:$0xf]
    %v219 = vld [vmem:[#allocation5 + $0x3c0] sm:$0xff]
    %v220 = vld [vmem:[#allocation5 + $0x3c8] sm:$0xff]
    %v221 = vld [vmem:[#allocation5 + $0x3d0] sm:$0xf]
    %v222 = vld [vmem:[#allocation5 + $0x3d4] sm:$0xff]
    %v223 = vld [vmem:[#allocation5 + $0x3dc] sm:$0xff]
    %v224 = vld [vmem:[#allocation5 + $0x3e4] sm:$0xf]
    %v225 = vld [vmem:[#allocation5 + $0x3e8] sm:$0xff]
    %v226 = vld [vmem:[#allocation5 + $0x3f0] sm:$0xff]
    %v227 = vld [vmem:[#allocation5 + $0x3f8] sm:$0xf]
    %v228 = vld [vmem:[#allocation5 + $0x3fc] sm:$0xff]
    %v229 = vld [vmem:[#allocation5 + $0x404] sm:$0xff]
    %v230 = vld [vmem:[#allocation5 + $0x40c] sm:$0xf]
    %v231 = vld [vmem:[#allocation5 + $0x410] sm:$0xff]
    %v232 = vld [vmem:[#allocation5 + $0x418] sm:$0xff]
    %v233 = vld [vmem:[#allocation5 + $0x420] sm:$0xf]
    %v234 = vld [vmem:[#allocation5 + $0x424] sm:$0xff]
    %v235 = vld [vmem:[#allocation5 + $0x42c] sm:$0xff]
    %v236 = vld [vmem:[#allocation5 + $0x434] sm:$0xf]
    %v237 = vld [vmem:[#allocation5 + $0x438] sm:$0xff]
    %v238 = vld [vmem:[#allocation5 + $0x440] sm:$0xff]
    %v239 = vld [vmem:[#allocation5 + $0x448] sm:$0xf]
    %v240 = vld [vmem:[#allocation5 + $0x44c] sm:$0xff]
    %v241 = vld [vmem:[#allocation5 + $0x454] sm:$0xff]
    %v242 = vld [vmem:[#allocation5 + $0x45c] sm:$0xf]
    %v243 = vld [vmem:[#allocation5 + $0x460] sm:$0xff]
    %v244 = vld [vmem:[#allocation5 + $0x468] sm:$0xff]
    %v245 = vld [vmem:[#allocation5 + $0x470] sm:$0xf]
    %v246 = vld [vmem:[#allocation5 + $0x474] sm:$0xff]
    %v247 = vld [vmem:[#allocation5 + $0x47c] sm:$0xff]
    %v248 = vld [vmem:[#allocation5 + $0x484] sm:$0xf]
    %v249 = vld [vmem:[#allocation5 + $0x488] sm:$0xff]
    %v250 = vld [vmem:[#allocation5 + $0x490] sm:$0xff]
    %v251 = vld [vmem:[#allocation5 + $0x498] sm:$0xf]
    %v252 = vld [vmem:[#allocation5 + $0x49c] sm:$0xff]
    %v253 = vld [vmem:[#allocation5 + $0x4a4] sm:$0xff]
    %v254 = vld [vmem:[#allocation5 + $0x4ac] sm:$0xf]
    %v255 = vld [vmem:[#allocation5 + $0x4b0] sm:$0xff]
    %v256 = vld [vmem:[#allocation5 + $0x4b8] sm:$0xff]
    %v257 = vld [vmem:[#allocation5 + $0x4c0] sm:$0xf]
    %v258 = vld [vmem:[#allocation5 + $0x4c4] sm:$0xff]
    %v259 = vld [vmem:[#allocation5 + $0x4cc] sm:$0xff]
    %v260 = vld [vmem:[#allocation5 + $0x4d4] sm:$0xf]
    %v261 = vld [vmem:[#allocation5 + $0x4d8] sm:$0xff]
    %v262 = vld [vmem:[#allocation5 + $0x4e0] sm:$0xff]
    %v263 = vld [vmem:[#allocation5 + $0x4e8] sm:$0xf]
    %v264 = vld [vmem:[#allocation5 + $0x4ec] sm:$0xff]
    %v265 = vld [vmem:[#allocation5 + $0x4f4] sm:$0xff]
    %v266 = vld [vmem:[#allocation5 + $0x4fc] sm:$0xf]
    %v267 = vld [vmem:[#allocation5 + $0x500] sm:$0xff]
    %v268 = vld [vmem:[#allocation5 + $0x508] sm:$0xff]
    %v269 = vld [vmem:[#allocation5 + $0x510] sm:$0xf]
    %v270 = vld [vmem:[#allocation5 + $0x514] sm:$0xff]
    %v271 = vld [vmem:[#allocation5 + $0x51c] sm:$0xff]
    %v272 = vld [vmem:[#allocation5 + $0x524] sm:$0xf]
    %v273 = vld [vmem:[#allocation5 + $0x528] sm:$0xff]
    %v274 = vld [vmem:[#allocation5 + $0x530] sm:$0xff]
    %v275 = vld [vmem:[#allocation5 + $0x538] sm:$0xf]
    %v276 = vld [vmem:[#allocation5 + $0x53c] sm:$0xff]
    %v277 = vld [vmem:[#allocation5 + $0x544] sm:$0xff]
    %v278 = vld [vmem:[#allocation5 + $0x54c] sm:$0xf]
    %v279 = vld [vmem:[#allocation5 + $0x550] sm:$0xff]
    %v280 = vld [vmem:[#allocation5 + $0x558] sm:$0xff]
    %v281 = vld [vmem:[#allocation5 + $0x560] sm:$0xf]
    %v282 = vld [vmem:[#allocation5 + $0x564] sm:$0xff]
    %v283 = vld [vmem:[#allocation5 + $0x56c] sm:$0xff]
    %v284 = vld [vmem:[#allocation5 + $0x574] sm:$0xf]
    %v285 = vld [vmem:[#allocation5 + $0x578] sm:$0xff]
    %v286 = vld [vmem:[#allocation5 + $0x580] sm:$0xff]
    %v287 = vld [vmem:[#allocation5 + $0x588] sm:$0xf]
    %v288 = vld [vmem:[#allocation5 + $0x58c] sm:$0xff]
    %v289 = vld [vmem:[#allocation5 + $0x594] sm:$0xff]
    %v290 = vld [vmem:[#allocation5 + $0x59c] sm:$0xf]
    %v291 = vld [vmem:[#allocation5 + $0x5a0] sm:$0xff]
    %v292 = vld [vmem:[#allocation5 + $0x5a8] sm:$0xff]
    %v293 = vld [vmem:[#allocation5 + $0x5b0] sm:$0xf]
    %v294 = vld [vmem:[#allocation5 + $0x5b4] sm:$0xff]
    %v295 = vld [vmem:[#allocation5 + $0x5bc] sm:$0xff]
    %v296 = vld [vmem:[#allocation5 + $0x5c4] sm:$0xf]
    %v297 = vld [vmem:[#allocation5 + $0x5c8] sm:$0xff]
    %v298 = vld [vmem:[#allocation5 + $0x5d0] sm:$0xff]
    %v299 = vld [vmem:[#allocation5 + $0x5d8] sm:$0xf]
    %v300 = vld [vmem:[#allocation5 + $0x5dc] sm:$0xff]
    %v301 = vld [vmem:[#allocation5 + $0x5e4] sm:$0xff]
    %v302 = vld [vmem:[#allocation5 + $0x5ec] sm:$0xf]
    %v303 = vld [vmem:[#allocation5 + $0x5f0] sm:$0xff]
    %v304 = vld [vmem:[#allocation5 + $0x5f8] sm:$0xff]
    %v305 = vld [vmem:[#allocation5 + $0x600] sm:$0xf]
    %v306 = vld [vmem:[#allocation5 + $0x604] sm:$0xff]
    %v307 = vld [vmem:[#allocation5 + $0x60c] sm:$0xff]
    %v308 = vld [vmem:[#allocation5 + $0x614] sm:$0xf]
    %v309 = vld [vmem:[#allocation5 + $0x618] sm:$0xff]
    %v310 = vld [vmem:[#allocation5 + $0x620] sm:$0xff]
    %v311 = vld [vmem:[#allocation5 + $0x628] sm:$0xf]
    %v312 = vld [vmem:[#allocation5 + $0x62c] sm:$0xff]
    %v313 = vld [vmem:[#allocation5 + $0x634] sm:$0xff]
    %v314 = vld [vmem:[#allocation5 + $0x63c] sm:$0xf]
    %v318 = vunpack.c.l.b16 %v72
    %v319 = vunpack.c.h.b16 %v72
    %v320 = vunpack.c.l.b16 %v73
    %v321 = vunpack.c.h.b16 %v73
    %v322 = vunpack.c.l.b16 %v74
    %v323 = vpack.c.b16 %v318, %v318
    %v324 = vpack.c.b16 %v319, %v319
    %v325 = vpack.c.b16 %v320, %v320
    %v326 = vpack.c.b16 %v321, %v321
    %v327 = vpack.c.b16 %v322, %v322
    %v573 = vunpack.c.l.b16 %v75
    %v574 = vunpack.c.h.b16 %v75
    %v575 = vunpack.c.l.b16 %v76
    %v576 = vunpack.c.h.b16 %v76
    %v577 = vunpack.c.l.b16 %v77
    %v578 = vunpack.c.l.b16 %v78
    %v579 = vunpack.c.h.b16 %v78
    %v580 = vunpack.c.l.b16 %v79
    %v581 = vunpack.c.h.b16 %v79
    %v582 = vunpack.c.l.b16 %v80
    %v583 = vunpack.c.l.b16 %v81
    %v584 = vunpack.c.h.b16 %v81
    %v585 = vunpack.c.l.b16 %v82
    %v586 = vunpack.c.h.b16 %v82
    %v587 = vunpack.c.l.b16 %v83
    %v588 = vunpack.c.l.b16 %v84
    %v589 = vunpack.c.h.b16 %v84
    %v590 = vunpack.c.l.b16 %v85
    %v591 = vunpack.c.h.b16 %v85
    %v592 = vunpack.c.l.b16 %v86
    %v593 = vunpack.c.l.b16 %v87
    %v594 = vunpack.c.h.b16 %v87
    %v595 = vunpack.c.l.b16 %v88
    %v596 = vunpack.c.h.b16 %v88
    %v597 = vunpack.c.l.b16 %v89
    %v598 = vunpack.c.l.b16 %v90
    %v599 = vunpack.c.h.b16 %v90
    %v600 = vunpack.c.l.b16 %v91
    %v601 = vunpack.c.h.b16 %v91
    %v602 = vunpack.c.l.b16 %v92
    %v603 = vunpack.c.l.b16 %v93
    %v604 = vunpack.c.h.b16 %v93
    %v605 = vunpack.c.l.b16 %v94
    %v606 = vunpack.c.h.b16 %v94
    %v607 = vunpack.c.l.b16 %v95
    %v608 = vunpack.c.l.b16 %v96
    %v609 = vunpack.c.h.b16 %v96
    %v610 = vunpack.c.l.b16 %v97
    %v611 = vunpack.c.h.b16 %v97
    %v612 = vunpack.c.l.b16 %v98
    %v613 = vunpack.c.l.b16 %v99
    %v614 = vunpack.c.h.b16 %v99
    %v615 = vunpack.c.l.b16 %v100
    %v616 = vunpack.c.h.b16 %v100
    %v617 = vunpack.c.l.b16 %v101
    %v618 = vunpack.c.l.b16 %v102
    %v619 = vunpack.c.h.b16 %v102
    %v620 = vunpack.c.l.b16 %v103
    %v621 = vunpack.c.h.b16 %v103
    %v622 = vunpack.c.l.b16 %v104
    %v623 = vunpack.c.l.b16 %v105
    %v624 = vunpack.c.h.b16 %v105
    %v625 = vunpack.c.l.b16 %v106
    %v626 = vunpack.c.h.b16 %v106
    %v627 = vunpack.c.l.b16 %v107
    %v628 = vunpack.c.l.b16 %v108
    %v629 = vunpack.c.h.b16 %v108
    %v630 = vunpack.c.l.b16 %v109
    %v631 = vunpack.c.h.b16 %v109
    %v632 = vunpack.c.l.b16 %v110
    %v633 = vunpack.c.l.b16 %v111
    %v634 = vunpack.c.h.b16 %v111
    %v635 = vunpack.c.l.b16 %v112
    %v636 = vunpack.c.h.b16 %v112
    %v637 = vunpack.c.l.b16 %v113
    %v638 = vunpack.c.l.b16 %v114
    %v639 = vunpack.c.h.b16 %v114
    %v640 = vunpack.c.l.b16 %v115
    %v641 = vunpack.c.h.b16 %v115
    %v642 = vunpack.c.l.b16 %v116
    %v643 = vunpack.c.l.b16 %v117
    %v644 = vunpack.c.h.b16 %v117
    %v645 = vunpack.c.l.b16 %v118
    %v646 = vunpack.c.h.b16 %v118
    %v647 = vunpack.c.l.b16 %v119
    %v648 = vunpack.c.l.b16 %v120
    %v649 = vunpack.c.h.b16 %v120
    %v650 = vunpack.c.l.b16 %v121
    %v651 = vunpack.c.h.b16 %v121
    %v652 = vunpack.c.l.b16 %v122
    %v653 = vunpack.c.l.b16 %v123
    %v654 = vunpack.c.h.b16 %v123
    %v655 = vunpack.c.l.b16 %v124
    %v656 = vunpack.c.h.b16 %v124
    %v657 = vunpack.c.l.b16 %v125
    %v658 = vunpack.c.l.b16 %v126
    %v659 = vunpack.c.h.b16 %v126
    %v660 = vunpack.c.l.b16 %v127
    %v661 = vunpack.c.h.b16 %v127
    %v662 = vunpack.c.l.b16 %v128
    %v663 = vunpack.c.l.b16 %v129
    %v664 = vunpack.c.h.b16 %v129
    %v665 = vunpack.c.l.b16 %v130
    %v666 = vunpack.c.h.b16 %v130
    %v667 = vunpack.c.l.b16 %v131
    %v668 = vunpack.c.l.b16 %v132
    %v669 = vunpack.c.h.b16 %v132
    %v670 = vunpack.c.l.b16 %v133
    %v671 = vunpack.c.h.b16 %v133
    %v672 = vunpack.c.l.b16 %v134
    %v673 = vunpack.c.l.b16 %v135
    %v674 = vunpack.c.h.b16 %v135
    %v675 = vunpack.c.l.b16 %v136
    %v676 = vunpack.c.h.b16 %v136
    %v677 = vunpack.c.l.b16 %v137
    %v678 = vunpack.c.l.b16 %v138
    %v679 = vunpack.c.h.b16 %v138
    %v680 = vunpack.c.l.b16 %v139
    %v681 = vunpack.c.h.b16 %v139
    %v682 = vunpack.c.l.b16 %v140
    %v683 = vunpack.c.l.b16 %v141
    %v684 = vunpack.c.h.b16 %v141
    %v685 = vunpack.c.l.b16 %v142
    %v686 = vunpack.c.h.b16 %v142
    %v687 = vunpack.c.l.b16 %v143
    %v688 = vunpack.c.l.b16 %v144
    %v689 = vunpack.c.h.b16 %v144
    %v690 = vunpack.c.l.b16 %v145
    %v691 = vunpack.c.h.b16 %v145
    %v692 = vunpack.c.l.b16 %v146
    %v693 = vunpack.c.l.b16 %v147
    %v694 = vunpack.c.h.b16 %v147
    %v695 = vunpack.c.l.b16 %v148
    %v696 = vunpack.c.h.b16 %v148
    %v697 = vunpack.c.l.b16 %v149
    %v698 = vunpack.c.l.b16 %v150
    %v699 = vunpack.c.h.b16 %v150
    %v700 = vunpack.c.l.b16 %v151
    %v701 = vunpack.c.h.b16 %v151
    %v702 = vunpack.c.l.b16 %v152
    %v703 = vunpack.c.l.b16 %v153
    %v704 = vunpack.c.h.b16 %v153
    %v705 = vunpack.c.l.b16 %v154
    %v706 = vunpack.c.h.b16 %v154
    %v707 = vunpack.c.l.b16 %v155
    %v708 = vunpack.c.l.b16 %v156
    %v709 = vunpack.c.h.b16 %v156
    %v710 = vunpack.c.l.b16 %v157
    %v711 = vunpack.c.h.b16 %v157
    %v712 = vunpack.c.l.b16 %v158
    %v713 = vunpack.c.l.b16 %v159
    %v714 = vunpack.c.h.b16 %v159
    %v715 = vunpack.c.l.b16 %v160
    %v716 = vunpack.c.h.b16 %v160
    %v717 = vunpack.c.l.b16 %v161
    %v718 = vunpack.c.l.b16 %v162
    %v719 = vunpack.c.h.b16 %v162
    %v720 = vunpack.c.l.b16 %v163
    %v721 = vunpack.c.h.b16 %v163
    %v722 = vunpack.c.l.b16 %v164
    %v723 = vunpack.c.l.b16 %v165
    %v724 = vunpack.c.h.b16 %v165
    %v725 = vunpack.c.l.b16 %v166
    %v726 = vunpack.c.h.b16 %v166
    %v727 = vunpack.c.l.b16 %v167
    %v728 = vunpack.c.l.b16 %v168
    %v729 = vunpack.c.h.b16 %v168
    %v730 = vunpack.c.l.b16 %v169
    %v731 = vunpack.c.h.b16 %v169
    %v732 = vunpack.c.l.b16 %v170
    %v733 = vunpack.c.l.b16 %v171
    %v734 = vunpack.c.h.b16 %v171
    %v735 = vunpack.c.l.b16 %v172
    %v736 = vunpack.c.h.b16 %v172
    %v737 = vunpack.c.l.b16 %v173
    %v738 = vunpack.c.l.b16 %v174
    %v739 = vunpack.c.h.b16 %v174
    %v740 = vunpack.c.l.b16 %v175
    %v741 = vunpack.c.h.b16 %v175
    %v742 = vunpack.c.l.b16 %v176
    %v743 = vunpack.c.l.b16 %v177
    %v744 = vunpack.c.h.b16 %v177
    %v745 = vunpack.c.l.b16 %v178
    %v746 = vunpack.c.h.b16 %v178
    %v747 = vunpack.c.l.b16 %v179
    %v748 = vunpack.c.l.b16 %v180
    %v749 = vunpack.c.h.b16 %v180
    %v750 = vunpack.c.l.b16 %v181
    %v751 = vunpack.c.h.b16 %v181
    %v752 = vunpack.c.l.b16 %v182
    %v753 = vunpack.c.l.b16 %v183
    %v754 = vunpack.c.h.b16 %v183
    %v755 = vunpack.c.l.b16 %v184
    %v756 = vunpack.c.h.b16 %v184
    %v757 = vunpack.c.l.b16 %v185
    %v758 = vunpack.c.l.b16 %v186
    %v759 = vunpack.c.h.b16 %v186
    %v760 = vunpack.c.l.b16 %v187
    %v761 = vunpack.c.h.b16 %v187
    %v762 = vunpack.c.l.b16 %v188
    %v763 = vunpack.c.l.b16 %v189
    %v764 = vunpack.c.h.b16 %v189
    %v765 = vunpack.c.l.b16 %v190
    %v766 = vunpack.c.h.b16 %v190
    %v767 = vunpack.c.l.b16 %v191
    %v768 = vunpack.c.l.b16 %v192
    %v769 = vunpack.c.h.b16 %v192
    %v770 = vunpack.c.l.b16 %v193
    %v771 = vunpack.c.h.b16 %v193
    %v772 = vunpack.c.l.b16 %v194
    %v773 = vunpack.c.l.b16 %v195
    %v774 = vunpack.c.h.b16 %v195
    %v775 = vunpack.c.l.b16 %v196
    %v776 = vunpack.c.h.b16 %v196
    %v777 = vunpack.c.l.b16 %v197
    %v778 = vunpack.c.l.b16 %v198
    %v779 = vunpack.c.h.b16 %v198
    %v780 = vunpack.c.l.b16 %v199
    %v781 = vunpack.c.h.b16 %v199
    %v782 = vunpack.c.l.b16 %v200
    %v783 = vunpack.c.l.b16 %v201
    %v784 = vunpack.c.h.b16 %v201
    %v785 = vunpack.c.l.b16 %v202
    %v786 = vunpack.c.h.b16 %v202
    %v787 = vunpack.c.l.b16 %v203
    %v788 = vunpack.c.l.b16 %v204
    %v789 = vunpack.c.h.b16 %v204
    %v790 = vunpack.c.l.b16 %v205
    %v791 = vunpack.c.h.b16 %v205
    %v792 = vunpack.c.l.b16 %v206
    %v793 = vunpack.c.l.b16 %v207
    %v794 = vunpack.c.h.b16 %v207
    %v795 = vunpack.c.l.b16 %v208
    %v796 = vunpack.c.h.b16 %v208
    %v797 = vunpack.c.l.b16 %v209
    %v798 = vunpack.c.l.b16 %v210
    %v799 = vunpack.c.h.b16 %v210
    %v800 = vunpack.c.l.b16 %v211
    %v801 = vunpack.c.h.b16 %v211
    %v802 = vunpack.c.l.b16 %v212
    %v803 = vunpack.c.l.b16 %v213
    %v804 = vunpack.c.h.b16 %v213
    %v805 = vunpack.c.l.b16 %v214
    %v806 = vunpack.c.h.b16 %v214
    %v807 = vunpack.c.l.b16 %v215
    %v808 = vunpack.c.l.b16 %v216
    %v809 = vunpack.c.h.b16 %v216
    %v810 = vunpack.c.l.b16 %v217
    %v811 = vunpack.c.h.b16 %v217
    %v812 = vunpack.c.l.b16 %v218
    %v813 = vunpack.c.l.b16 %v219
    %v814 = vunpack.c.h.b16 %v219
    %v815 = vunpack.c.l.b16 %v220
    %v816 = vunpack.c.h.b16 %v220
    %v817 = vunpack.c.l.b16 %v221
    %v818 = vunpack.c.l.b16 %v222
    %v819 = vunpack.c.h.b16 %v222
    %v820 = vunpack.c.l.b16 %v223
    %v821 = vunpack.c.h.b16 %v223
    %v822 = vunpack.c.l.b16 %v224
    %v823 = vunpack.c.l.b16 %v225
    %v824 = vunpack.c.h.b16 %v225
    %v825 = vunpack.c.l.b16 %v226
    %v826 = vunpack.c.h.b16 %v226
    %v827 = vunpack.c.l.b16 %v227
    %v828 = vunpack.c.l.b16 %v228
    %v829 = vunpack.c.h.b16 %v228
    %v830 = vunpack.c.l.b16 %v229
    %v831 = vunpack.c.h.b16 %v229
    %v832 = vunpack.c.l.b16 %v230
    %v833 = vunpack.c.l.b16 %v231
    %v834 = vunpack.c.h.b16 %v231
    %v835 = vunpack.c.l.b16 %v232
    %v836 = vunpack.c.h.b16 %v232
    %v837 = vunpack.c.l.b16 %v233
    %v838 = vunpack.c.l.b16 %v234
    %v839 = vunpack.c.h.b16 %v234
    %v840 = vunpack.c.l.b16 %v235
    %v841 = vunpack.c.h.b16 %v235
    %v842 = vunpack.c.l.b16 %v236
    %v843 = vunpack.c.l.b16 %v237
    %v844 = vunpack.c.h.b16 %v237
    %v845 = vunpack.c.l.b16 %v238
    %v846 = vunpack.c.h.b16 %v238
    %v847 = vunpack.c.l.b16 %v239
    %v848 = vunpack.c.l.b16 %v240
    %v849 = vunpack.c.h.b16 %v240
    %v850 = vunpack.c.l.b16 %v241
    %v851 = vunpack.c.h.b16 %v241
    %v852 = vunpack.c.l.b16 %v242
    %v853 = vunpack.c.l.b16 %v243
    %v854 = vunpack.c.h.b16 %v243
    %v855 = vunpack.c.l.b16 %v244
    %v856 = vunpack.c.h.b16 %v244
    %v857 = vunpack.c.l.b16 %v245
    %v858 = vunpack.c.l.b16 %v246
    %v859 = vunpack.c.h.b16 %v246
    %v860 = vunpack.c.l.b16 %v247
    %v861 = vunpack.c.h.b16 %v247
    %v862 = vunpack.c.l.b16 %v248
    %v863 = vunpack.c.l.b16 %v249
    %v864 = vunpack.c.h.b16 %v249
    %v865 = vunpack.c.l.b16 %v250
    %v866 = vunpack.c.h.b16 %v250
    %v867 = vunpack.c.l.b16 %v251
    %v868 = vunpack.c.l.b16 %v252
    %v869 = vunpack.c.h.b16 %v252
    %v870 = vunpack.c.l.b16 %v253
    %v871 = vunpack.c.h.b16 %v253
    %v872 = vunpack.c.l.b16 %v254
    %v873 = vunpack.c.l.b16 %v255
    %v874 = vunpack.c.h.b16 %v255
    %v875 = vunpack.c.l.b16 %v256
    %v876 = vunpack.c.h.b16 %v256
    %v877 = vunpack.c.l.b16 %v257
    %v878 = vunpack.c.l.b16 %v258
    %v879 = vunpack.c.h.b16 %v258
    %v880 = vunpack.c.l.b16 %v259
    %v881 = vunpack.c.h.b16 %v259
    %v882 = vunpack.c.l.b16 %v260
    %v883 = vunpack.c.l.b16 %v261
    %v884 = vunpack.c.h.b16 %v261
    %v885 = vunpack.c.l.b16 %v262
    %v886 = vunpack.c.h.b16 %v262
    %v887 = vunpack.c.l.b16 %v263
    %v888 = vunpack.c.l.b16 %v264
    %v889 = vunpack.c.h.b16 %v264
    %v890 = vunpack.c.l.b16 %v265
    %v891 = vunpack.c.h.b16 %v265
    %v892 = vunpack.c.l.b16 %v266
    %v893 = vunpack.c.l.b16 %v267
    %v894 = vunpack.c.h.b16 %v267
    %v895 = vunpack.c.l.b16 %v268
    %v896 = vunpack.c.h.b16 %v268
    %v897 = vunpack.c.l.b16 %v269
    %v898 = vunpack.c.l.b16 %v270
    %v899 = vunpack.c.h.b16 %v270
    %v900 = vunpack.c.l.b16 %v271
    %v901 = vunpack.c.h.b16 %v271
    %v902 = vunpack.c.l.b16 %v272
    %v903 = vunpack.c.l.b16 %v273
    %v904 = vunpack.c.h.b16 %v273
    %v905 = vunpack.c.l.b16 %v274
    %v906 = vunpack.c.h.b16 %v274
    %v907 = vunpack.c.l.b16 %v275
    %v908 = vunpack.c.l.b16 %v276
    %v909 = vunpack.c.h.b16 %v276
    %v910 = vunpack.c.l.b16 %v277
    %v911 = vunpack.c.h.b16 %v277
    %v912 = vunpack.c.l.b16 %v278
    %v913 = vunpack.c.l.b16 %v279
    %v914 = vunpack.c.h.b16 %v279
    %v915 = vunpack.c.l.b16 %v280
    %v916 = vunpack.c.h.b16 %v280
    %v917 = vunpack.c.l.b16 %v281
    %v918 = vunpack.c.l.b16 %v282
    %v919 = vunpack.c.h.b16 %v282
    %v920 = vunpack.c.l.b16 %v283
    %v921 = vunpack.c.h.b16 %v283
    %v922 = vunpack.c.l.b16 %v284
    %v923 = vunpack.c.l.b16 %v285
    %v924 = vunpack.c.h.b16 %v285
    %v925 = vunpack.c.l.b16 %v286
    %v926 = vunpack.c.h.b16 %v286
    %v927 = vunpack.c.l.b16 %v287
    %v928 = vunpack.c.l.b16 %v288
    %v929 = vunpack.c.h.b16 %v288
    %v930 = vunpack.c.l.b16 %v289
    %v931 = vunpack.c.h.b16 %v289
    %v932 = vunpack.c.l.b16 %v290
    %v933 = vunpack.c.l.b16 %v291
    %v934 = vunpack.c.h.b16 %v291
    %v935 = vunpack.c.l.b16 %v292
    %v936 = vunpack.c.h.b16 %v292
    %v937 = vunpack.c.l.b16 %v293
    %v938 = vunpack.c.l.b16 %v294
    %v939 = vunpack.c.h.b16 %v294
    %v940 = vunpack.c.l.b16 %v295
    %v941 = vunpack.c.h.b16 %v295
    %v942 = vunpack.c.l.b16 %v296
    %v943 = vunpack.c.l.b16 %v297
    %v944 = vunpack.c.h.b16 %v297
    %v945 = vunpack.c.l.b16 %v298
    %v946 = vunpack.c.h.b16 %v298
    %v947 = vunpack.c.l.b16 %v299
    %v948 = vunpack.c.l.b16 %v300
    %v949 = vunpack.c.h.b16 %v300
    %v950 = vunpack.c.l.b16 %v301
    %v951 = vunpack.c.h.b16 %v301
    %v952 = vunpack.c.l.b16 %v302
    %v953 = vunpack.c.l.b16 %v303
    %v954 = vunpack.c.h.b16 %v303
    %v955 = vunpack.c.l.b16 %v304
    %v956 = vunpack.c.h.b16 %v304
    %v957 = vunpack.c.l.b16 %v305
    %v958 = vunpack.c.l.b16 %v306
    %v959 = vunpack.c.h.b16 %v306
    %v960 = vunpack.c.l.b16 %v307
    %v961 = vunpack.c.h.b16 %v307
    %v962 = vunpack.c.l.b16 %v308
    %v963 = vunpack.c.l.b16 %v309
    %v964 = vunpack.c.h.b16 %v309
    %v965 = vunpack.c.l.b16 %v310
    %v966 = vunpack.c.h.b16 %v310
    %v967 = vunpack.c.l.b16 %v311
    %v968 = vunpack.c.l.b16 %v312
    %v969 = vunpack.c.h.b16 %v312
    %v970 = vunpack.c.l.b16 %v313
    %v971 = vunpack.c.h.b16 %v313
    %v972 = vunpack.c.l.b16 %v314
    %v973 = vpack.c.b16 %v578, %v573
    %v974 = vpack.c.b16 %v579, %v574
    %v975 = vpack.c.b16 %v580, %v575
    %v976 = vpack.c.b16 %v581, %v576
    %v977 = vpack.c.b16 %v582, %v577
    %v978 = vpack.c.b16 %v588, %v583
    %v979 = vpack.c.b16 %v589, %v584
    %v980 = vpack.c.b16 %v590, %v585
    %v981 = vpack.c.b16 %v591, %v586
    %v982 = vpack.c.b16 %v592, %v587
    %v983 = vpack.c.b16 %v598, %v593
    %v984 = vpack.c.b16 %v599, %v594
    %v985 = vpack.c.b16 %v600, %v595
    %v986 = vpack.c.b16 %v601, %v596
    %v987 = vpack.c.b16 %v602, %v597
    %v988 = vpack.c.b16 %v608, %v603
    %v989 = vpack.c.b16 %v609, %v604
    %v990 = vpack.c.b16 %v610, %v605
    %v991 = vpack.c.b16 %v611, %v606
    %v992 = vpack.c.b16 %v612, %v607
    %v993 = vpack.c.b16 %v618, %v613
    %v994 = vpack.c.b16 %v619, %v614
    %v995 = vpack.c.b16 %v620, %v615
    %v996 = vpack.c.b16 %v621, %v616
    %v997 = vpack.c.b16 %v622, %v617
    %v998 = vpack.c.b16 %v628, %v623
    %v999 = vpack.c.b16 %v629, %v624
    %v1000 = vpack.c.b16 %v630, %v625
    %v1001 = vpack.c.b16 %v631, %v626
    %v1002 = vpack.c.b16 %v632, %v627
    %v1003 = vpack.c.b16 %v638, %v633
    %v1004 = vpack.c.b16 %v639, %v634
    %v1005 = vpack.c.b16 %v640, %v635
    %v1006 = vpack.c.b16 %v641, %v636
    %v1007 = vpack.c.b16 %v642, %v637
    %v1008 = vpack.c.b16 %v648, %v643
    %v1009 = vpack.c.b16 %v649, %v644
    %v1010 = vpack.c.b16 %v650, %v645
    %v1011 = vpack.c.b16 %v651, %v646
    %v1012 = vpack.c.b16 %v652, %v647
    %v1013 = vpack.c.b16 %v658, %v653
    %v1014 = vpack.c.b16 %v659, %v654
    %v1015 = vpack.c.b16 %v660, %v655
    %v1016 = vpack.c.b16 %v661, %v656
    %v1017 = vpack.c.b16 %v662, %v657
    %v1018 = vpack.c.b16 %v668, %v663
    %v1019 = vpack.c.b16 %v669, %v664
    %v1020 = vpack.c.b16 %v670, %v665
    %v1021 = vpack.c.b16 %v671, %v666
    %v1022 = vpack.c.b16 %v672, %v667
    %v1023 = vpack.c.b16 %v678, %v673
    %v1024 = vpack.c.b16 %v679, %v674
    %v1025 = vpack.c.b16 %v680, %v675
    %v1026 = vpack.c.b16 %v681, %v676
    %v1027 = vpack.c.b16 %v682, %v677
    %v1028 = vpack.c.b16 %v688, %v683
    %v1029 = vpack.c.b16 %v689, %v684
    %v1030 = vpack.c.b16 %v690, %v685
    %v1031 = vpack.c.b16 %v691, %v686
    %v1032 = vpack.c.b16 %v692, %v687
    %v1033 = vpack.c.b16 %v698, %v693
    %v1034 = vpack.c.b16 %v699, %v694
    %v1035 = vpack.c.b16 %v700, %v695
    %v1036 = vpack.c.b16 %v701, %v696
    %v1037 = vpack.c.b16 %v702, %v697
    %v1038 = vpack.c.b16 %v708, %v703
    %v1039 = vpack.c.b16 %v709, %v704
    %v1040 = vpack.c.b16 %v710, %v705
    %v1041 = vpack.c.b16 %v711, %v706
    %v1042 = vpack.c.b16 %v712, %v707
    %v1043 = vpack.c.b16 %v718, %v713
    %v1044 = vpack.c.b16 %v719, %v714
    %v1045 = vpack.c.b16 %v720, %v715
    %v1046 = vpack.c.b16 %v721, %v716
    %v1047 = vpack.c.b16 %v722, %v717
    %v1048 = vpack.c.b16 %v728, %v723
    %v1049 = vpack.c.b16 %v729, %v724
    %v1050 = vpack.c.b16 %v730, %v725
    %v1051 = vpack.c.b16 %v731, %v726
    %v1052 = vpack.c.b16 %v732, %v727
    %v1053 = vpack.c.b16 %v738, %v733
    %v1054 = vpack.c.b16 %v739, %v734
    %v1055 = vpack.c.b16 %v740, %v735
    %v1056 = vpack.c.b16 %v741, %v736
    %v1057 = vpack.c.b16 %v742, %v737
    %v1058 = vpack.c.b16 %v748, %v743
    %v1059 = vpack.c.b16 %v749, %v744
    %v1060 = vpack.c.b16 %v750, %v745
    %v1061 = vpack.c.b16 %v751, %v746
    %v1062 = vpack.c.b16 %v752, %v747
    %v1063 = vpack.c.b16 %v758, %v753
    %v1064 = vpack.c.b16 %v759, %v754
    %v1065 = vpack.c.b16 %v760, %v755
    %v1066 = vpack.c.b16 %v761, %v756
    %v1067 = vpack.c.b16 %v762, %v757
    %v1068 = vpack.c.b16 %v768, %v763
    %v1069 = vpack.c.b16 %v769, %v764
    %v1070 = vpack.c.b16 %v770, %v765
    %v1071 = vpack.c.b16 %v771, %v766
    %v1072 = vpack.c.b16 %v772, %v767
    %v1073 = vpack.c.b16 %v778, %v773
    %v1074 = vpack.c.b16 %v779, %v774
    %v1075 = vpack.c.b16 %v780, %v775
    %v1076 = vpack.c.b16 %v781, %v776
    %v1077 = vpack.c.b16 %v782, %v777
    %v1078 = vpack.c.b16 %v788, %v783
    %v1079 = vpack.c.b16 %v789, %v784
    %v1080 = vpack.c.b16 %v790, %v785
    %v1081 = vpack.c.b16 %v791, %v786
    %v1082 = vpack.c.b16 %v792, %v787
    %v1083 = vpack.c.b16 %v798, %v793
    %v1084 = vpack.c.b16 %v799, %v794
    %v1085 = vpack.c.b16 %v800, %v795
    %v1086 = vpack.c.b16 %v801, %v796
    %v1087 = vpack.c.b16 %v802, %v797
    %v1088 = vpack.c.b16 %v808, %v803
    %v1089 = vpack.c.b16 %v809, %v804
    %v1090 = vpack.c.b16 %v810, %v805
    %v1091 = vpack.c.b16 %v811, %v806
    %v1092 = vpack.c.b16 %v812, %v807
    %v1093 = vpack.c.b16 %v818, %v813
    %v1094 = vpack.c.b16 %v819, %v814
    %v1095 = vpack.c.b16 %v820, %v815
    %v1096 = vpack.c.b16 %v821, %v816
    %v1097 = vpack.c.b16 %v822, %v817
    %v1098 = vpack.c.b16 %v828, %v823
    %v1099 = vpack.c.b16 %v829, %v824
    %v1100 = vpack.c.b16 %v830, %v825
    %v1101 = vpack.c.b16 %v831, %v826
    %v1102 = vpack.c.b16 %v832, %v827
    %v1103 = vpack.c.b16 %v838, %v833
    %v1104 = vpack.c.b16 %v839, %v834
    %v1105 = vpack.c.b16 %v840, %v835
    %v1106 = vpack.c.b16 %v841, %v836
    %v1107 = vpack.c.b16 %v842, %v837
    %v1108 = vpack.c.b16 %v848, %v843
    %v1109 = vpack.c.b16 %v849, %v844
    %v1110 = vpack.c.b16 %v850, %v845
    %v1111 = vpack.c.b16 %v851, %v846
    %v1112 = vpack.c.b16 %v852, %v847
    %v1113 = vpack.c.b16 %v858, %v853
    %v1114 = vpack.c.b16 %v859, %v854
    %v1115 = vpack.c.b16 %v860, %v855
    %v1116 = vpack.c.b16 %v861, %v856
    %v1117 = vpack.c.b16 %v862, %v857
    %v1118 = vpack.c.b16 %v868, %v863
    %v1119 = vpack.c.b16 %v869, %v864
    %v1120 = vpack.c.b16 %v870, %v865
    %v1121 = vpack.c.b16 %v871, %v866
    %v1122 = vpack.c.b16 %v872, %v867
    %v1123 = vpack.c.b16 %v878, %v873
    %v1124 = vpack.c.b16 %v879, %v874
    %v1125 = vpack.c.b16 %v880, %v875
    %v1126 = vpack.c.b16 %v881, %v876
    %v1127 = vpack.c.b16 %v882, %v877
    %v1128 = vpack.c.b16 %v888, %v883
    %v1129 = vpack.c.b16 %v889, %v884
    %v1130 = vpack.c.b16 %v890, %v885
    %v1131 = vpack.c.b16 %v891, %v886
    %v1132 = vpack.c.b16 %v892, %v887
    %v1133 = vpack.c.b16 %v898, %v893
    %v1134 = vpack.c.b16 %v899, %v894
    %v1135 = vpack.c.b16 %v900, %v895
    %v1136 = vpack.c.b16 %v901, %v896
    %v1137 = vpack.c.b16 %v902, %v897
    %v1138 = vpack.c.b16 %v908, %v903
    %v1139 = vpack.c.b16 %v909, %v904
    %v1140 = vpack.c.b16 %v910, %v905
    %v1141 = vpack.c.b16 %v911, %v906
    %v1142 = vpack.c.b16 %v912, %v907
    %v1143 = vpack.c.b16 %v918, %v913
    %v1144 = vpack.c.b16 %v919, %v914
    %v1145 = vpack.c.b16 %v920, %v915
    %v1146 = vpack.c.b16 %v921, %v916
    %v1147 = vpack.c.b16 %v922, %v917
    %v1148 = vpack.c.b16 %v928, %v923
    %v1149 = vpack.c.b16 %v929, %v924
    %v1150 = vpack.c.b16 %v930, %v925
    %v1151 = vpack.c.b16 %v931, %v926
    %v1152 = vpack.c.b16 %v932, %v927
    %v1153 = vpack.c.b16 %v938, %v933
    %v1154 = vpack.c.b16 %v939, %v934
    %v1155 = vpack.c.b16 %v940, %v935
    %v1156 = vpack.c.b16 %v941, %v936
    %v1157 = vpack.c.b16 %v942, %v937
    %v1158 = vpack.c.b16 %v948, %v943
    %v1159 = vpack.c.b16 %v949, %v944
    %v1160 = vpack.c.b16 %v950, %v945
    %v1161 = vpack.c.b16 %v951, %v946
    %v1162 = vpack.c.b16 %v952, %v947
    %v1163 = vpack.c.b16 %v958, %v953
    %v1164 = vpack.c.b16 %v959, %v954
    %v1165 = vpack.c.b16 %v960, %v955
    %v1166 = vpack.c.b16 %v961, %v956
    %v1167 = vpack.c.b16 %v962, %v957
    %v1168 = vpack.c.b16 %v968, %v963
    %v1169 = vpack.c.b16 %v969, %v964
    %v1170 = vpack.c.b16 %v970, %v965
    %v1171 = vpack.c.b16 %v971, %v966
    %v1172 = vpack.c.b16 %v972, %v967
    %1373 = vmatprep.subr.bf16.mxu0 %v1009
    %1374 = vmatpush1.bf16.msra.mxu0 %v1008
    %1375 = vmatprep.subr.bf16.mxu0 %v1004
    %1376 = vmatpush1.bf16.msra.mxu0 %v1003
    %1377 = vmatprep.subr.bf16.mxu0 %v999
    %1378 = vmatpush1.bf16.msra.mxu0 %v998
    %1379 = vmatprep.subr.bf16.mxu0 %v994
    %1380 = vmatpush1.bf16.msra.mxu0 %v993
    %1381 = vmatprep.subr.bf16.mxu0 %v989
    %1382 = vmatpush1.bf16.msra.mxu0 %v988
    %1383 = vmatprep.subr.bf16.mxu0 %v984
    %1384 = vmatpush1.bf16.msra.mxu0 %v983
    %1385 = vmatprep.subr.bf16.mxu0 %v979
    %1386 = vmatpush1.bf16.msra.mxu0 %v978
    %1387 = vmatprep.subr.bf16.mxu0 %v974
    %1388 = vmatpush1.bf16.msra.mxu0 %v973
    %1389 = vmatprep.subr.bf16.mxu0 %v1049
    %1390 = vmatpush2.bf16.msra.mxu0 %v1048
    %1391 = vmatprep.subr.bf16.mxu0 %v1044
    %1392 = vmatpush2.bf16.msra.mxu0 %v1043
    %1393 = vmatprep.subr.bf16.mxu0 %v1039
    %1394 = vmatpush2.bf16.msra.mxu0 %v1038
    %1395 = vmatprep.subr.bf16.mxu0 %v1034
    %1396 = vmatpush2.bf16.msra.mxu0 %v1033
    %1397 = vmatprep.subr.bf16.mxu0 %v1029
    %1398 = vmatpush2.bf16.msra.mxu0 %v1028
    %1399 = vmatprep.subr.bf16.mxu0 %v1024
    %1400 = vmatpush2.bf16.msra.mxu0 %v1023
    %1401 = vmatprep.subr.bf16.mxu0 %v1019
    %1402 = vmatpush2.bf16.msra.mxu0 %v1018
    %1403 = vmatprep.subr.bf16.mxu0 %v1014
    %1404 = vmatpush2.bf16.msra.mxu0 %v1013
    %1405 = vmatprep.mubr.bf16.mxu0 %v324
    %1406 = vmatmul.mubr.bf16.gmra.mxu0 %v323
    %v1407 = vpop.f32.mrf.mxu0
    %v1408 = vadd.f32 0.0, %v1407
    %v1409 = vpop.f32.mrf.mxu0
    %v1410 = vadd.f32 0.0, %v1409
    %v1411 = vpop.f32.mrf.mxu0
    %v1412 = vpop.f32.mrf.mxu0
    %1413 = vdwg.mxu0
    %1414 = vmatprep.subr.bf16.mxu0 %v1089
    %1415 = vmatpush1.bf16.msra.mxu0 %v1088
    %1416 = vmatprep.subr.bf16.mxu0 %v1084
    %1417 = vmatpush1.bf16.msra.mxu0 %v1083
    %1418 = vmatprep.subr.bf16.mxu0 %v1079
    %1419 = vmatpush1.bf16.msra.mxu0 %v1078
    %1420 = vmatprep.subr.bf16.mxu0 %v1074
    %1421 = vmatpush1.bf16.msra.mxu0 %v1073
    %1422 = vmatprep.subr.bf16.mxu0 %v1069
    %1423 = vmatpush1.bf16.msra.mxu0 %v1068
    %1424 = vmatprep.subr.bf16.mxu0 %v1064
    %1425 = vmatpush1.bf16.msra.mxu0 %v1063
    %1426 = vmatprep.subr.bf16.mxu0 %v1059
    %1427 = vmatpush1.bf16.msra.mxu0 %v1058
    %1428 = vmatprep.subr.bf16.mxu0 %v1054
    %1429 = vmatpush1.bf16.msra.mxu0 %v1053
    %1430 = vmatprep.subr.bf16.mxu0 %v1129
    %1431 = vmatpush2.bf16.msra.mxu0 %v1128
    %1432 = vmatprep.subr.bf16.mxu0 %v1124
    %1433 = vmatpush2.bf16.msra.mxu0 %v1123
    %1434 = vmatprep.subr.bf16.mxu0 %v1119
    %1435 = vmatpush2.bf16.msra.mxu0 %v1118
    %1436 = vmatprep.subr.bf16.mxu0 %v1114
    %1437 = vmatpush2.bf16.msra.mxu0 %v1113
    %1438 = vmatprep.subr.bf16.mxu0 %v1109
    %1439 = vmatpush2.bf16.msra.mxu0 %v1108
    %1440 = vmatprep.subr.bf16.mxu0 %v1104
    %1441 = vmatpush2.bf16.msra.mxu0 %v1103
    %1442 = vmatprep.subr.bf16.mxu0 %v1099
    %1443 = vmatpush2.bf16.msra.mxu0 %v1098
    %1444 = vmatprep.subr.bf16.mxu0 %v1094
    %1445 = vmatpush2.bf16.msra.mxu0 %v1093
    %1446 = vmatprep.mubr.bf16.mxu0 %v326
    %1447 = vmatmul.mubr.bf16.gmra.mxu0 %v325
    %v1448 = vpop.f32.mrf.mxu0
    %v1449 = vadd.f32 %v1408, %v1448
    %v1450 = vpop.f32.mrf.mxu0
    %v1451 = vadd.f32 %v1410, %v1450
    %v1452 = vpop.f32.mrf.mxu0
    %v1453 = vpop.f32.mrf.mxu0
    %1454 = vdwg.mxu0
    %1455 = vmatprep.subr.bf16.mxu0 %v1169
    %1456 = vmatpush1.bf16.msra.mxu0 %v1168
    %1457 = vmatprep.subr.bf16.mxu0 %v1164
    %1458 = vmatpush1.bf16.msra.mxu0 %v1163
    %1459 = vmatprep.subr.bf16.mxu0 %v1159
    %1460 = vmatpush1.bf16.msra.mxu0 %v1158
    %1461 = vmatprep.subr.bf16.mxu0 %v1154
    %1462 = vmatpush1.bf16.msra.mxu0 %v1153
    %1463 = vmatprep.subr.bf16.mxu0 %v1149
    %1464 = vmatpush1.bf16.msra.mxu0 %v1148
    %1465 = vmatprep.subr.bf16.mxu0 %v1144
    %1466 = vmatpush1.bf16.msra.mxu0 %v1143
    %1467 = vmatprep.subr.bf16.mxu0 %v1139
    %1468 = vmatpush1.bf16.msra.mxu0 %v1138
    %1469 = vmatprep.subr.bf16.mxu0 %v1134
    %1470 = vmatpush1.bf16.msra.mxu0 %v1133
    %1471 = vmatprep.subr.bf16.mxu0 0
    %1472 = vmatpush2.bf16.msra.mxu0 0
    %1473 = vmatprep.subr.bf16.mxu0 0
    %1474 = vmatpush2.bf16.msra.mxu0 0
    %1475 = vmatprep.subr.bf16.mxu0 0
    %1476 = vmatpush2.bf16.msra.mxu0 0
    %1477 = vmatprep.subr.bf16.mxu0 0
    %1478 = vmatpush2.bf16.msra.mxu0 0
    %1479 = vmatprep.subr.bf16.mxu0 0
    %1480 = vmatpush2.bf16.msra.mxu0 0
    %1481 = vmatprep.subr.bf16.mxu0 0
    %1482 = vmatpush2.bf16.msra.mxu0 0
    %1483 = vmatprep.subr.bf16.mxu0 0
    %1484 = vmatpush2.bf16.msra.mxu0 0
    %1485 = vmatprep.subr.bf16.mxu0 0
    %1486 = vmatpush2.bf16.msra.mxu0 0
    %1487 = vmatprep.mubr.bf16.mxu0 0
    %1488 = vmatmul.mubr.bf16.gmra.mxu0 %v327
    %v1489 = vpop.f32.mrf.mxu0
    %v1490 = vadd.f32 %v1449, %v1489
    %v1491 = vpop.f32.mrf.mxu0
    %v1492 = vadd.f32 %v1451, %v1491
    %v1493 = vpop.f32.mrf.mxu0
    %v1494 = vpop.f32.mrf.mxu0
    %1495 = vdwg.mxu0
    %1496 = vmatprep.subr.bf16.mxu0 %v1011
    %1497 = vmatpush1.bf16.msra.mxu0 %v1010
    %1498 = vmatprep.subr.bf16.mxu0 %v1006
    %1499 = vmatpush1.bf16.msra.mxu0 %v1005
    %1500 = vmatprep.subr.bf16.mxu0 %v1001
    %1501 = vmatpush1.bf16.msra.mxu0 %v1000
    %1502 = vmatprep.subr.bf16.mxu0 %v996
    %1503 = vmatpush1.bf16.msra.mxu0 %v995
    %1504 = vmatprep.subr.bf16.mxu0 %v991
    %1505 = vmatpush1.bf16.msra.mxu0 %v990
    %1506 = vmatprep.subr.bf16.mxu0 %v986
    %1507 = vmatpush1.bf16.msra.mxu0 %v985
    %1508 = vmatprep.subr.bf16.mxu0 %v981
    %1509 = vmatpush1.bf16.msra.mxu0 %v980
    %1510 = vmatprep.subr.bf16.mxu0 %v976
    %1511 = vmatpush1.bf16.msra.mxu0 %v975
    %1512 = vmatprep.subr.bf16.mxu0 %v1051
    %1513 = vmatpush2.bf16.msra.mxu0 %v1050
    %1514 = vmatprep.subr.bf16.mxu0 %v1046
    %1515 = vmatpush2.bf16.msra.mxu0 %v1045
    %1516 = vmatprep.subr.bf16.mxu0 %v1041
    %1517 = vmatpush2.bf16.msra.mxu0 %v1040
    %1518 = vmatprep.subr.bf16.mxu0 %v1036
    %1519 = vmatpush2.bf16.msra.mxu0 %v1035
    %1520 = vmatprep.subr.bf16.mxu0 %v1031
    %1521 = vmatpush2.bf16.msra.mxu0 %v1030
    %1522 = vmatprep.subr.bf16.mxu0 %v1026
    %1523 = vmatpush2.bf16.msra.mxu0 %v1025
    %1524 = vmatprep.subr.bf16.mxu0 %v1021
    %1525 = vmatpush2.bf16.msra.mxu0 %v1020
    %1526 = vmatprep.subr.bf16.mxu0 %v1016
    %1527 = vmatpush2.bf16.msra.mxu0 %v1015
    %1528 = vmatprep.mubr.bf16.mxu0 %v324
    %1529 = vmatmul.mubr.bf16.gmra.mxu0 %v323
    %v1530 = vpop.f32.mrf.mxu0
    %v1531 = vadd.f32 0.0, %v1530
    %v1532 = vpop.f32.mrf.mxu0
    %v1533 = vadd.f32 0.0, %v1532
    %v1534 = vpop.f32.mrf.mxu0
    %v1535 = vpop.f32.mrf.mxu0
    %1536 = vdwg.mxu0
    %1537 = vmatprep.subr.bf16.mxu0 %v1091
    %1538 = vmatpush1.bf16.msra.mxu0 %v1090
    %1539 = vmatprep.subr.bf16.mxu0 %v1086
    %1540 = vmatpush1.bf16.msra.mxu0 %v1085
    %1541 = vmatprep.subr.bf16.mxu0 %v1081
    %1542 = vmatpush1.bf16.msra.mxu0 %v1080
    %1543 = vmatprep.subr.bf16.mxu0 %v1076
    %1544 = vmatpush1.bf16.msra.mxu0 %v1075
    %1545 = vmatprep.subr.bf16.mxu0 %v1071
    %1546 = vmatpush1.bf16.msra.mxu0 %v1070
    %1547 = vmatprep.subr.bf16.mxu0 %v1066
    %1548 = vmatpush1.bf16.msra.mxu0 %v1065
    %1549 = vmatprep.subr.bf16.mxu0 %v1061
    %1550 = vmatpush1.bf16.msra.mxu0 %v1060
    %1551 = vmatprep.subr.bf16.mxu0 %v1056
    %1552 = vmatpush1.bf16.msra.mxu0 %v1055
    %1553 = vmatprep.subr.bf16.mxu0 %v1131
    %1554 = vmatpush2.bf16.msra.mxu0 %v1130
    %1555 = vmatprep.subr.bf16.mxu0 %v1126
    %1556 = vmatpush2.bf16.msra.mxu0 %v1125
    %1557 = vmatprep.subr.bf16.mxu0 %v1121
    %1558 = vmatpush2.bf16.msra.mxu0 %v1120
    %1559 = vmatprep.subr.bf16.mxu0 %v1116
    %1560 = vmatpush2.bf16.msra.mxu0 %v1115
    %1561 = vmatprep.subr.bf16.mxu0 %v1111
    %1562 = vmatpush2.bf16.msra.mxu0 %v1110
    %1563 = vmatprep.subr.bf16.mxu0 %v1106
    %1564 = vmatpush2.bf16.msra.mxu0 %v1105
    %1565 = vmatprep.subr.bf16.mxu0 %v1101
    %1566 = vmatpush2.bf16.msra.mxu0 %v1100
    %1567 = vmatprep.subr.bf16.mxu0 %v1096
    %1568 = vmatpush2.bf16.msra.mxu0 %v1095
    %1569 = vmatprep.mubr.bf16.mxu0 %v326
    %1570 = vmatmul.mubr.bf16.gmra.mxu0 %v325
    %v1571 = vpop.f32.mrf.mxu0
    %v1572 = vadd.f32 %v1531, %v1571
    %v1573 = vpop.f32.mrf.mxu0
    %v1574 = vadd.f32 %v1533, %v1573
    %v1575 = vpop.f32.mrf.mxu0
    %v1576 = vpop.f32.mrf.mxu0
    %1577 = vdwg.mxu0
    %1578 = vmatprep.subr.bf16.mxu0 %v1171
    %1579 = vmatpush1.bf16.msra.mxu0 %v1170
    %1580 = vmatprep.subr.bf16.mxu0 %v1166
    %1581 = vmatpush1.bf16.msra.mxu0 %v1165
    %1582 = vmatprep.subr.bf16.mxu0 %v1161
    %1583 = vmatpush1.bf16.msra.mxu0 %v1160
    %1584 = vmatprep.subr.bf16.mxu0 %v1156
    %1585 = vmatpush1.bf16.msra.mxu0 %v1155
    %1586 = vmatprep.subr.bf16.mxu0 %v1151
    %1587 = vmatpush1.bf16.msra.mxu0 %v1150
    %1588 = vmatprep.subr.bf16.mxu0 %v1146
    %1589 = vmatpush1.bf16.msra.mxu0 %v1145
    %1590 = vmatprep.subr.bf16.mxu0 %v1141
    %1591 = vmatpush1.bf16.msra.mxu0 %v1140
    %1592 = vmatprep.subr.bf16.mxu0 %v1136
    %1593 = vmatpush1.bf16.msra.mxu0 %v1135
    %1594 = vmatprep.subr.bf16.mxu0 0
    %1595 = vmatpush2.bf16.msra.mxu0 0
    %1596 = vmatprep.subr.bf16.mxu0 0
    %1597 = vmatpush2.bf16.msra.mxu0 0
    %1598 = vmatprep.subr.bf16.mxu0 0
    %1599 = vmatpush2.bf16.msra.mxu0 0
    %1600 = vmatprep.subr.bf16.mxu0 0
    %1601 = vmatpush2.bf16.msra.mxu0 0
    %1602 = vmatprep.subr.bf16.mxu0 0
    %1603 = vmatpush2.bf16.msra.mxu0 0
    %1604 = vmatprep.subr.bf16.mxu0 0
    %1605 = vmatpush2.bf16.msra.mxu0 0
    %1606 = vmatprep.subr.bf16.mxu0 0
    %1607 = vmatpush2.bf16.msra.mxu0 0
    %1608 = vmatprep.subr.bf16.mxu0 0
    %1609 = vmatpush2.bf16.msra.mxu0 0
    %1610 = vmatprep.mubr.bf16.mxu0 0
    %1611 = vmatmul.mubr.bf16.gmra.mxu0 %v327
    %v1612 = vpop.f32.mrf.mxu0
    %v1613 = vadd.f32 %v1572, %v1612
    %v1614 = vpop.f32.mrf.mxu0
    %v1615 = vadd.f32 %v1574, %v1614
    %v1616 = vpop.f32.mrf.mxu0
    %v1617 = vpop.f32.mrf.mxu0
    %1618 = vdwg.mxu0
    %1619 = vmatprep.subr.bf16.mxu0 0
    %1620 = vmatpush1.bf16.msra.mxu0 %v1012
    %1621 = vmatprep.subr.bf16.mxu0 0
    %1622 = vmatpush1.bf16.msra.mxu0 %v1007
    %1623 = vmatprep.subr.bf16.mxu0 0
    %1624 = vmatpush1.bf16.msra.mxu0 %v1002
    %1625 = vmatprep.subr.bf16.mxu0 0
    %1626 = vmatpush1.bf16.msra.mxu0 %v997
    %1627 = vmatprep.subr.bf16.mxu0 0
    %1628 = vmatpush1.bf16.msra.mxu0 %v992
    %1629 = vmatprep.subr.bf16.mxu0 0
    %1630 = vmatpush1.bf16.msra.mxu0 %v987
    %1631 = vmatprep.subr.bf16.mxu0 0
    %1632 = vmatpush1.bf16.msra.mxu0 %v982
    %1633 = vmatprep.subr.bf16.mxu0 0
    %1634 = vmatpush1.bf16.msra.mxu0 %v977
    %1635 = vmatprep.subr.bf16.mxu0 0
    %1636 = vmatpush2.bf16.msra.mxu0 %v1052
    %1637 = vmatprep.subr.bf16.mxu0 0
    %1638 = vmatpush2.bf16.msra.mxu0 %v1047
    %1639 = vmatprep.subr.bf16.mxu0 0
    %1640 = vmatpush2.bf16.msra.mxu0 %v1042
    %1641 = vmatprep.subr.bf16.mxu0 0
    %1642 = vmatpush2.bf16.msra.mxu0 %v1037
    %1643 = vmatprep.subr.bf16.mxu0 0
    %1644 = vmatpush2.bf16.msra.mxu0 %v1032
    %1645 = vmatprep.subr.bf16.mxu0 0
    %1646 = vmatpush2.bf16.msra.mxu0 %v1027
    %1647 = vmatprep.subr.bf16.mxu0 0
    %1648 = vmatpush2.bf16.msra.mxu0 %v1022
    %1649 = vmatprep.subr.bf16.mxu0 0
    %1650 = vmatpush2.bf16.msra.mxu0 %v1017
    %1651 = vmatprep.mubr.bf16.mxu0 %v324
    %1652 = vmatmul.mubr.bf16.gmra.mxu0 %v323
    %v1653 = vpop.f32.mrf.mxu0
    %v1654 = vadd.f32 0.0, %v1653
    %v1655 = vpop.f32.mrf.mxu0
    %v1656 = vpop.f32.mrf.mxu0
    %v1657 = vpop.f32.mrf.mxu0
    %1658 = vdwg.mxu0
    %1659 = vmatprep.subr.bf16.mxu0 0
    %1660 = vmatpush1.bf16.msra.mxu0 %v1092
    %1661 = vmatprep.subr.bf16.mxu0 0
    %1662 = vmatpush1.bf16.msra.mxu0 %v1087
    %1663 = vmatprep.subr.bf16.mxu0 0
    %1664 = vmatpush1.bf16.msra.mxu0 %v1082
    %1665 = vmatprep.subr.bf16.mxu0 0
    %1666 = vmatpush1.bf16.msra.mxu0 %v1077
    %1667 = vmatprep.subr.bf16.mxu0 0
    %1668 = vmatpush1.bf16.msra.mxu0 %v1072
    %1669 = vmatprep.subr.bf16.mxu0 0
    %1670 = vmatpush1.bf16.msra.mxu0 %v1067
    %1671 = vmatprep.subr.bf16.mxu0 0
    %1672 = vmatpush1.bf16.msra.mxu0 %v1062
    %1673 = vmatprep.subr.bf16.mxu0 0
    %1674 = vmatpush1.bf16.msra.mxu0 %v1057
    %1675 = vmatprep.subr.bf16.mxu0 0
    %1676 = vmatpush2.bf16.msra.mxu0 %v1132
    %1677 = vmatprep.subr.bf16.mxu0 0
    %1678 = vmatpush2.bf16.msra.mxu0 %v1127
    %1679 = vmatprep.subr.bf16.mxu0 0
    %1680 = vmatpush2.bf16.msra.mxu0 %v1122
    %1681 = vmatprep.subr.bf16.mxu0 0
    %1682 = vmatpush2.bf16.msra.mxu0 %v1117
    %1683 = vmatprep.subr.bf16.mxu0 0
    %1684 = vmatpush2.bf16.msra.mxu0 %v1112
    %1685 = vmatprep.subr.bf16.mxu0 0
    %1686 = vmatpush2.bf16.msra.mxu0 %v1107
    %1687 = vmatprep.subr.bf16.mxu0 0
    %1688 = vmatpush2.bf16.msra.mxu0 %v1102
    %1689 = vmatprep.subr.bf16.mxu0 0
    %1690 = vmatpush2.bf16.msra.mxu0 %v1097
    %1691 = vmatprep.mubr.bf16.mxu0 %v326
    %1692 = vmatmul.mubr.bf16.gmra.mxu0 %v325
    %v1693 = vpop.f32.mrf.mxu0
    %v1694 = vadd.f32 %v1654, %v1693
    %v1695 = vpop.f32.mrf.mxu0
    %v1696 = vpop.f32.mrf.mxu0
    %v1697 = vpop.f32.mrf.mxu0
    %1698 = vdwg.mxu0
    %1699 = vmatprep.subr.bf16.mxu0 0
    %1700 = vmatpush1.bf16.msra.mxu0 %v1172
    %1701 = vmatprep.subr.bf16.mxu0 0
    %1702 = vmatpush1.bf16.msra.mxu0 %v1167
    %1703 = vmatprep.subr.bf16.mxu0 0
    %1704 = vmatpush1.bf16.msra.mxu0 %v1162
    %1705 = vmatprep.subr.bf16.mxu0 0
    %1706 = vmatpush1.bf16.msra.mxu0 %v1157
    %1707 = vmatprep.subr.bf16.mxu0 0
    %1708 = vmatpush1.bf16.msra.mxu0 %v1152
    %1709 = vmatprep.subr.bf16.mxu0 0
    %1710 = vmatpush1.bf16.msra.mxu0 %v1147
    %1711 = vmatprep.subr.bf16.mxu0 0
    %1712 = vmatpush1.bf16.msra.mxu0 %v1142
    %1713 = vmatprep.subr.bf16.mxu0 0
    %1714 = vmatpush1.bf16.msra.mxu0 %v1137
    %1715 = vmatprep.subr.bf16.mxu0 0
    %1716 = vmatpush2.bf16.msra.mxu0 0
    %1717 = vmatprep.subr.bf16.mxu0 0
    %1718 = vmatpush2.bf16.msra.mxu0 0
    %1719 = vmatprep.subr.bf16.mxu0 0
    %1720 = vmatpush2.bf16.msra.mxu0 0
    %1721 = vmatprep.subr.bf16.mxu0 0
    %1722 = vmatpush2.bf16.msra.mxu0 0
    %1723 = vmatprep.subr.bf16.mxu0 0
    %1724 = vmatpush2.bf16.msra.mxu0 0
    %1725 = vmatprep.subr.bf16.mxu0 0
    %1726 = vmatpush2.bf16.msra.mxu0 0
    %1727 = vmatprep.subr.bf16.mxu0 0
    %1728 = vmatpush2.bf16.msra.mxu0 0
    %1729 = vmatprep.subr.bf16.mxu0 0
    %1730 = vmatpush2.bf16.msra.mxu0 0
    %1731 = vmatprep.mubr.bf16.mxu0 0
    %1732 = vmatmul.mubr.bf16.gmra.mxu0 %v327
    %v1733 = vpop.f32.mrf.mxu0
    %v1734 = vadd.f32 %v1694, %v1733
    %v1735 = vpop.f32.mrf.mxu0
    %v1736 = vpop.f32.mrf.mxu0
    %v1737 = vpop.f32.mrf.mxu0
    %1738 = vdwg.mxu0
    %v1739 = vmul.f32 %v1490, %v1490
    %v1740 = vmul.f32 %v1492, %v1492
    %v1741 = vmul.f32 %v1613, %v1613
    %v1742 = vmul.f32 %v1615, %v1615
    %v1743 = vmul.f32 %v1734, %v1734
    %v1744 = vld [vmem:[#allocation7] sm:$0xff]
    %v1745 = vld [vmem:[#allocation7 + $0x8] sm:$0xff]
    %v1746 = vld [vmem:[#allocation7 + $0x10] sm:$0xf]
    %v1747 = vld [vmem:[#allocation7 + $0x14] sm:$0xff]
    %v1748 = vld [vmem:[#allocation7 + $0x1c] sm:$0xff]
    %v1749 = vld [vmem:[#allocation7 + $0x24] sm:$0xf]
    %v1750 = vld [vmem:[#allocation7 + $0x28] sm:$0xff]
    %v1751 = vld [vmem:[#allocation7 + $0x30] sm:$0xff]
    %v1752 = vld [vmem:[#allocation7 + $0x38] sm:$0xf]
    %v1753 = vld [vmem:[#allocation7 + $0x3c] sm:$0xff]
    %v1754 = vld [vmem:[#allocation7 + $0x44] sm:$0xff]
    %v1755 = vld [vmem:[#allocation7 + $0x4c] sm:$0xf]
    %v1756 = vld [vmem:[#allocation7 + $0x50] sm:$0xff]
    %v1757 = vld [vmem:[#allocation7 + $0x58] sm:$0xff]
    %v1758 = vld [vmem:[#allocation7 + $0x60] sm:$0xf]
    %v1759 = vld [vmem:[#allocation7 + $0x64] sm:$0xff]
    %v1760 = vld [vmem:[#allocation7 + $0x6c] sm:$0xff]
    %v1761 = vld [vmem:[#allocation7 + $0x74] sm:$0xf]
    %v1762 = vld [vmem:[#allocation7 + $0x78] sm:$0xff]
    %v1763 = vld [vmem:[#allocation7 + $0x80] sm:$0xff]
    %v1764 = vld [vmem:[#allocation7 + $0x88] sm:$0xf]
    %v1765 = vld [vmem:[#allocation7 + $0x8c] sm:$0xff]
    %v1766 = vld [vmem:[#allocation7 + $0x94] sm:$0xff]
    %v1767 = vld [vmem:[#allocation7 + $0x9c] sm:$0xf]
    %v1768 = vld [vmem:[#allocation7 + $0xa0] sm:$0xff]
    %v1769 = vld [vmem:[#allocation7 + $0xa8] sm:$0xff]
    %v1770 = vld [vmem:[#allocation7 + $0xb0] sm:$0xf]
    %v1771 = vld [vmem:[#allocation7 + $0xb4] sm:$0xff]
    %v1772 = vld [vmem:[#allocation7 + $0xbc] sm:$0xff]
    %v1773 = vld [vmem:[#allocation7 + $0xc4] sm:$0xf]
    %v1774 = vld [vmem:[#allocation7 + $0xc8] sm:$0xff]
    %v1775 = vld [vmem:[#allocation7 + $0xd0] sm:$0xff]
    %v1776 = vld [vmem:[#allocation7 + $0xd8] sm:$0xf]
    %v1777 = vld [vmem:[#allocation7 + $0xdc] sm:$0xff]
    %v1778 = vld [vmem:[#allocation7 + $0xe4] sm:$0xff]
    %v1779 = vld [vmem:[#allocation7 + $0xec] sm:$0xf]
    %v1780 = vld [vmem:[#allocation7 + $0xf0] sm:$0xff]
    %v1781 = vld [vmem:[#allocation7 + $0xf8] sm:$0xff]
    %v1782 = vld [vmem:[#allocation7 + $0x100] sm:$0xf]
    %v1783 = vld [vmem:[#allocation7 + $0x104] sm:$0xff]
    %v1784 = vld [vmem:[#allocation7 + $0x10c] sm:$0xff]
    %v1785 = vld [vmem:[#allocation7 + $0x114] sm:$0xf]
    %v1786 = vld [vmem:[#allocation7 + $0x118] sm:$0xff]
    %v1787 = vld [vmem:[#allocation7 + $0x120] sm:$0xff]
    %v1788 = vld [vmem:[#allocation7 + $0x128] sm:$0xf]
    %v1789 = vld [vmem:[#allocation7 + $0x12c] sm:$0xff]
    %v1790 = vld [vmem:[#allocation7 + $0x134] sm:$0xff]
    %v1791 = vld [vmem:[#allocation7 + $0x13c] sm:$0xf]
    %v1792 = vld [vmem:[#allocation7 + $0x140] sm:$0xff]
    %v1793 = vld [vmem:[#allocation7 + $0x148] sm:$0xff]
    %v1794 = vld [vmem:[#allocation7 + $0x150] sm:$0xf]
    %v1795 = vld [vmem:[#allocation7 + $0x154] sm:$0xff]
    %v1796 = vld [vmem:[#allocation7 + $0x15c] sm:$0xff]
    %v1797 = vld [vmem:[#allocation7 + $0x164] sm:$0xf]
    %v1798 = vld [vmem:[#allocation7 + $0x168] sm:$0xff]
    %v1799 = vld [vmem:[#allocation7 + $0x170] sm:$0xff]
    %v1800 = vld [vmem:[#allocation7 + $0x178] sm:$0xf]
    %v1801 = vld [vmem:[#allocation7 + $0x17c] sm:$0xff]
    %v1802 = vld [vmem:[#allocation7 + $0x184] sm:$0xff]
    %v1803 = vld [vmem:[#allocation7 + $0x18c] sm:$0xf]
    %v1804 = vld [vmem:[#allocation7 + $0x190] sm:$0xff]
    %v1805 = vld [vmem:[#allocation7 + $0x198] sm:$0xff]
    %v1806 = vld [vmem:[#allocation7 + $0x1a0] sm:$0xf]
    %v1807 = vld [vmem:[#allocation7 + $0x1a4] sm:$0xff]
    %v1808 = vld [vmem:[#allocation7 + $0x1ac] sm:$0xff]
    %v1809 = vld [vmem:[#allocation7 + $0x1b4] sm:$0xf]
    %v1810 = vld [vmem:[#allocation7 + $0x1b8] sm:$0xff]
    %v1811 = vld [vmem:[#allocation7 + $0x1c0] sm:$0xff]
    %v1812 = vld [vmem:[#allocation7 + $0x1c8] sm:$0xf]
    %v1813 = vld [vmem:[#allocation7 + $0x1cc] sm:$0xff]
    %v1814 = vld [vmem:[#allocation7 + $0x1d4] sm:$0xff]
    %v1815 = vld [vmem:[#allocation7 + $0x1dc] sm:$0xf]
    %v1816 = vld [vmem:[#allocation7 + $0x1e0] sm:$0xff]
    %v1817 = vld [vmem:[#allocation7 + $0x1e8] sm:$0xff]
    %v1818 = vld [vmem:[#allocation7 + $0x1f0] sm:$0xf]
    %v1819 = vld [vmem:[#allocation7 + $0x1f4] sm:$0xff]
    %v1820 = vld [vmem:[#allocation7 + $0x1fc] sm:$0xff]
    %v1821 = vld [vmem:[#allocation7 + $0x204] sm:$0xf]
    %v1822 = vld [vmem:[#allocation7 + $0x208] sm:$0xff]
    %v1823 = vld [vmem:[#allocation7 + $0x210] sm:$0xff]
    %v1824 = vld [vmem:[#allocation7 + $0x218] sm:$0xf]
    %v1825 = vld [vmem:[#allocation7 + $0x21c] sm:$0xff]
    %v1826 = vld [vmem:[#allocation7 + $0x224] sm:$0xff]
    %v1827 = vld [vmem:[#allocation7 + $0x22c] sm:$0xf]
    %v1828 = vld [vmem:[#allocation7 + $0x230] sm:$0xff]
    %v1829 = vld [vmem:[#allocation7 + $0x238] sm:$0xff]
    %v1830 = vld [vmem:[#allocation7 + $0x240] sm:$0xf]
    %v1831 = vld [vmem:[#allocation7 + $0x244] sm:$0xff]
    %v1832 = vld [vmem:[#allocation7 + $0x24c] sm:$0xff]
    %v1833 = vld [vmem:[#allocation7 + $0x254] sm:$0xf]
    %v1834 = vld [vmem:[#allocation7 + $0x258] sm:$0xff]
    %v1835 = vld [vmem:[#allocation7 + $0x260] sm:$0xff]
    %v1836 = vld [vmem:[#allocation7 + $0x268] sm:$0xf]
    %v1837 = vld [vmem:[#allocation7 + $0x26c] sm:$0xff]
    %v1838 = vld [vmem:[#allocation7 + $0x274] sm:$0xff]
    %v1839 = vld [vmem:[#allocation7 + $0x27c] sm:$0xf]
    %v1840 = vld [vmem:[#allocation7 + $0x280] sm:$0xff]
    %v1841 = vld [vmem:[#allocation7 + $0x288] sm:$0xff]
    %v1842 = vld [vmem:[#allocation7 + $0x290] sm:$0xf]
    %v1843 = vld [vmem:[#allocation7 + $0x294] sm:$0xff]
    %v1844 = vld [vmem:[#allocation7 + $0x29c] sm:$0xff]
    %v1845 = vld [vmem:[#allocation7 + $0x2a4] sm:$0xf]
    %v1846 = vld [vmem:[#allocation7 + $0x2a8] sm:$0xff]
    %v1847 = vld [vmem:[#allocation7 + $0x2b0] sm:$0xff]
    %v1848 = vld [vmem:[#allocation7 + $0x2b8] sm:$0xf]
    %v1849 = vld [vmem:[#allocation7 + $0x2bc] sm:$0xff]
    %v1850 = vld [vmem:[#allocation7 + $0x2c4] sm:$0xff]
    %v1851 = vld [vmem:[#allocation7 + $0x2cc] sm:$0xf]
    %v1852 = vld [vmem:[#allocation7 + $0x2d0] sm:$0xff]
    %v1853 = vld [vmem:[#allocation7 + $0x2d8] sm:$0xff]
    %v1854 = vld [vmem:[#allocation7 + $0x2e0] sm:$0xf]
    %v1855 = vld [vmem:[#allocation7 + $0x2e4] sm:$0xff]
    %v1856 = vld [vmem:[#allocation7 + $0x2ec] sm:$0xff]
    %v1857 = vld [vmem:[#allocation7 + $0x2f4] sm:$0xf]
    %v1858 = vld [vmem:[#allocation7 + $0x2f8] sm:$0xff]
    %v1859 = vld [vmem:[#allocation7 + $0x300] sm:$0xff]
    %v1860 = vld [vmem:[#allocation7 + $0x308] sm:$0xf]
    %v1861 = vld [vmem:[#allocation7 + $0x30c] sm:$0xff]
    %v1862 = vld [vmem:[#allocation7 + $0x314] sm:$0xff]
    %v1863 = vld [vmem:[#allocation7 + $0x31c] sm:$0xf]
    %v1864 = vld [vmem:[#allocation7 + $0x320] sm:$0xff]
    %v1865 = vld [vmem:[#allocation7 + $0x328] sm:$0xff]
    %v1866 = vld [vmem:[#allocation7 + $0x330] sm:$0xf]
    %v1867 = vld [vmem:[#allocation7 + $0x334] sm:$0xff]
    %v1868 = vld [vmem:[#allocation7 + $0x33c] sm:$0xff]
    %v1869 = vld [vmem:[#allocation7 + $0x344] sm:$0xf]
    %v1870 = vld [vmem:[#allocation7 + $0x348] sm:$0xff]
    %v1871 = vld [vmem:[#allocation7 + $0x350] sm:$0xff]
    %v1872 = vld [vmem:[#allocation7 + $0x358] sm:$0xf]
    %v1873 = vld [vmem:[#allocation7 + $0x35c] sm:$0xff]
    %v1874 = vld [vmem:[#allocation7 + $0x364] sm:$0xff]
    %v1875 = vld [vmem:[#allocation7 + $0x36c] sm:$0xf]
    %v1876 = vld [vmem:[#allocation7 + $0x370] sm:$0xff]
    %v1877 = vld [vmem:[#allocation7 + $0x378] sm:$0xff]
    %v1878 = vld [vmem:[#allocation7 + $0x380] sm:$0xf]
    %v1879 = vld [vmem:[#allocation7 + $0x384] sm:$0xff]
    %v1880 = vld [vmem:[#allocation7 + $0x38c] sm:$0xff]
    %v1881 = vld [vmem:[#allocation7 + $0x394] sm:$0xf]
    %v1882 = vld [vmem:[#allocation7 + $0x398] sm:$0xff]
    %v1883 = vld [vmem:[#allocation7 + $0x3a0] sm:$0xff]
    %v1884 = vld [vmem:[#allocation7 + $0x3a8] sm:$0xf]
    %v1885 = vld [vmem:[#allocation7 + $0x3ac] sm:$0xff]
    %v1886 = vld [vmem:[#allocation7 + $0x3b4] sm:$0xff]
    %v1887 = vld [vmem:[#allocation7 + $0x3bc] sm:$0xf]
    %v1888 = vld [vmem:[#allocation7 + $0x3c0] sm:$0xff]
    %v1889 = vld [vmem:[#allocation7 + $0x3c8] sm:$0xff]
    %v1890 = vld [vmem:[#allocation7 + $0x3d0] sm:$0xf]
    %v1891 = vld [vmem:[#allocation7 + $0x3d4] sm:$0xff]
    %v1892 = vld [vmem:[#allocation7 + $0x3dc] sm:$0xff]
    %v1893 = vld [vmem:[#allocation7 + $0x3e4] sm:$0xf]
    %v1894 = vld [vmem:[#allocation7 + $0x3e8] sm:$0xff]
    %v1895 = vld [vmem:[#allocation7 + $0x3f0] sm:$0xff]
    %v1896 = vld [vmem:[#allocation7 + $0x3f8] sm:$0xf]
    %v1897 = vld [vmem:[#allocation7 + $0x3fc] sm:$0xff]
    %v1898 = vld [vmem:[#allocation7 + $0x404] sm:$0xff]
    %v1899 = vld [vmem:[#allocation7 + $0x40c] sm:$0xf]
    %v1900 = vld [vmem:[#allocation7 + $0x410] sm:$0xff]
    %v1901 = vld [vmem:[#allocation7 + $0x418] sm:$0xff]
    %v1902 = vld [vmem:[#allocation7 + $0x420] sm:$0xf]
    %v1903 = vld [vmem:[#allocation7 + $0x424] sm:$0xff]
    %v1904 = vld [vmem:[#allocation7 + $0x42c] sm:$0xff]
    %v1905 = vld [vmem:[#allocation7 + $0x434] sm:$0xf]
    %v1906 = vld [vmem:[#allocation7 + $0x438] sm:$0xff]
    %v1907 = vld [vmem:[#allocation7 + $0x440] sm:$0xff]
    %v1908 = vld [vmem:[#allocation7 + $0x448] sm:$0xf]
    %v1909 = vld [vmem:[#allocation7 + $0x44c] sm:$0xff]
    %v1910 = vld [vmem:[#allocation7 + $0x454] sm:$0xff]
    %v1911 = vld [vmem:[#allocation7 + $0x45c] sm:$0xf]
    %v1912 = vld [vmem:[#allocation7 + $0x460] sm:$0xff]
    %v1913 = vld [vmem:[#allocation7 + $0x468] sm:$0xff]
    %v1914 = vld [vmem:[#allocation7 + $0x470] sm:$0xf]
    %v1915 = vld [vmem:[#allocation7 + $0x474] sm:$0xff]
    %v1916 = vld [vmem:[#allocation7 + $0x47c] sm:$0xff]
    %v1917 = vld [vmem:[#allocation7 + $0x484] sm:$0xf]
    %v1918 = vld [vmem:[#allocation7 + $0x488] sm:$0xff]
    %v1919 = vld [vmem:[#allocation7 + $0x490] sm:$0xff]
    %v1920 = vld [vmem:[#allocation7 + $0x498] sm:$0xf]
    %v1921 = vld [vmem:[#allocation7 + $0x49c] sm:$0xff]
    %v1922 = vld [vmem:[#allocation7 + $0x4a4] sm:$0xff]
    %v1923 = vld [vmem:[#allocation7 + $0x4ac] sm:$0xf]
    %v1924 = vld [vmem:[#allocation7 + $0x4b0] sm:$0xff]
    %v1925 = vld [vmem:[#allocation7 + $0x4b8] sm:$0xff]
    %v1926 = vld [vmem:[#allocation7 + $0x4c0] sm:$0xf]
    %v1927 = vld [vmem:[#allocation7 + $0x4c4] sm:$0xff]
    %v1928 = vld [vmem:[#allocation7 + $0x4cc] sm:$0xff]
    %v1929 = vld [vmem:[#allocation7 + $0x4d4] sm:$0xf]
    %v1930 = vld [vmem:[#allocation7 + $0x4d8] sm:$0xff]
    %v1931 = vld [vmem:[#allocation7 + $0x4e0] sm:$0xff]
    %v1932 = vld [vmem:[#allocation7 + $0x4e8] sm:$0xf]
    %v1933 = vld [vmem:[#allocation7 + $0x4ec] sm:$0xff]
    %v1934 = vld [vmem:[#allocation7 + $0x4f4] sm:$0xff]
    %v1935 = vld [vmem:[#allocation7 + $0x4fc] sm:$0xf]
    %v1936 = vld [vmem:[#allocation7 + $0x500] sm:$0xff]
    %v1937 = vld [vmem:[#allocation7 + $0x508] sm:$0xff]
    %v1938 = vld [vmem:[#allocation7 + $0x510] sm:$0xf]
    %v1939 = vld [vmem:[#allocation7 + $0x514] sm:$0xff]
    %v1940 = vld [vmem:[#allocation7 + $0x51c] sm:$0xff]
    %v1941 = vld [vmem:[#allocation7 + $0x524] sm:$0xf]
    %v1942 = vld [vmem:[#allocation7 + $0x528] sm:$0xff]
    %v1943 = vld [vmem:[#allocation7 + $0x530] sm:$0xff]
    %v1944 = vld [vmem:[#allocation7 + $0x538] sm:$0xf]
    %v1945 = vld [vmem:[#allocation7 + $0x53c] sm:$0xff]
    %v1946 = vld [vmem:[#allocation7 + $0x544] sm:$0xff]
    %v1947 = vld [vmem:[#allocation7 + $0x54c] sm:$0xf]
    %v1948 = vld [vmem:[#allocation7 + $0x550] sm:$0xff]
    %v1949 = vld [vmem:[#allocation7 + $0x558] sm:$0xff]
    %v1950 = vld [vmem:[#allocation7 + $0x560] sm:$0xf]
    %v1951 = vld [vmem:[#allocation7 + $0x564] sm:$0xff]
    %v1952 = vld [vmem:[#allocation7 + $0x56c] sm:$0xff]
    %v1953 = vld [vmem:[#allocation7 + $0x574] sm:$0xf]
    %v1954 = vld [vmem:[#allocation7 + $0x578] sm:$0xff]
    %v1955 = vld [vmem:[#allocation7 + $0x580] sm:$0xff]
    %v1956 = vld [vmem:[#allocation7 + $0x588] sm:$0xf]
    %v1957 = vld [vmem:[#allocation7 + $0x58c] sm:$0xff]
    %v1958 = vld [vmem:[#allocation7 + $0x594] sm:$0xff]
    %v1959 = vld [vmem:[#allocation7 + $0x59c] sm:$0xf]
    %v1960 = vld [vmem:[#allocation7 + $0x5a0] sm:$0xff]
    %v1961 = vld [vmem:[#allocation7 + $0x5a8] sm:$0xff]
    %v1962 = vld [vmem:[#allocation7 + $0x5b0] sm:$0xf]
    %v1963 = vld [vmem:[#allocation7 + $0x5b4] sm:$0xff]
    %v1964 = vld [vmem:[#allocation7 + $0x5bc] sm:$0xff]
    %v1965 = vld [vmem:[#allocation7 + $0x5c4] sm:$0xf]
    %v1966 = vld [vmem:[#allocation7 + $0x5c8] sm:$0xff]
    %v1967 = vld [vmem:[#allocation7 + $0x5d0] sm:$0xff]
    %v1968 = vld [vmem:[#allocation7 + $0x5d8] sm:$0xf]
    %v1969 = vld [vmem:[#allocation7 + $0x5dc] sm:$0xff]
    %v1970 = vld [vmem:[#allocation7 + $0x5e4] sm:$0xff]
    %v1971 = vld [vmem:[#allocation7 + $0x5ec] sm:$0xf]
    %v1972 = vld [vmem:[#allocation7 + $0x5f0] sm:$0xff]
    %v1973 = vld [vmem:[#allocation7 + $0x5f8] sm:$0xff]
    %v1974 = vld [vmem:[#allocation7 + $0x600] sm:$0xf]
    %v1975 = vld [vmem:[#allocation7 + $0x604] sm:$0xff]
    %v1976 = vld [vmem:[#allocation7 + $0x60c] sm:$0xff]
    %v1977 = vld [vmem:[#allocation7 + $0x614] sm:$0xf]
    %v1978 = vld [vmem:[#allocation7 + $0x618] sm:$0xff]
    %v1979 = vld [vmem:[#allocation7 + $0x620] sm:$0xff]
    %v1980 = vld [vmem:[#allocation7 + $0x628] sm:$0xf]
    %v1981 = vld [vmem:[#allocation7 + $0x62c] sm:$0xff]
    %v1982 = vld [vmem:[#allocation7 + $0x634] sm:$0xff]
    %v1983 = vld [vmem:[#allocation7 + $0x63c] sm:$0xf]
    %v2224 = vunpack.c.l.b16 %v1744
    %v2225 = vunpack.c.h.b16 %v1744
    %v2226 = vunpack.c.l.b16 %v1745
    %v2227 = vunpack.c.h.b16 %v1745
    %v2228 = vunpack.c.l.b16 %v1746
    %v2229 = vunpack.c.l.b16 %v1747
    %v2230 = vunpack.c.h.b16 %v1747
    %v2231 = vunpack.c.l.b16 %v1748
    %v2232 = vunpack.c.h.b16 %v1748
    %v2233 = vunpack.c.l.b16 %v1749
    %v2234 = vunpack.c.l.b16 %v1750
    %v2235 = vunpack.c.h.b16 %v1750
    %v2236 = vunpack.c.l.b16 %v1751
    %v2237 = vunpack.c.h.b16 %v1751
    %v2238 = vunpack.c.l.b16 %v1752
    %v2239 = vunpack.c.l.b16 %v1753
    %v2240 = vunpack.c.h.b16 %v1753
    %v2241 = vunpack.c.l.b16 %v1754
    %v2242 = vunpack.c.h.b16 %v1754
    %v2243 = vunpack.c.l.b16 %v1755
    %v2244 = vunpack.c.l.b16 %v1756
    %v2245 = vunpack.c.h.b16 %v1756
    %v2246 = vunpack.c.l.b16 %v1757
    %v2247 = vunpack.c.h.b16 %v1757
    %v2248 = vunpack.c.l.b16 %v1758
    %v2249 = vunpack.c.l.b16 %v1759
    %v2250 = vunpack.c.h.b16 %v1759
    %v2251 = vunpack.c.l.b16 %v1760
    %v2252 = vunpack.c.h.b16 %v1760
    %v2253 = vunpack.c.l.b16 %v1761
    %v2254 = vunpack.c.l.b16 %v1762
    %v2255 = vunpack.c.h.b16 %v1762
    %v2256 = vunpack.c.l.b16 %v1763
    %v2257 = vunpack.c.h.b16 %v1763
    %v2258 = vunpack.c.l.b16 %v1764
    %v2259 = vunpack.c.l.b16 %v1765
    %v2260 = vunpack.c.h.b16 %v1765
    %v2261 = vunpack.c.l.b16 %v1766
    %v2262 = vunpack.c.h.b16 %v1766
    %v2263 = vunpack.c.l.b16 %v1767
    %v2264 = vunpack.c.l.b16 %v1768
    %v2265 = vunpack.c.h.b16 %v1768
    %v2266 = vunpack.c.l.b16 %v1769
    %v2267 = vunpack.c.h.b16 %v1769
    %v2268 = vunpack.c.l.b16 %v1770
    %v2269 = vunpack.c.l.b16 %v1771
    %v2270 = vunpack.c.h.b16 %v1771
    %v2271 = vunpack.c.l.b16 %v1772
    %v2272 = vunpack.c.h.b16 %v1772
    %v2273 = vunpack.c.l.b16 %v1773
    %v2274 = vunpack.c.l.b16 %v1774
    %v2275 = vunpack.c.h.b16 %v1774
    %v2276 = vunpack.c.l.b16 %v1775
    %v2277 = vunpack.c.h.b16 %v1775
    %v2278 = vunpack.c.l.b16 %v1776
    %v2279 = vunpack.c.l.b16 %v1777
    %v2280 = vunpack.c.h.b16 %v1777
    %v2281 = vunpack.c.l.b16 %v1778
    %v2282 = vunpack.c.h.b16 %v1778
    %v2283 = vunpack.c.l.b16 %v1779
    %v2284 = vunpack.c.l.b16 %v1780
    %v2285 = vunpack.c.h.b16 %v1780
    %v2286 = vunpack.c.l.b16 %v1781
    %v2287 = vunpack.c.h.b16 %v1781
    %v2288 = vunpack.c.l.b16 %v1782
    %v2289 = vunpack.c.l.b16 %v1783
    %v2290 = vunpack.c.h.b16 %v1783
    %v2291 = vunpack.c.l.b16 %v1784
    %v2292 = vunpack.c.h.b16 %v1784
    %v2293 = vunpack.c.l.b16 %v1785
    %v2294 = vunpack.c.l.b16 %v1786
    %v2295 = vunpack.c.h.b16 %v1786
    %v2296 = vunpack.c.l.b16 %v1787
    %v2297 = vunpack.c.h.b16 %v1787
    %v2298 = vunpack.c.l.b16 %v1788
    %v2299 = vunpack.c.l.b16 %v1789
    %v2300 = vunpack.c.h.b16 %v1789
    %v2301 = vunpack.c.l.b16 %v1790
    %v2302 = vunpack.c.h.b16 %v1790
    %v2303 = vunpack.c.l.b16 %v1791
    %v2304 = vunpack.c.l.b16 %v1792
    %v2305 = vunpack.c.h.b16 %v1792
    %v2306 = vunpack.c.l.b16 %v1793
    %v2307 = vunpack.c.h.b16 %v1793
    %v2308 = vunpack.c.l.b16 %v1794
    %v2309 = vunpack.c.l.b16 %v1795
    %v2310 = vunpack.c.h.b16 %v1795
    %v2311 = vunpack.c.l.b16 %v1796
    %v2312 = vunpack.c.h.b16 %v1796
    %v2313 = vunpack.c.l.b16 %v1797
    %v2314 = vunpack.c.l.b16 %v1798
    %v2315 = vunpack.c.h.b16 %v1798
    %v2316 = vunpack.c.l.b16 %v1799
    %v2317 = vunpack.c.h.b16 %v1799
    %v2318 = vunpack.c.l.b16 %v1800
    %v2319 = vunpack.c.l.b16 %v1801
    %v2320 = vunpack.c.h.b16 %v1801
    %v2321 = vunpack.c.l.b16 %v1802
    %v2322 = vunpack.c.h.b16 %v1802
    %v2323 = vunpack.c.l.b16 %v1803
    %v2324 = vunpack.c.l.b16 %v1804
    %v2325 = vunpack.c.h.b16 %v1804
    %v2326 = vunpack.c.l.b16 %v1805
    %v2327 = vunpack.c.h.b16 %v1805
    %v2328 = vunpack.c.l.b16 %v1806
    %v2329 = vunpack.c.l.b16 %v1807
    %v2330 = vunpack.c.h.b16 %v1807
    %v2331 = vunpack.c.l.b16 %v1808
    %v2332 = vunpack.c.h.b16 %v1808
    %v2333 = vunpack.c.l.b16 %v1809
    %v2334 = vunpack.c.l.b16 %v1810
    %v2335 = vunpack.c.h.b16 %v1810
    %v2336 = vunpack.c.l.b16 %v1811
    %v2337 = vunpack.c.h.b16 %v1811
    %v2338 = vunpack.c.l.b16 %v1812
    %v2339 = vunpack.c.l.b16 %v1813
    %v2340 = vunpack.c.h.b16 %v1813
    %v2341 = vunpack.c.l.b16 %v1814
    %v2342 = vunpack.c.h.b16 %v1814
    %v2343 = vunpack.c.l.b16 %v1815
    %v2344 = vunpack.c.l.b16 %v1816
    %v2345 = vunpack.c.h.b16 %v1816
    %v2346 = vunpack.c.l.b16 %v1817
    %v2347 = vunpack.c.h.b16 %v1817
    %v2348 = vunpack.c.l.b16 %v1818
    %v2349 = vunpack.c.l.b16 %v1819
    %v2350 = vunpack.c.h.b16 %v1819
    %v2351 = vunpack.c.l.b16 %v1820
    %v2352 = vunpack.c.h.b16 %v1820
    %v2353 = vunpack.c.l.b16 %v1821
    %v2354 = vunpack.c.l.b16 %v1822
    %v2355 = vunpack.c.h.b16 %v1822
    %v2356 = vunpack.c.l.b16 %v1823
    %v2357 = vunpack.c.h.b16 %v1823
    %v2358 = vunpack.c.l.b16 %v1824
    %v2359 = vunpack.c.l.b16 %v1825
    %v2360 = vunpack.c.h.b16 %v1825
    %v2361 = vunpack.c.l.b16 %v1826
    %v2362 = vunpack.c.h.b16 %v1826
    %v2363 = vunpack.c.l.b16 %v1827
    %v2364 = vunpack.c.l.b16 %v1828
    %v2365 = vunpack.c.h.b16 %v1828
    %v2366 = vunpack.c.l.b16 %v1829
    %v2367 = vunpack.c.h.b16 %v1829
    %v2368 = vunpack.c.l.b16 %v1830
    %v2369 = vunpack.c.l.b16 %v1831
    %v2370 = vunpack.c.h.b16 %v1831
    %v2371 = vunpack.c.l.b16 %v1832
    %v2372 = vunpack.c.h.b16 %v1832
    %v2373 = vunpack.c.l.b16 %v1833
    %v2374 = vunpack.c.l.b16 %v1834
    %v2375 = vunpack.c.h.b16 %v1834
    %v2376 = vunpack.c.l.b16 %v1835
    %v2377 = vunpack.c.h.b16 %v1835
    %v2378 = vunpack.c.l.b16 %v1836
    %v2379 = vunpack.c.l.b16 %v1837
    %v2380 = vunpack.c.h.b16 %v1837
    %v2381 = vunpack.c.l.b16 %v1838
    %v2382 = vunpack.c.h.b16 %v1838
    %v2383 = vunpack.c.l.b16 %v1839
    %v2384 = vunpack.c.l.b16 %v1840
    %v2385 = vunpack.c.h.b16 %v1840
    %v2386 = vunpack.c.l.b16 %v1841
    %v2387 = vunpack.c.h.b16 %v1841
    %v2388 = vunpack.c.l.b16 %v1842
    %v2389 = vunpack.c.l.b16 %v1843
    %v2390 = vunpack.c.h.b16 %v1843
    %v2391 = vunpack.c.l.b16 %v1844
    %v2392 = vunpack.c.h.b16 %v1844
    %v2393 = vunpack.c.l.b16 %v1845
    %v2394 = vunpack.c.l.b16 %v1846
    %v2395 = vunpack.c.h.b16 %v1846
    %v2396 = vunpack.c.l.b16 %v1847
    %v2397 = vunpack.c.h.b16 %v1847
    %v2398 = vunpack.c.l.b16 %v1848
    %v2399 = vunpack.c.l.b16 %v1849
    %v2400 = vunpack.c.h.b16 %v1849
    %v2401 = vunpack.c.l.b16 %v1850
    %v2402 = vunpack.c.h.b16 %v1850
    %v2403 = vunpack.c.l.b16 %v1851
    %v2404 = vunpack.c.l.b16 %v1852
    %v2405 = vunpack.c.h.b16 %v1852
    %v2406 = vunpack.c.l.b16 %v1853
    %v2407 = vunpack.c.h.b16 %v1853
    %v2408 = vunpack.c.l.b16 %v1854
    %v2409 = vunpack.c.l.b16 %v1855
    %v2410 = vunpack.c.h.b16 %v1855
    %v2411 = vunpack.c.l.b16 %v1856
    %v2412 = vunpack.c.h.b16 %v1856
    %v2413 = vunpack.c.l.b16 %v1857
    %v2414 = vunpack.c.l.b16 %v1858
    %v2415 = vunpack.c.h.b16 %v1858
    %v2416 = vunpack.c.l.b16 %v1859
    %v2417 = vunpack.c.h.b16 %v1859
    %v2418 = vunpack.c.l.b16 %v1860
    %v2419 = vunpack.c.l.b16 %v1861
    %v2420 = vunpack.c.h.b16 %v1861
    %v2421 = vunpack.c.l.b16 %v1862
    %v2422 = vunpack.c.h.b16 %v1862
    %v2423 = vunpack.c.l.b16 %v1863
    %v2424 = vunpack.c.l.b16 %v1864
    %v2425 = vunpack.c.h.b16 %v1864
    %v2426 = vunpack.c.l.b16 %v1865
    %v2427 = vunpack.c.h.b16 %v1865
    %v2428 = vunpack.c.l.b16 %v1866
    %v2429 = vunpack.c.l.b16 %v1867
    %v2430 = vunpack.c.h.b16 %v1867
    %v2431 = vunpack.c.l.b16 %v1868
    %v2432 = vunpack.c.h.b16 %v1868
    %v2433 = vunpack.c.l.b16 %v1869
    %v2434 = vunpack.c.l.b16 %v1870
    %v2435 = vunpack.c.h.b16 %v1870
    %v2436 = vunpack.c.l.b16 %v1871
    %v2437 = vunpack.c.h.b16 %v1871
    %v2438 = vunpack.c.l.b16 %v1872
    %v2439 = vunpack.c.l.b16 %v1873
    %v2440 = vunpack.c.h.b16 %v1873
    %v2441 = vunpack.c.l.b16 %v1874
    %v2442 = vunpack.c.h.b16 %v1874
    %v2443 = vunpack.c.l.b16 %v1875
    %v2444 = vunpack.c.l.b16 %v1876
    %v2445 = vunpack.c.h.b16 %v1876
    %v2446 = vunpack.c.l.b16 %v1877
    %v2447 = vunpack.c.h.b16 %v1877
    %v2448 = vunpack.c.l.b16 %v1878
    %v2449 = vunpack.c.l.b16 %v1879
    %v2450 = vunpack.c.h.b16 %v1879
    %v2451 = vunpack.c.l.b16 %v1880
    %v2452 = vunpack.c.h.b16 %v1880
    %v2453 = vunpack.c.l.b16 %v1881
    %v2454 = vunpack.c.l.b16 %v1882
    %v2455 = vunpack.c.h.b16 %v1882
    %v2456 = vunpack.c.l.b16 %v1883
    %v2457 = vunpack.c.h.b16 %v1883
    %v2458 = vunpack.c.l.b16 %v1884
    %v2459 = vunpack.c.l.b16 %v1885
    %v2460 = vunpack.c.h.b16 %v1885
    %v2461 = vunpack.c.l.b16 %v1886
    %v2462 = vunpack.c.h.b16 %v1886
    %v2463 = vunpack.c.l.b16 %v1887
    %v2464 = vunpack.c.l.b16 %v1888
    %v2465 = vunpack.c.h.b16 %v1888
    %v2466 = vunpack.c.l.b16 %v1889
    %v2467 = vunpack.c.h.b16 %v1889
    %v2468 = vunpack.c.l.b16 %v1890
    %v2469 = vunpack.c.l.b16 %v1891
    %v2470 = vunpack.c.h.b16 %v1891
    %v2471 = vunpack.c.l.b16 %v1892
    %v2472 = vunpack.c.h.b16 %v1892
    %v2473 = vunpack.c.l.b16 %v1893
    %v2474 = vunpack.c.l.b16 %v1894
    %v2475 = vunpack.c.h.b16 %v1894
    %v2476 = vunpack.c.l.b16 %v1895
    %v2477 = vunpack.c.h.b16 %v1895
    %v2478 = vunpack.c.l.b16 %v1896
    %v2479 = vunpack.c.l.b16 %v1897
    %v2480 = vunpack.c.h.b16 %v1897
    %v2481 = vunpack.c.l.b16 %v1898
    %v2482 = vunpack.c.h.b16 %v1898
    %v2483 = vunpack.c.l.b16 %v1899
    %v2484 = vunpack.c.l.b16 %v1900
    %v2485 = vunpack.c.h.b16 %v1900
    %v2486 = vunpack.c.l.b16 %v1901
    %v2487 = vunpack.c.h.b16 %v1901
    %v2488 = vunpack.c.l.b16 %v1902
    %v2489 = vunpack.c.l.b16 %v1903
    %v2490 = vunpack.c.h.b16 %v1903
    %v2491 = vunpack.c.l.b16 %v1904
    %v2492 = vunpack.c.h.b16 %v1904
    %v2493 = vunpack.c.l.b16 %v1905
    %v2494 = vunpack.c.l.b16 %v1906
    %v2495 = vunpack.c.h.b16 %v1906
    %v2496 = vunpack.c.l.b16 %v1907
    %v2497 = vunpack.c.h.b16 %v1907
    %v2498 = vunpack.c.l.b16 %v1908
    %v2499 = vunpack.c.l.b16 %v1909
    %v2500 = vunpack.c.h.b16 %v1909
    %v2501 = vunpack.c.l.b16 %v1910
    %v2502 = vunpack.c.h.b16 %v1910
    %v2503 = vunpack.c.l.b16 %v1911
    %v2504 = vunpack.c.l.b16 %v1912
    %v2505 = vunpack.c.h.b16 %v1912
    %v2506 = vunpack.c.l.b16 %v1913
    %v2507 = vunpack.c.h.b16 %v1913
    %v2508 = vunpack.c.l.b16 %v1914
    %v2509 = vunpack.c.l.b16 %v1915
    %v2510 = vunpack.c.h.b16 %v1915
    %v2511 = vunpack.c.l.b16 %v1916
    %v2512 = vunpack.c.h.b16 %v1916
    %v2513 = vunpack.c.l.b16 %v1917
    %v2514 = vunpack.c.l.b16 %v1918
    %v2515 = vunpack.c.h.b16 %v1918
    %v2516 = vunpack.c.l.b16 %v1919
    %v2517 = vunpack.c.h.b16 %v1919
    %v2518 = vunpack.c.l.b16 %v1920
    %v2519 = vunpack.c.l.b16 %v1921
    %v2520 = vunpack.c.h.b16 %v1921
    %v2521 = vunpack.c.l.b16 %v1922
    %v2522 = vunpack.c.h.b16 %v1922
    %v2523 = vunpack.c.l.b16 %v1923
    %v2524 = vunpack.c.l.b16 %v1924
    %v2525 = vunpack.c.h.b16 %v1924
    %v2526 = vunpack.c.l.b16 %v1925
    %v2527 = vunpack.c.h.b16 %v1925
    %v2528 = vunpack.c.l.b16 %v1926
    %v2529 = vunpack.c.l.b16 %v1927
    %v2530 = vunpack.c.h.b16 %v1927
    %v2531 = vunpack.c.l.b16 %v1928
    %v2532 = vunpack.c.h.b16 %v1928
    %v2533 = vunpack.c.l.b16 %v1929
    %v2534 = vunpack.c.l.b16 %v1930
    %v2535 = vunpack.c.h.b16 %v1930
    %v2536 = vunpack.c.l.b16 %v1931
    %v2537 = vunpack.c.h.b16 %v1931
    %v2538 = vunpack.c.l.b16 %v1932
    %v2539 = vunpack.c.l.b16 %v1933
    %v2540 = vunpack.c.h.b16 %v1933
    %v2541 = vunpack.c.l.b16 %v1934
    %v2542 = vunpack.c.h.b16 %v1934
    %v2543 = vunpack.c.l.b16 %v1935
    %v2544 = vunpack.c.l.b16 %v1936
    %v2545 = vunpack.c.h.b16 %v1936
    %v2546 = vunpack.c.l.b16 %v1937
    %v2547 = vunpack.c.h.b16 %v1937
    %v2548 = vunpack.c.l.b16 %v1938
    %v2549 = vunpack.c.l.b16 %v1939
    %v2550 = vunpack.c.h.b16 %v1939
    %v2551 = vunpack.c.l.b16 %v1940
    %v2552 = vunpack.c.h.b16 %v1940
    %v2553 = vunpack.c.l.b16 %v1941
    %v2554 = vunpack.c.l.b16 %v1942
    %v2555 = vunpack.c.h.b16 %v1942
    %v2556 = vunpack.c.l.b16 %v1943
    %v2557 = vunpack.c.h.b16 %v1943
    %v2558 = vunpack.c.l.b16 %v1944
    %v2559 = vunpack.c.l.b16 %v1945
    %v2560 = vunpack.c.h.b16 %v1945
    %v2561 = vunpack.c.l.b16 %v1946
    %v2562 = vunpack.c.h.b16 %v1946
    %v2563 = vunpack.c.l.b16 %v1947
    %v2564 = vunpack.c.l.b16 %v1948
    %v2565 = vunpack.c.h.b16 %v1948
    %v2566 = vunpack.c.l.b16 %v1949
    %v2567 = vunpack.c.h.b16 %v1949
    %v2568 = vunpack.c.l.b16 %v1950
    %v2569 = vunpack.c.l.b16 %v1951
    %v2570 = vunpack.c.h.b16 %v1951
    %v2571 = vunpack.c.l.b16 %v1952
    %v2572 = vunpack.c.h.b16 %v1952
    %v2573 = vunpack.c.l.b16 %v1953
    %v2574 = vunpack.c.l.b16 %v1954
    %v2575 = vunpack.c.h.b16 %v1954
    %v2576 = vunpack.c.l.b16 %v1955
    %v2577 = vunpack.c.h.b16 %v1955
    %v2578 = vunpack.c.l.b16 %v1956
    %v2579 = vunpack.c.l.b16 %v1957
    %v2580 = vunpack.c.h.b16 %v1957
    %v2581 = vunpack.c.l.b16 %v1958
    %v2582 = vunpack.c.h.b16 %v1958
    %v2583 = vunpack.c.l.b16 %v1959
    %v2584 = vunpack.c.l.b16 %v1960
    %v2585 = vunpack.c.h.b16 %v1960
    %v2586 = vunpack.c.l.b16 %v1961
    %v2587 = vunpack.c.h.b16 %v1961
    %v2588 = vunpack.c.l.b16 %v1962
    %v2589 = vunpack.c.l.b16 %v1963
    %v2590 = vunpack.c.h.b16 %v1963
    %v2591 = vunpack.c.l.b16 %v1964
    %v2592 = vunpack.c.h.b16 %v1964
    %v2593 = vunpack.c.l.b16 %v1965
    %v2594 = vunpack.c.l.b16 %v1966
    %v2595 = vunpack.c.h.b16 %v1966
    %v2596 = vunpack.c.l.b16 %v1967
    %v2597 = vunpack.c.h.b16 %v1967
    %v2598 = vunpack.c.l.b16 %v1968
    %v2599 = vunpack.c.l.b16 %v1969
    %v2600 = vunpack.c.h.b16 %v1969
    %v2601 = vunpack.c.l.b16 %v1970
    %v2602 = vunpack.c.h.b16 %v1970
    %v2603 = vunpack.c.l.b16 %v1971
    %v2604 = vunpack.c.l.b16 %v1972
    %v2605 = vunpack.c.h.b16 %v1972
    %v2606 = vunpack.c.l.b16 %v1973
    %v2607 = vunpack.c.h.b16 %v1973
    %v2608 = vunpack.c.l.b16 %v1974
    %v2609 = vunpack.c.l.b16 %v1975
    %v2610 = vunpack.c.h.b16 %v1975
    %v2611 = vunpack.c.l.b16 %v1976
    %v2612 = vunpack.c.h.b16 %v1976
    %v2613 = vunpack.c.l.b16 %v1977
    %v2614 = vunpack.c.l.b16 %v1978
    %v2615 = vunpack.c.h.b16 %v1978
    %v2616 = vunpack.c.l.b16 %v1979
    %v2617 = vunpack.c.h.b16 %v1979
    %v2618 = vunpack.c.l.b16 %v1980
    %v2619 = vunpack.c.l.b16 %v1981
    %v2620 = vunpack.c.h.b16 %v1981
    %v2621 = vunpack.c.l.b16 %v1982
    %v2622 = vunpack.c.h.b16 %v1982
    %v2623 = vunpack.c.l.b16 %v1983
    %v2624 = vpack.c.b16 %v2229, %v2224
    %v2625 = vpack.c.b16 %v2230, %v2225
    %v2626 = vpack.c.b16 %v2231, %v2226
    %v2627 = vpack.c.b16 %v2232, %v2227
    %v2628 = vpack.c.b16 %v2233, %v2228
    %v2629 = vpack.c.b16 %v2239, %v2234
    %v2630 = vpack.c.b16 %v2240, %v2235
    %v2631 = vpack.c.b16 %v2241, %v2236
    %v2632 = vpack.c.b16 %v2242, %v2237
    %v2633 = vpack.c.b16 %v2243, %v2238
    %v2634 = vpack.c.b16 %v2249, %v2244
    %v2635 = vpack.c.b16 %v2250, %v2245
    %v2636 = vpack.c.b16 %v2251, %v2246
    %v2637 = vpack.c.b16 %v2252, %v2247
    %v2638 = vpack.c.b16 %v2253, %v2248
    %v2639 = vpack.c.b16 %v2259, %v2254
    %v2640 = vpack.c.b16 %v2260, %v2255
    %v2641 = vpack.c.b16 %v2261, %v2256
    %v2642 = vpack.c.b16 %v2262, %v2257
    %v2643 = vpack.c.b16 %v2263, %v2258
    %v2644 = vpack.c.b16 %v2269, %v2264
    %v2645 = vpack.c.b16 %v2270, %v2265
    %v2646 = vpack.c.b16 %v2271, %v2266
    %v2647 = vpack.c.b16 %v2272, %v2267
    %v2648 = vpack.c.b16 %v2273, %v2268
    %v2649 = vpack.c.b16 %v2279, %v2274
    %v2650 = vpack.c.b16 %v2280, %v2275
    %v2651 = vpack.c.b16 %v2281, %v2276
    %v2652 = vpack.c.b16 %v2282, %v2277
    %v2653 = vpack.c.b16 %v2283, %v2278
    %v2654 = vpack.c.b16 %v2289, %v2284
    %v2655 = vpack.c.b16 %v2290, %v2285
    %v2656 = vpack.c.b16 %v2291, %v2286
    %v2657 = vpack.c.b16 %v2292, %v2287
    %v2658 = vpack.c.b16 %v2293, %v2288
    %v2659 = vpack.c.b16 %v2299, %v2294
    %v2660 = vpack.c.b16 %v2300, %v2295
    %v2661 = vpack.c.b16 %v2301, %v2296
    %v2662 = vpack.c.b16 %v2302, %v2297
    %v2663 = vpack.c.b16 %v2303, %v2298
    %v2664 = vpack.c.b16 %v2309, %v2304
    %v2665 = vpack.c.b16 %v2310, %v2305
    %v2666 = vpack.c.b16 %v2311, %v2306
    %v2667 = vpack.c.b16 %v2312, %v2307
    %v2668 = vpack.c.b16 %v2313, %v2308
    %v2669 = vpack.c.b16 %v2319, %v2314
    %v2670 = vpack.c.b16 %v2320, %v2315
    %v2671 = vpack.c.b16 %v2321, %v2316
    %v2672 = vpack.c.b16 %v2322, %v2317
    %v2673 = vpack.c.b16 %v2323, %v2318
    %v2674 = vpack.c.b16 %v2329, %v2324
    %v2675 = vpack.c.b16 %v2330, %v2325
    %v2676 = vpack.c.b16 %v2331, %v2326
    %v2677 = vpack.c.b16 %v2332, %v2327
    %v2678 = vpack.c.b16 %v2333, %v2328
    %v2679 = vpack.c.b16 %v2339, %v2334
    %v2680 = vpack.c.b16 %v2340, %v2335
    %v2681 = vpack.c.b16 %v2341, %v2336
    %v2682 = vpack.c.b16 %v2342, %v2337
    %v2683 = vpack.c.b16 %v2343, %v2338
    %v2684 = vpack.c.b16 %v2349, %v2344
    %v2685 = vpack.c.b16 %v2350, %v2345
    %v2686 = vpack.c.b16 %v2351, %v2346
    %v2687 = vpack.c.b16 %v2352, %v2347
    %v2688 = vpack.c.b16 %v2353, %v2348
    %v2689 = vpack.c.b16 %v2359, %v2354
    %v2690 = vpack.c.b16 %v2360, %v2355
    %v2691 = vpack.c.b16 %v2361, %v2356
    %v2692 = vpack.c.b16 %v2362, %v2357
    %v2693 = vpack.c.b16 %v2363, %v2358
    %v2694 = vpack.c.b16 %v2369, %v2364
    %v2695 = vpack.c.b16 %v2370, %v2365
    %v2696 = vpack.c.b16 %v2371, %v2366
    %v2697 = vpack.c.b16 %v2372, %v2367
    %v2698 = vpack.c.b16 %v2373, %v2368
    %v2699 = vpack.c.b16 %v2379, %v2374
    %v2700 = vpack.c.b16 %v2380, %v2375
    %v2701 = vpack.c.b16 %v2381, %v2376
    %v2702 = vpack.c.b16 %v2382, %v2377
    %v2703 = vpack.c.b16 %v2383, %v2378
    %v2704 = vpack.c.b16 %v2389, %v2384
    %v2705 = vpack.c.b16 %v2390, %v2385
    %v2706 = vpack.c.b16 %v2391, %v2386
    %v2707 = vpack.c.b16 %v2392, %v2387
    %v2708 = vpack.c.b16 %v2393, %v2388
    %v2709 = vpack.c.b16 %v2399, %v2394
    %v2710 = vpack.c.b16 %v2400, %v2395
    %v2711 = vpack.c.b16 %v2401, %v2396
    %v2712 = vpack.c.b16 %v2402, %v2397
    %v2713 = vpack.c.b16 %v2403, %v2398
    %v2714 = vpack.c.b16 %v2409, %v2404
    %v2715 = vpack.c.b16 %v2410, %v2405
    %v2716 = vpack.c.b16 %v2411, %v2406
    %v2717 = vpack.c.b16 %v2412, %v2407
    %v2718 = vpack.c.b16 %v2413, %v2408
    %v2719 = vpack.c.b16 %v2419, %v2414
    %v2720 = vpack.c.b16 %v2420, %v2415
    %v2721 = vpack.c.b16 %v2421, %v2416
    %v2722 = vpack.c.b16 %v2422, %v2417
    %v2723 = vpack.c.b16 %v2423, %v2418
    %v2724 = vpack.c.b16 %v2429, %v2424
    %v2725 = vpack.c.b16 %v2430, %v2425
    %v2726 = vpack.c.b16 %v2431, %v2426
    %v2727 = vpack.c.b16 %v2432, %v2427
    %v2728 = vpack.c.b16 %v2433, %v2428
    %v2729 = vpack.c.b16 %v2439, %v2434
    %v2730 = vpack.c.b16 %v2440, %v2435
    %v2731 = vpack.c.b16 %v2441, %v2436
    %v2732 = vpack.c.b16 %v2442, %v2437
    %v2733 = vpack.c.b16 %v2443, %v2438
    %v2734 = vpack.c.b16 %v2449, %v2444
    %v2735 = vpack.c.b16 %v2450, %v2445
    %v2736 = vpack.c.b16 %v2451, %v2446
    %v2737 = vpack.c.b16 %v2452, %v2447
    %v2738 = vpack.c.b16 %v2453, %v2448
    %v2739 = vpack.c.b16 %v2459, %v2454
    %v2740 = vpack.c.b16 %v2460, %v2455
    %v2741 = vpack.c.b16 %v2461, %v2456
    %v2742 = vpack.c.b16 %v2462, %v2457
    %v2743 = vpack.c.b16 %v2463, %v2458
    %v2744 = vpack.c.b16 %v2469, %v2464
    %v2745 = vpack.c.b16 %v2470, %v2465
    %v2746 = vpack.c.b16 %v2471, %v2466
    %v2747 = vpack.c.b16 %v2472, %v2467
    %v2748 = vpack.c.b16 %v2473, %v2468
    %v2749 = vpack.c.b16 %v2479, %v2474
    %v2750 = vpack.c.b16 %v2480, %v2475
    %v2751 = vpack.c.b16 %v2481, %v2476
    %v2752 = vpack.c.b16 %v2482, %v2477
    %v2753 = vpack.c.b16 %v2483, %v2478
    %v2754 = vpack.c.b16 %v2489, %v2484
    %v2755 = vpack.c.b16 %v2490, %v2485
    %v2756 = vpack.c.b16 %v2491, %v2486
    %v2757 = vpack.c.b16 %v2492, %v2487
    %v2758 = vpack.c.b16 %v2493, %v2488
    %v2759 = vpack.c.b16 %v2499, %v2494
    %v2760 = vpack.c.b16 %v2500, %v2495
    %v2761 = vpack.c.b16 %v2501, %v2496
    %v2762 = vpack.c.b16 %v2502, %v2497
    %v2763 = vpack.c.b16 %v2503, %v2498
    %v2764 = vpack.c.b16 %v2509, %v2504
    %v2765 = vpack.c.b16 %v2510, %v2505
    %v2766 = vpack.c.b16 %v2511, %v2506
    %v2767 = vpack.c.b16 %v2512, %v2507
    %v2768 = vpack.c.b16 %v2513, %v2508
    %v2769 = vpack.c.b16 %v2519, %v2514
    %v2770 = vpack.c.b16 %v2520, %v2515
    %v2771 = vpack.c.b16 %v2521, %v2516
    %v2772 = vpack.c.b16 %v2522, %v2517
    %v2773 = vpack.c.b16 %v2523, %v2518
    %v2774 = vpack.c.b16 %v2529, %v2524
    %v2775 = vpack.c.b16 %v2530, %v2525
    %v2776 = vpack.c.b16 %v2531, %v2526
    %v2777 = vpack.c.b16 %v2532, %v2527
    %v2778 = vpack.c.b16 %v2533, %v2528
    %v2779 = vpack.c.b16 %v2539, %v2534
    %v2780 = vpack.c.b16 %v2540, %v2535
    %v2781 = vpack.c.b16 %v2541, %v2536
    %v2782 = vpack.c.b16 %v2542, %v2537
    %v2783 = vpack.c.b16 %v2543, %v2538
    %v2784 = vpack.c.b16 %v2549, %v2544
    %v2785 = vpack.c.b16 %v2550, %v2545
    %v2786 = vpack.c.b16 %v2551, %v2546
    %v2787 = vpack.c.b16 %v2552, %v2547
    %v2788 = vpack.c.b16 %v2553, %v2548
    %v2789 = vpack.c.b16 %v2559, %v2554
    %v2790 = vpack.c.b16 %v2560, %v2555
    %v2791 = vpack.c.b16 %v2561, %v2556
    %v2792 = vpack.c.b16 %v2562, %v2557
    %v2793 = vpack.c.b16 %v2563, %v2558
    %v2794 = vpack.c.b16 %v2569, %v2564
    %v2795 = vpack.c.b16 %v2570, %v2565
    %v2796 = vpack.c.b16 %v2571, %v2566
    %v2797 = vpack.c.b16 %v2572, %v2567
    %v2798 = vpack.c.b16 %v2573, %v2568
    %v2799 = vpack.c.b16 %v2579, %v2574
    %v2800 = vpack.c.b16 %v2580, %v2575
    %v2801 = vpack.c.b16 %v2581, %v2576
    %v2802 = vpack.c.b16 %v2582, %v2577
    %v2803 = vpack.c.b16 %v2583, %v2578
    %v2804 = vpack.c.b16 %v2589, %v2584
    %v2805 = vpack.c.b16 %v2590, %v2585
    %v2806 = vpack.c.b16 %v2591, %v2586
    %v2807 = vpack.c.b16 %v2592, %v2587
    %v2808 = vpack.c.b16 %v2593, %v2588
    %v2809 = vpack.c.b16 %v2599, %v2594
    %v2810 = vpack.c.b16 %v2600, %v2595
    %v2811 = vpack.c.b16 %v2601, %v2596
    %v2812 = vpack.c.b16 %v2602, %v2597
    %v2813 = vpack.c.b16 %v2603, %v2598
    %v2814 = vpack.c.b16 %v2609, %v2604
    %v2815 = vpack.c.b16 %v2610, %v2605
    %v2816 = vpack.c.b16 %v2611, %v2606
    %v2817 = vpack.c.b16 %v2612, %v2607
    %v2818 = vpack.c.b16 %v2613, %v2608
    %v2819 = vpack.c.b16 %v2619, %v2614
    %v2820 = vpack.c.b16 %v2620, %v2615
    %v2821 = vpack.c.b16 %v2621, %v2616
    %v2822 = vpack.c.b16 %v2622, %v2617
    %v2823 = vpack.c.b16 %v2623, %v2618
    %3024 = vmatprep.subr.bf16.mxu0 %v2660
    %3025 = vmatpush1.bf16.msra.mxu0 %v2659
    %3026 = vmatprep.subr.bf16.mxu0 %v2655
    %3027 = vmatpush1.bf16.msra.mxu0 %v2654
    %3028 = vmatprep.subr.bf16.mxu0 %v2650
    %3029 = vmatpush1.bf16.msra.mxu0 %v2649
    %3030 = vmatprep.subr.bf16.mxu0 %v2645
    %3031 = vmatpush1.bf16.msra.mxu0 %v2644
    %3032 = vmatprep.subr.bf16.mxu0 %v2640
    %3033 = vmatpush1.bf16.msra.mxu0 %v2639
    %3034 = vmatprep.subr.bf16.mxu0 %v2635
    %3035 = vmatpush1.bf16.msra.mxu0 %v2634
    %3036 = vmatprep.subr.bf16.mxu0 %v2630
    %3037 = vmatpush1.bf16.msra.mxu0 %v2629
    %3038 = vmatprep.subr.bf16.mxu0 %v2625
    %3039 = vmatpush1.bf16.msra.mxu0 %v2624
    %3040 = vmatprep.subr.bf16.mxu0 %v2700
    %3041 = vmatpush2.bf16.msra.mxu0 %v2699
    %3042 = vmatprep.subr.bf16.mxu0 %v2695
    %3043 = vmatpush2.bf16.msra.mxu0 %v2694
    %3044 = vmatprep.subr.bf16.mxu0 %v2690
    %3045 = vmatpush2.bf16.msra.mxu0 %v2689
    %3046 = vmatprep.subr.bf16.mxu0 %v2685
    %3047 = vmatpush2.bf16.msra.mxu0 %v2684
    %3048 = vmatprep.subr.bf16.mxu0 %v2680
    %3049 = vmatpush2.bf16.msra.mxu0 %v2679
    %3050 = vmatprep.subr.bf16.mxu0 %v2675
    %3051 = vmatpush2.bf16.msra.mxu0 %v2674
    %3052 = vmatprep.subr.bf16.mxu0 %v2670
    %3053 = vmatpush2.bf16.msra.mxu0 %v2669
    %3054 = vmatprep.subr.bf16.mxu0 %v2665
    %3055 = vmatpush2.bf16.msra.mxu0 %v2664
    %3056 = vmatprep.mubr.bf16.mxu0 %v324
    %3057 = vmatmul.mubr.bf16.gmra.mxu0 %v323
    %v3058 = vpop.f32.mrf.mxu0
    %v3059 = vadd.f32 0.0, %v3058
    %v3060 = vpop.f32.mrf.mxu0
    %v3061 = vadd.f32 0.0, %v3060
    %v3062 = vpop.f32.mrf.mxu0
    %v3063 = vpop.f32.mrf.mxu0
    %3064 = vdwg.mxu0
    %3065 = vmatprep.subr.bf16.mxu0 %v2740
    %3066 = vmatpush1.bf16.msra.mxu0 %v2739
    %3067 = vmatprep.subr.bf16.mxu0 %v2735
    %3068 = vmatpush1.bf16.msra.mxu0 %v2734
    %3069 = vmatprep.subr.bf16.mxu0 %v2730
    %3070 = vmatpush1.bf16.msra.mxu0 %v2729
    %3071 = vmatprep.subr.bf16.mxu0 %v2725
    %3072 = vmatpush1.bf16.msra.mxu0 %v2724
    %3073 = vmatprep.subr.bf16.mxu0 %v2720
    %3074 = vmatpush1.bf16.msra.mxu0 %v2719
    %3075 = vmatprep.subr.bf16.mxu0 %v2715
    %3076 = vmatpush1.bf16.msra.mxu0 %v2714
    %3077 = vmatprep.subr.bf16.mxu0 %v2710
    %3078 = vmatpush1.bf16.msra.mxu0 %v2709
    %3079 = vmatprep.subr.bf16.mxu0 %v2705
    %3080 = vmatpush1.bf16.msra.mxu0 %v2704
    %3081 = vmatprep.subr.bf16.mxu0 %v2780
    %3082 = vmatpush2.bf16.msra.mxu0 %v2779
    %3083 = vmatprep.subr.bf16.mxu0 %v2775
    %3084 = vmatpush2.bf16.msra.mxu0 %v2774
    %3085 = vmatprep.subr.bf16.mxu0 %v2770
    %3086 = vmatpush2.bf16.msra.mxu0 %v2769
    %3087 = vmatprep.subr.bf16.mxu0 %v2765
    %3088 = vmatpush2.bf16.msra.mxu0 %v2764
    %3089 = vmatprep.subr.bf16.mxu0 %v2760
    %3090 = vmatpush2.bf16.msra.mxu0 %v2759
    %3091 = vmatprep.subr.bf16.mxu0 %v2755
    %3092 = vmatpush2.bf16.msra.mxu0 %v2754
    %3093 = vmatprep.subr.bf16.mxu0 %v2750
    %3094 = vmatpush2.bf16.msra.mxu0 %v2749
    %3095 = vmatprep.subr.bf16.mxu0 %v2745
    %3096 = vmatpush2.bf16.msra.mxu0 %v2744
    %3097 = vmatprep.mubr.bf16.mxu0 %v326
    %3098 = vmatmul.mubr.bf16.gmra.mxu0 %v325
    %v3099 = vpop.f32.mrf.mxu0
    %v3100 = vadd.f32 %v3059, %v3099
    %v3101 = vpop.f32.mrf.mxu0
    %v3102 = vadd.f32 %v3061, %v3101
    %v3103 = vpop.f32.mrf.mxu0
    %v3104 = vpop.f32.mrf.mxu0
    %3105 = vdwg.mxu0
    %3106 = vmatprep.subr.bf16.mxu0 %v2820
    %3107 = vmatpush1.bf16.msra.mxu0 %v2819
    %3108 = vmatprep.subr.bf16.mxu0 %v2815
    %3109 = vmatpush1.bf16.msra.mxu0 %v2814
    %3110 = vmatprep.subr.bf16.mxu0 %v2810
    %3111 = vmatpush1.bf16.msra.mxu0 %v2809
    %3112 = vmatprep.subr.bf16.mxu0 %v2805
    %3113 = vmatpush1.bf16.msra.mxu0 %v2804
    %3114 = vmatprep.subr.bf16.mxu0 %v2800
    %3115 = vmatpush1.bf16.msra.mxu0 %v2799
    %3116 = vmatprep.subr.bf16.mxu0 %v2795
    %3117 = vmatpush1.bf16.msra.mxu0 %v2794
    %3118 = vmatprep.subr.bf16.mxu0 %v2790
    %3119 = vmatpush1.bf16.msra.mxu0 %v2789
    %3120 = vmatprep.subr.bf16.mxu0 %v2785
    %3121 = vmatpush1.bf16.msra.mxu0 %v2784
    %3122 = vmatprep.subr.bf16.mxu0 0
    %3123 = vmatpush2.bf16.msra.mxu0 0
    %3124 = vmatprep.subr.bf16.mxu0 0
    %3125 = vmatpush2.bf16.msra.mxu0 0
    %3126 = vmatprep.subr.bf16.mxu0 0
    %3127 = vmatpush2.bf16.msra.mxu0 0
    %3128 = vmatprep.subr.bf16.mxu0 0
    %3129 = vmatpush2.bf16.msra.mxu0 0
    %3130 = vmatprep.subr.bf16.mxu0 0
    %3131 = vmatpush2.bf16.msra.mxu0 0
    %3132 = vmatprep.subr.bf16.mxu0 0
    %3133 = vmatpush2.bf16.msra.mxu0 0
    %3134 = vmatprep.subr.bf16.mxu0 0
    %3135 = vmatpush2.bf16.msra.mxu0 0
    %3136 = vmatprep.subr.bf16.mxu0 0
    %3137 = vmatpush2.bf16.msra.mxu0 0
    %3138 = vmatprep.mubr.bf16.mxu0 0
    %3139 = vmatmul.mubr.bf16.gmra.mxu0 %v327
    %v3140 = vpop.f32.mrf.mxu0
    %v3141 = vadd.f32 %v3100, %v3140
    %v3142 = vpop.f32.mrf.mxu0
    %v3143 = vadd.f32 %v3102, %v3142
    %v3144 = vpop.f32.mrf.mxu0
    %v3145 = vpop.f32.mrf.mxu0
    %3146 = vdwg.mxu0
    %3147 = vmatprep.subr.bf16.mxu0 %v2662
    %3148 = vmatpush1.bf16.msra.mxu0 %v2661
    %3149 = vmatprep.subr.bf16.mxu0 %v2657
    %3150 = vmatpush1.bf16.msra.mxu0 %v2656
    %3151 = vmatprep.subr.bf16.mxu0 %v2652
    %3152 = vmatpush1.bf16.msra.mxu0 %v2651
    %3153 = vmatprep.subr.bf16.mxu0 %v2647
    %3154 = vmatpush1.bf16.msra.mxu0 %v2646
    %3155 = vmatprep.subr.bf16.mxu0 %v2642
    %3156 = vmatpush1.bf16.msra.mxu0 %v2641
    %3157 = vmatprep.subr.bf16.mxu0 %v2637
    %3158 = vmatpush1.bf16.msra.mxu0 %v2636
    %3159 = vmatprep.subr.bf16.mxu0 %v2632
    %3160 = vmatpush1.bf16.msra.mxu0 %v2631
    %3161 = vmatprep.subr.bf16.mxu0 %v2627
    %3162 = vmatpush1.bf16.msra.mxu0 %v2626
    %3163 = vmatprep.subr.bf16.mxu0 %v2702
    %3164 = vmatpush2.bf16.msra.mxu0 %v2701
    %3165 = vmatprep.subr.bf16.mxu0 %v2697
    %3166 = vmatpush2.bf16.msra.mxu0 %v2696
    %3167 = vmatprep.subr.bf16.mxu0 %v2692
    %3168 = vmatpush2.bf16.msra.mxu0 %v2691
    %3169 = vmatprep.subr.bf16.mxu0 %v2687
    %3170 = vmatpush2.bf16.msra.mxu0 %v2686
    %3171 = vmatprep.subr.bf16.mxu0 %v2682
    %3172 = vmatpush2.bf16.msra.mxu0 %v2681
    %3173 = vmatprep.subr.bf16.mxu0 %v2677
    %3174 = vmatpush2.bf16.msra.mxu0 %v2676
    %3175 = vmatprep.subr.bf16.mxu0 %v2672
    %3176 = vmatpush2.bf16.msra.mxu0 %v2671
    %3177 = vmatprep.subr.bf16.mxu0 %v2667
    %3178 = vmatpush2.bf16.msra.mxu0 %v2666
    %3179 = vmatprep.mubr.bf16.mxu0 %v324
    %3180 = vmatmul.mubr.bf16.gmra.mxu0 %v323
    %v3181 = vpop.f32.mrf.mxu0
    %v3182 = vadd.f32 0.0, %v3181
    %v3183 = vpop.f32.mrf.mxu0
    %v3184 = vadd.f32 0.0, %v3183
    %v3185 = vpop.f32.mrf.mxu0
    %v3186 = vpop.f32.mrf.mxu0
    %3187 = vdwg.mxu0
    %3188 = vmatprep.subr.bf16.mxu0 %v2742
    %3189 = vmatpush1.bf16.msra.mxu0 %v2741
    %3190 = vmatprep.subr.bf16.mxu0 %v2737
    %3191 = vmatpush1.bf16.msra.mxu0 %v2736
    %3192 = vmatprep.subr.bf16.mxu0 %v2732
    %3193 = vmatpush1.bf16.msra.mxu0 %v2731
    %3194 = vmatprep.subr.bf16.mxu0 %v2727
    %3195 = vmatpush1.bf16.msra.mxu0 %v2726
    %3196 = vmatprep.subr.bf16.mxu0 %v2722
    %3197 = vmatpush1.bf16.msra.mxu0 %v2721
    %3198 = vmatprep.subr.bf16.mxu0 %v2717
    %3199 = vmatpush1.bf16.msra.mxu0 %v2716
    %3200 = vmatprep.subr.bf16.mxu0 %v2712
    %3201 = vmatpush1.bf16.msra.mxu0 %v2711
    %3202 = vmatprep.subr.bf16.mxu0 %v2707
    %3203 = vmatpush1.bf16.msra.mxu0 %v2706
    %3204 = vmatprep.subr.bf16.mxu0 %v2782
    %3205 = vmatpush2.bf16.msra.mxu0 %v2781
    %3206 = vmatprep.subr.bf16.mxu0 %v2777
    %3207 = vmatpush2.bf16.msra.mxu0 %v2776
    %3208 = vmatprep.subr.bf16.mxu0 %v2772
    %3209 = vmatpush2.bf16.msra.mxu0 %v2771
    %3210 = vmatprep.subr.bf16.mxu0 %v2767
    %3211 = vmatpush2.bf16.msra.mxu0 %v2766
    %3212 = vmatprep.subr.bf16.mxu0 %v2762
    %3213 = vmatpush2.bf16.msra.mxu0 %v2761
    %3214 = vmatprep.subr.bf16.mxu0 %v2757
    %3215 = vmatpush2.bf16.msra.mxu0 %v2756
    %3216 = vmatprep.subr.bf16.mxu0 %v2752
    %3217 = vmatpush2.bf16.msra.mxu0 %v2751
    %3218 = vmatprep.subr.bf16.mxu0 %v2747
    %3219 = vmatpush2.bf16.msra.mxu0 %v2746
    %3220 = vmatprep.mubr.bf16.mxu0 %v326
    %3221 = vmatmul.mubr.bf16.gmra.mxu0 %v325
    %v3222 = vpop.f32.mrf.mxu0
    %v3223 = vadd.f32 %v3182, %v3222
    %v3224 = vpop.f32.mrf.mxu0
    %v3225 = vadd.f32 %v3184, %v3224
    %v3226 = vpop.f32.mrf.mxu0
    %v3227 = vpop.f32.mrf.mxu0
    %3228 = vdwg.mxu0
    %3229 = vmatprep.subr.bf16.mxu0 %v2822
    %3230 = vmatpush1.bf16.msra.mxu0 %v2821
    %3231 = vmatprep.subr.bf16.mxu0 %v2817
    %3232 = vmatpush1.bf16.msra.mxu0 %v2816
    %3233 = vmatprep.subr.bf16.mxu0 %v2812
    %3234 = vmatpush1.bf16.msra.mxu0 %v2811
    %3235 = vmatprep.subr.bf16.mxu0 %v2807
    %3236 = vmatpush1.bf16.msra.mxu0 %v2806
    %3237 = vmatprep.subr.bf16.mxu0 %v2802
    %3238 = vmatpush1.bf16.msra.mxu0 %v2801
    %3239 = vmatprep.subr.bf16.mxu0 %v2797
    %3240 = vmatpush1.bf16.msra.mxu0 %v2796
    %3241 = vmatprep.subr.bf16.mxu0 %v2792
    %3242 = vmatpush1.bf16.msra.mxu0 %v2791
    %3243 = vmatprep.subr.bf16.mxu0 %v2787
    %3244 = vmatpush1.bf16.msra.mxu0 %v2786
    %3245 = vmatprep.subr.bf16.mxu0 0
    %3246 = vmatpush2.bf16.msra.mxu0 0
    %3247 = vmatprep.subr.bf16.mxu0 0
    %3248 = vmatpush2.bf16.msra.mxu0 0
    %3249 = vmatprep.subr.bf16.mxu0 0
    %3250 = vmatpush2.bf16.msra.mxu0 0
    %3251 = vmatprep.subr.bf16.mxu0 0
    %3252 = vmatpush2.bf16.msra.mxu0 0
    %3253 = vmatprep.subr.bf16.mxu0 0
    %3254 = vmatpush2.bf16.msra.mxu0 0
    %3255 = vmatprep.subr.bf16.mxu0 0
    %3256 = vmatpush2.bf16.msra.mxu0 0
    %3257 = vmatprep.subr.bf16.mxu0 0
    %3258 = vmatpush2.bf16.msra.mxu0 0
    %3259 = vmatprep.subr.bf16.mxu0 0
    %3260 = vmatpush2.bf16.msra.mxu0 0
    %3261 = vmatprep.mubr.bf16.mxu0 0
    %3262 = vmatmul.mubr.bf16.gmra.mxu0 %v327
    %v3263 = vpop.f32.mrf.mxu0
    %v3264 = vadd.f32 %v3223, %v3263
    %v3265 = vpop.f32.mrf.mxu0
    %v3266 = vadd.f32 %v3225, %v3265
    %v3267 = vpop.f32.mrf.mxu0
    %v3268 = vpop.f32.mrf.mxu0
    %3269 = vdwg.mxu0
    %3270 = vmatprep.subr.bf16.mxu0 0
    %3271 = vmatpush1.bf16.msra.mxu0 %v2663
    %3272 = vmatprep.subr.bf16.mxu0 0
    %3273 = vmatpush1.bf16.msra.mxu0 %v2658
    %3274 = vmatprep.subr.bf16.mxu0 0
    %3275 = vmatpush1.bf16.msra.mxu0 %v2653
    %3276 = vmatprep.subr.bf16.mxu0 0
    %3277 = vmatpush1.bf16.msra.mxu0 %v2648
    %3278 = vmatprep.subr.bf16.mxu0 0
    %3279 = vmatpush1.bf16.msra.mxu0 %v2643
    %3280 = vmatprep.subr.bf16.mxu0 0
    %3281 = vmatpush1.bf16.msra.mxu0 %v2638
    %3282 = vmatprep.subr.bf16.mxu0 0
    %3283 = vmatpush1.bf16.msra.mxu0 %v2633
    %3284 = vmatprep.subr.bf16.mxu0 0
    %3285 = vmatpush1.bf16.msra.mxu0 %v2628
    %3286 = vmatprep.subr.bf16.mxu0 0
    %3287 = vmatpush2.bf16.msra.mxu0 %v2703
    %3288 = vmatprep.subr.bf16.mxu0 0
    %3289 = vmatpush2.bf16.msra.mxu0 %v2698
    %3290 = vmatprep.subr.bf16.mxu0 0
    %3291 = vmatpush2.bf16.msra.mxu0 %v2693
    %3292 = vmatprep.subr.bf16.mxu0 0
    %3293 = vmatpush2.bf16.msra.mxu0 %v2688
    %3294 = vmatprep.subr.bf16.mxu0 0
    %3295 = vmatpush2.bf16.msra.mxu0 %v2683
    %3296 = vmatprep.subr.bf16.mxu0 0
    %3297 = vmatpush2.bf16.msra.mxu0 %v2678
    %3298 = vmatprep.subr.bf16.mxu0 0
    %3299 = vmatpush2.bf16.msra.mxu0 %v2673
    %3300 = vmatprep.subr.bf16.mxu0 0
    %3301 = vmatpush2.bf16.msra.mxu0 %v2668
    %3302 = vmatprep.mubr.bf16.mxu0 %v324
    %3303 = vmatmul.mubr.bf16.gmra.mxu0 %v323
    %v3304 = vpop.f32.mrf.mxu0
    %v3305 = vadd.f32 0.0, %v3304
    %v3306 = vpop.f32.mrf.mxu0
    %v3307 = vpop.f32.mrf.mxu0
    %v3308 = vpop.f32.mrf.mxu0
    %3309 = vdwg.mxu0
    %3310 = vmatprep.subr.bf16.mxu0 0
    %3311 = vmatpush1.bf16.msra.mxu0 %v2743
    %3312 = vmatprep.subr.bf16.mxu0 0
    %3313 = vmatpush1.bf16.msra.mxu0 %v2738
    %3314 = vmatprep.subr.bf16.mxu0 0
    %3315 = vmatpush1.bf16.msra.mxu0 %v2733
    %3316 = vmatprep.subr.bf16.mxu0 0
    %3317 = vmatpush1.bf16.msra.mxu0 %v2728
    %3318 = vmatprep.subr.bf16.mxu0 0
    %3319 = vmatpush1.bf16.msra.mxu0 %v2723
    %3320 = vmatprep.subr.bf16.mxu0 0
    %3321 = vmatpush1.bf16.msra.mxu0 %v2718
    %3322 = vmatprep.subr.bf16.mxu0 0
    %3323 = vmatpush1.bf16.msra.mxu0 %v2713
    %3324 = vmatprep.subr.bf16.mxu0 0
    %3325 = vmatpush1.bf16.msra.mxu0 %v2708
    %3326 = vmatprep.subr.bf16.mxu0 0
    %3327 = vmatpush2.bf16.msra.mxu0 %v2783
    %3328 = vmatprep.subr.bf16.mxu0 0
    %3329 = vmatpush2.bf16.msra.mxu0 %v2778
    %3330 = vmatprep.subr.bf16.mxu0 0
    %3331 = vmatpush2.bf16.msra.mxu0 %v2773
    %3332 = vmatprep.subr.bf16.mxu0 0
    %3333 = vmatpush2.bf16.msra.mxu0 %v2768
    %3334 = vmatprep.subr.bf16.mxu0 0
    %3335 = vmatpush2.bf16.msra.mxu0 %v2763
    %3336 = vmatprep.subr.bf16.mxu0 0
    %3337 = vmatpush2.bf16.msra.mxu0 %v2758
    %3338 = vmatprep.subr.bf16.mxu0 0
    %3339 = vmatpush2.bf16.msra.mxu0 %v2753
    %3340 = vmatprep.subr.bf16.mxu0 0
    %3341 = vmatpush2.bf16.msra.mxu0 %v2748
    %3342 = vmatprep.mubr.bf16.mxu0 %v326
    %3343 = vmatmul.mubr.bf16.gmra.mxu0 %v325
    %v3344 = vpop.f32.mrf.mxu0
    %v3345 = vadd.f32 %v3305, %v3344
    %v3346 = vpop.f32.mrf.mxu0
    %v3347 = vpop.f32.mrf.mxu0
    %v3348 = vpop.f32.mrf.mxu0
    %3349 = vdwg.mxu0
    %3350 = vmatprep.subr.bf16.mxu0 0
    %3351 = vmatpush1.bf16.msra.mxu0 %v2823
    %3352 = vmatprep.subr.bf16.mxu0 0
    %3353 = vmatpush1.bf16.msra.mxu0 %v2818
    %3354 = vmatprep.subr.bf16.mxu0 0
    %3355 = vmatpush1.bf16.msra.mxu0 %v2813
    %3356 = vmatprep.subr.bf16.mxu0 0
    %3357 = vmatpush1.bf16.msra.mxu0 %v2808
    %3358 = vmatprep.subr.bf16.mxu0 0
    %3359 = vmatpush1.bf16.msra.mxu0 %v2803
    %3360 = vmatprep.subr.bf16.mxu0 0
    %3361 = vmatpush1.bf16.msra.mxu0 %v2798
    %3362 = vmatprep.subr.bf16.mxu0 0
    %3363 = vmatpush1.bf16.msra.mxu0 %v2793
    %3364 = vmatprep.subr.bf16.mxu0 0
    %3365 = vmatpush1.bf16.msra.mxu0 %v2788
    %3366 = vmatprep.subr.bf16.mxu0 0
    %3367 = vmatpush2.bf16.msra.mxu0 0
    %3368 = vmatprep.subr.bf16.mxu0 0
    %3369 = vmatpush2.bf16.msra.mxu0 0
    %3370 = vmatprep.subr.bf16.mxu0 0
    %3371 = vmatpush2.bf16.msra.mxu0 0
    %3372 = vmatprep.subr.bf16.mxu0 0
    %3373 = vmatpush2.bf16.msra.mxu0 0
    %3374 = vmatprep.subr.bf16.mxu0 0
    %3375 = vmatpush2.bf16.msra.mxu0 0
    %3376 = vmatprep.subr.bf16.mxu0 0
    %3377 = vmatpush2.bf16.msra.mxu0 0
    %3378 = vmatprep.subr.bf16.mxu0 0
    %3379 = vmatpush2.bf16.msra.mxu0 0
    %3380 = vmatprep.subr.bf16.mxu0 0
    %3381 = vmatpush2.bf16.msra.mxu0 0
    %3382 = vmatprep.mubr.bf16.mxu0 0
    %3383 = vmatmul.mubr.bf16.gmra.mxu0 %v327
    %v3384 = vpop.f32.mrf.mxu0
    %v3385 = vadd.f32 %v3345, %v3384
    %v3386 = vpop.f32.mrf.mxu0
    %v3387 = vpop.f32.mrf.mxu0
    %v3388 = vpop.f32.mrf.mxu0
    %3389 = vdwg.mxu0
    %v3390 = vmul.f32 %v3141, %v3141
    %v3391 = vmul.f32 %v3143, %v3143
    %v3392 = vmul.f32 %v3264, %v3264
    %v3393 = vmul.f32 %v3266, %v3266
    %v3394 = vmul.f32 %v3385, %v3385
    %v3395 = vadd.f32 %v1739, %v3390
    %v3396 = vadd.f32 %v1740, %v3391
    %v3397 = vadd.f32 %v1741, %v3392
    %v3398 = vadd.f32 %v1742, %v3393
    %v3399 = vadd.f32 %v1743, %v3394
    %v3400 = vld [vmem:[#allocation8] sm:$0xff]
    %v3401 = vld [vmem:[#allocation8 + $0x8] sm:$0xff]
    %v3402 = vld [vmem:[#allocation8 + $0x10] sm:$0xff]
    %v3403 = vld [vmem:[#allocation8 + $0x18] sm:$0xff]
    %v3404 = vld [vmem:[#allocation8 + $0x20] sm:$0xff]
    %v3405 = vld [vmem:[#allocation8 + $0x28] sm:$0xff]
    %v3406 = vld [vmem:[#allocation8 + $0x30] sm:$0xff]
    %v3407 = vld [vmem:[#allocation8 + $0x38] sm:$0xff]
    %v3408 = vld [vmem:[#allocation8 + $0x40] sm:$0xff]
    %v3409 = vld [vmem:[#allocation8 + $0x48] sm:$0xff]
    %v3410 = vld [vmem:[#allocation8 + $0x50] sm:$0xff]
    %v3411 = vld [vmem:[#allocation8 + $0x58] sm:$0xff]
    %v3412 = vld [vmem:[#allocation8 + $0x60] sm:$0xff]
    %v3413 = vld [vmem:[#allocation8 + $0x68] sm:$0xff]
    %v3414 = vld [vmem:[#allocation8 + $0x70] sm:$0xff]
    %v3415 = vld [vmem:[#allocation8 + $0x78] sm:$0xff]
    %v3416 = vld [vmem:[#allocation8 + $0x80] sm:$0xff]
    %v3417 = vld [vmem:[#allocation8 + $0x88] sm:$0xff]
    %v3418 = vld [vmem:[#allocation8 + $0x90] sm:$0xff]
    %v3419 = vld [vmem:[#allocation8 + $0x98] sm:$0xff]
    %v3420 = vld [vmem:[#allocation8 + $0xa0] sm:$0xff]
    %v3421 = vld [vmem:[#allocation8 + $0xa8] sm:$0xff]
    %v3422 = vld [vmem:[#allocation8 + $0xb0] sm:$0xff]
    %v3423 = vld [vmem:[#allocation8 + $0xb8] sm:$0xff]
    %v3424 = vld [vmem:[#allocation8 + $0xc0] sm:$0xff]
    %v3425 = vld [vmem:[#allocation8 + $0xc8] sm:$0xff]
    %v3426 = vld [vmem:[#allocation8 + $0xd0] sm:$0xff]
    %v3427 = vld [vmem:[#allocation8 + $0xd8] sm:$0xff]
    %v3428 = vld [vmem:[#allocation8 + $0xe0] sm:$0xff]
    %v3429 = vld [vmem:[#allocation8 + $0xe8] sm:$0xff]
    %v3430 = vld [vmem:[#allocation8 + $0xf0] sm:$0xff]
    %v3431 = vld [vmem:[#allocation8 + $0xf8] sm:$0xff]
    %v3432 = vld [vmem:[#allocation8 + $0x100] sm:$0xff]
    %v3433 = vld [vmem:[#allocation8 + $0x108] sm:$0xff]
    %v3434 = vld [vmem:[#allocation8 + $0x110] sm:$0xff]
    %v3435 = vld [vmem:[#allocation8 + $0x118] sm:$0xff]
    %v3436 = vld [vmem:[#allocation8 + $0x120] sm:$0xff]
    %v3437 = vld [vmem:[#allocation8 + $0x128] sm:$0xff]
    %v3438 = vld [vmem:[#allocation8 + $0x130] sm:$0xff]
    %v3439 = vld [vmem:[#allocation8 + $0x138] sm:$0xff]
    %v3440 = vld [vmem:[#allocation8 + $0x140] sm:$0xff]
    %v3441 = vld [vmem:[#allocation8 + $0x148] sm:$0xff]
    %v3442 = vld [vmem:[#allocation8 + $0x150] sm:$0xff]
    %v3443 = vld [vmem:[#allocation8 + $0x158] sm:$0xff]
    %v3444 = vld [vmem:[#allocation8 + $0x160] sm:$0xff]
    %v3445 = vld [vmem:[#allocation8 + $0x168] sm:$0xff]
    %v3446 = vld [vmem:[#allocation8 + $0x170] sm:$0xff]
    %v3447 = vld [vmem:[#allocation8 + $0x178] sm:$0xff]
    %v3448 = vld [vmem:[#allocation8 + $0x180] sm:$0xff]
    %v3449 = vld [vmem:[#allocation8 + $0x188] sm:$0xff]
    %v3450 = vld [vmem:[#allocation8 + $0x190] sm:$0xff]
    %v3451 = vld [vmem:[#allocation8 + $0x198] sm:$0xff]
    %v3452 = vld [vmem:[#allocation8 + $0x1a0] sm:$0xff]
    %v3453 = vld [vmem:[#allocation8 + $0x1a8] sm:$0xff]
    %v3454 = vld [vmem:[#allocation8 + $0x1b0] sm:$0xff]
    %v3455 = vld [vmem:[#allocation8 + $0x1b8] sm:$0xff]
    %v3456 = vld [vmem:[#allocation8 + $0x1c0] sm:$0xff]
    %v3457 = vld [vmem:[#allocation8 + $0x1c8] sm:$0xff]
    %v3458 = vld [vmem:[#allocation8 + $0x1d0] sm:$0xff]
    %v3459 = vld [vmem:[#allocation8 + $0x1d8] sm:$0xff]
    %v3460 = vld [vmem:[#allocation8 + $0x1e0] sm:$0xff]
    %v3461 = vld [vmem:[#allocation8 + $0x1e8] sm:$0xff]
    %v3462 = vld [vmem:[#allocation8 + $0x1f0] sm:$0xff]
    %v3463 = vld [vmem:[#allocation8 + $0x1f8] sm:$0xff]
    %v3464 = vld [vmem:[#allocation8 + $0x200] sm:$0xff]
    %v3465 = vld [vmem:[#allocation8 + $0x208] sm:$0xff]
    %v3466 = vld [vmem:[#allocation8 + $0x210] sm:$0xff]
    %v3467 = vld [vmem:[#allocation8 + $0x218] sm:$0xff]
    %v3468 = vld [vmem:[#allocation8 + $0x220] sm:$0xff]
    %v3469 = vld [vmem:[#allocation8 + $0x228] sm:$0xff]
    %v3470 = vld [vmem:[#allocation8 + $0x230] sm:$0xff]
    %v3471 = vld [vmem:[#allocation8 + $0x238] sm:$0xff]
    %v3472 = vld [vmem:[#allocation8 + $0x240] sm:$0xff]
    %v3473 = vld [vmem:[#allocation8 + $0x248] sm:$0xff]
    %v3474 = vld [vmem:[#allocation8 + $0x250] sm:$0xff]
    %v3475 = vld [vmem:[#allocation8 + $0x258] sm:$0xff]
    %v3476 = vld [vmem:[#allocation8 + $0x260] sm:$0xff]
    %v3477 = vld [vmem:[#allocation8 + $0x268] sm:$0xff]
    %v3478 = vld [vmem:[#allocation8 + $0x270] sm:$0xff]
    %v3479 = vld [vmem:[#allocation8 + $0x278] sm:$0xff]
    %3480 = vmatprep.subr.mxu0 0.0
    %3481 = vmatpush1.msra.mxu0 %v3415
    %3482 = vmatprep.subr.mxu0 0.0
    %3483 = vmatpush1.msra.mxu0 %v3414
    %3484 = vmatprep.subr.mxu0 0.0
    %3485 = vmatpush1.msra.mxu0 %v3413
    %3486 = vmatprep.subr.mxu0 0.0
    %3487 = vmatpush1.msra.mxu0 %v3412
    %3488 = vmatprep.subr.mxu0 0.0
    %3489 = vmatpush1.msra.mxu0 %v3411
    %3490 = vmatprep.subr.mxu0 0.0
    %3491 = vmatpush1.msra.mxu0 %v3410
    %3492 = vmatprep.subr.mxu0 0.0
    %3493 = vmatpush1.msra.mxu0 %v3409
    %3494 = vmatprep.subr.mxu0 0.0
    %3495 = vmatpush1.msra.mxu0 %v3408
    %3496 = vmatprep.subr.mxu0 0.0
    %3497 = vmatpush1.msra.mxu0 %v3407
    %3498 = vmatprep.subr.mxu0 0.0
    %3499 = vmatpush1.msra.mxu0 %v3406
    %3500 = vmatprep.subr.mxu0 0.0
    %3501 = vmatpush1.msra.mxu0 %v3405
    %3502 = vmatprep.subr.mxu0 0.0
    %3503 = vmatpush1.msra.mxu0 %v3404
    %3504 = vmatprep.subr.mxu0 0.0
    %3505 = vmatpush1.msra.mxu0 %v3403
    %3506 = vmatprep.subr.mxu0 0.0
    %3507 = vmatpush1.msra.mxu0 %v3402
    %3508 = vmatprep.subr.mxu0 0.0
    %3509 = vmatpush1.msra.mxu0 %v3401
    %3510 = vmatprep.subr.mxu0 0.0
    %3511 = vmatpush1.msra.mxu0 %v3400
    %3512 = vmatprep.subr.mxu0 0.0
    %3513 = vmatpush2.msra.mxu0 %v3431
    %3514 = vmatprep.subr.mxu0 0.0
    %3515 = vmatpush2.msra.mxu0 %v3430
    %3516 = vmatprep.subr.mxu0 0.0
    %3517 = vmatpush2.msra.mxu0 %v3429
    %3518 = vmatprep.subr.mxu0 0.0
    %3519 = vmatpush2.msra.mxu0 %v3428
    %3520 = vmatprep.subr.mxu0 0.0
    %3521 = vmatpush2.msra.mxu0 %v3427
    %3522 = vmatprep.subr.mxu0 0.0
    %3523 = vmatpush2.msra.mxu0 %v3426
    %3524 = vmatprep.subr.mxu0 0.0
    %3525 = vmatpush2.msra.mxu0 %v3425
    %3526 = vmatprep.subr.mxu0 0.0
    %3527 = vmatpush2.msra.mxu0 %v3424
    %3528 = vmatprep.subr.mxu0 0.0
    %3529 = vmatpush2.msra.mxu0 %v3423
    %3530 = vmatprep.subr.mxu0 0.0
    %3531 = vmatpush2.msra.mxu0 %v3422
    %3532 = vmatprep.subr.mxu0 0.0
    %3533 = vmatpush2.msra.mxu0 %v3421
    %3534 = vmatprep.subr.mxu0 0.0
    %3535 = vmatpush2.msra.mxu0 %v3420
    %3536 = vmatprep.subr.mxu0 0.0
    %3537 = vmatpush2.msra.mxu0 %v3419
    %3538 = vmatprep.subr.mxu0 0.0
    %3539 = vmatpush2.msra.mxu0 %v3418
    %3540 = vmatprep.subr.mxu0 0.0
    %3541 = vmatpush2.msra.mxu0 %v3417
    %3542 = vmatprep.subr.mxu0 0.0
    %3543 = vmatpush2.msra.mxu0 %v3416
    %3544 = vmatprep.mubr.f32.mxu0 %v3396
    %3545 = vmatmul.mubr.f32.gmra.mxu0 %v3395
    %v3546 = vpop.f32.mrf.mxu0
    %v3547 = vadd.f32 0.0, %v3546
    %v3548 = vpop.f32.mrf.mxu0
    %3549 = vdwg.mxu0
    %3550 = vmatprep.subr.mxu0 0.0
    %3551 = vmatpush1.msra.mxu0 %v3447
    %3552 = vmatprep.subr.mxu0 0.0
    %3553 = vmatpush1.msra.mxu0 %v3446
    %3554 = vmatprep.subr.mxu0 0.0
    %3555 = vmatpush1.msra.mxu0 %v3445
    %3556 = vmatprep.subr.mxu0 0.0
    %3557 = vmatpush1.msra.mxu0 %v3444
    %3558 = vmatprep.subr.mxu0 0.0
    %3559 = vmatpush1.msra.mxu0 %v3443
    %3560 = vmatprep.subr.mxu0 0.0
    %3561 = vmatpush1.msra.mxu0 %v3442
    %3562 = vmatprep.subr.mxu0 0.0
    %3563 = vmatpush1.msra.mxu0 %v3441
    %3564 = vmatprep.subr.mxu0 0.0
    %3565 = vmatpush1.msra.mxu0 %v3440
    %3566 = vmatprep.subr.mxu0 0.0
    %3567 = vmatpush1.msra.mxu0 %v3439
    %3568 = vmatprep.subr.mxu0 0.0
    %3569 = vmatpush1.msra.mxu0 %v3438
    %3570 = vmatprep.subr.mxu0 0.0
    %3571 = vmatpush1.msra.mxu0 %v3437
    %3572 = vmatprep.subr.mxu0 0.0
    %3573 = vmatpush1.msra.mxu0 %v3436
    %3574 = vmatprep.subr.mxu0 0.0
    %3575 = vmatpush1.msra.mxu0 %v3435
    %3576 = vmatprep.subr.mxu0 0.0
    %3577 = vmatpush1.msra.mxu0 %v3434
    %3578 = vmatprep.subr.mxu0 0.0
    %3579 = vmatpush1.msra.mxu0 %v3433
    %3580 = vmatprep.subr.mxu0 0.0
    %3581 = vmatpush1.msra.mxu0 %v3432
    %3582 = vmatprep.subr.mxu0 0.0
    %3583 = vmatpush2.msra.mxu0 %v3463
    %3584 = vmatprep.subr.mxu0 0.0
    %3585 = vmatpush2.msra.mxu0 %v3462
    %3586 = vmatprep.subr.mxu0 0.0
    %3587 = vmatpush2.msra.mxu0 %v3461
    %3588 = vmatprep.subr.mxu0 0.0
    %3589 = vmatpush2.msra.mxu0 %v3460
    %3590 = vmatprep.subr.mxu0 0.0
    %3591 = vmatpush2.msra.mxu0 %v3459
    %3592 = vmatprep.subr.mxu0 0.0
    %3593 = vmatpush2.msra.mxu0 %v3458
    %3594 = vmatprep.subr.mxu0 0.0
    %3595 = vmatpush2.msra.mxu0 %v3457
    %3596 = vmatprep.subr.mxu0 0.0
    %3597 = vmatpush2.msra.mxu0 %v3456
    %3598 = vmatprep.subr.mxu0 0.0
    %3599 = vmatpush2.msra.mxu0 %v3455
    %3600 = vmatprep.subr.mxu0 0.0
    %3601 = vmatpush2.msra.mxu0 %v3454
    %3602 = vmatprep.subr.mxu0 0.0
    %3603 = vmatpush2.msra.mxu0 %v3453
    %3604 = vmatprep.subr.mxu0 0.0
    %3605 = vmatpush2.msra.mxu0 %v3452
    %3606 = vmatprep.subr.mxu0 0.0
    %3607 = vmatpush2.msra.mxu0 %v3451
    %3608 = vmatprep.subr.mxu0 0.0
    %3609 = vmatpush2.msra.mxu0 %v3450
    %3610 = vmatprep.subr.mxu0 0.0
    %3611 = vmatpush2.msra.mxu0 %v3449
    %3612 = vmatprep.subr.mxu0 0.0
    %3613 = vmatpush2.msra.mxu0 %v3448
    %3614 = vmatprep.mubr.f32.mxu0 %v3398
    %3615 = vmatmul.mubr.f32.gmra.mxu0 %v3397
    %v3616 = vpop.f32.mrf.mxu0
    %v3617 = vadd.f32 %v3547, %v3616
    %v3618 = vpop.f32.mrf.mxu0
    %3619 = vdwg.mxu0
    %3620 = vmatprep.subr.mxu0 0.0
    %3621 = vmatpush1.msra.mxu0 %v3479
    %3622 = vmatprep.subr.mxu0 0.0
    %3623 = vmatpush1.msra.mxu0 %v3478
    %3624 = vmatprep.subr.mxu0 0.0
    %3625 = vmatpush1.msra.mxu0 %v3477
    %3626 = vmatprep.subr.mxu0 0.0
    %3627 = vmatpush1.msra.mxu0 %v3476
    %3628 = vmatprep.subr.mxu0 0.0
    %3629 = vmatpush1.msra.mxu0 %v3475
    %3630 = vmatprep.subr.mxu0 0.0
    %3631 = vmatpush1.msra.mxu0 %v3474
    %3632 = vmatprep.subr.mxu0 0.0
    %3633 = vmatpush1.msra.mxu0 %v3473
    %3634 = vmatprep.subr.mxu0 0.0
    %3635 = vmatpush1.msra.mxu0 %v3472
    %3636 = vmatprep.subr.mxu0 0.0
    %3637 = vmatpush1.msra.mxu0 %v3471
    %3638 = vmatprep.subr.mxu0 0.0
    %3639 = vmatpush1.msra.mxu0 %v3470
    %3640 = vmatprep.subr.mxu0 0.0
    %3641 = vmatpush1.msra.mxu0 %v3469
    %3642 = vmatprep.subr.mxu0 0.0
    %3643 = vmatpush1.msra.mxu0 %v3468
    %3644 = vmatprep.subr.mxu0 0.0
    %3645 = vmatpush1.msra.mxu0 %v3467
    %3646 = vmatprep.subr.mxu0 0.0
    %3647 = vmatpush1.msra.mxu0 %v3466
    %3648 = vmatprep.subr.mxu0 0.0
    %3649 = vmatpush1.msra.mxu0 %v3465
    %3650 = vmatprep.subr.mxu0 0.0
    %3651 = vmatpush1.msra.mxu0 %v3464
    %3652 = vmatprep.subr.mxu0 0.0
    %3653 = vmatpush2.msra.mxu0 0.0
    %3654 = vmatprep.subr.mxu0 0.0
    %3655 = vmatpush2.msra.mxu0 0.0
    %3656 = vmatprep.subr.mxu0 0.0
    %3657 = vmatpush2.msra.mxu0 0.0
    %3658 = vmatprep.subr.mxu0 0.0
    %3659 = vmatpush2.msra.mxu0 0.0
    %3660 = vmatprep.subr.mxu0 0.0
    %3661 = vmatpush2.msra.mxu0 0.0
    %3662 = vmatprep.subr.mxu0 0.0
    %3663 = vmatpush2.msra.mxu0 0.0
    %3664 = vmatprep.subr.mxu0 0.0
    %3665 = vmatpush2.msra.mxu0 0.0
    %3666 = vmatprep.subr.mxu0 0.0
    %3667 = vmatpush2.msra.mxu0 0.0
    %3668 = vmatprep.subr.mxu0 0.0
    %3669 = vmatpush2.msra.mxu0 0.0
    %3670 = vmatprep.subr.mxu0 0.0
    %3671 = vmatpush2.msra.mxu0 0.0
    %3672 = vmatprep.subr.mxu0 0.0
    %3673 = vmatpush2.msra.mxu0 0.0
    %3674 = vmatprep.subr.mxu0 0.0
    %3675 = vmatpush2.msra.mxu0 0.0
    %3676 = vmatprep.subr.mxu0 0.0
    %3677 = vmatpush2.msra.mxu0 0.0
    %3678 = vmatprep.subr.mxu0 0.0
    %3679 = vmatpush2.msra.mxu0 0.0
    %3680 = vmatprep.subr.mxu0 0.0
    %3681 = vmatpush2.msra.mxu0 0.0
    %3682 = vmatprep.subr.mxu0 0.0
    %3683 = vmatpush2.msra.mxu0 0.0
    %3684 = vmatprep.mubr.f32.mxu0 0.0
    %3685 = vmatmul.mubr.f32.gmra.mxu0 %v3399
    %v3686 = vpop.f32.mrf.mxu0
    %v3687 = vadd.f32 %v3617, %v3686
    %v3688 = vpop.f32.mrf.mxu0
    %3689 = vdwg.mxu0
    %v3690 = vmax.f32 %v3687, 1.1920929e-07
    %v3691 = vlog2.pop %v3690
    %v3692 = vmul.f32 %v3691, 0.6931472
    %3693 = vst [vmem:[#allocation10] sm:$0xff] %v3692
    // Predicated region
    $region34: #{tpu_custom_call.1} parent=1 // pred_check
      _
    $region35: #{tpu_custom_call.1} parent=1 // pred_check_branch
      %3695 = sbr.rel (0) target = $region37
    $region36: #{tpu_custom_call.1} parent=1 // pred_region
      %s3697 = ssub.s32 128, 128
      %3698 = vsyncadd [#allocation4], %s3697
      %s3700 = sshll.u32 [#allocation10], 4
      %s3701 = int_to_ptr.vmem [resolvable:$true] %s3700
      %3703 = dma.vmem_to_hbm [thread:$0]  %s3701, 128, %s4, [#allocation4]
    $region37: #{tpu_custom_call.1} parent=1 // pred_fallthru
      _
    // Predicated region
    $region38: #{tpu_custom_call.1} parent=1 // pred_check
      _
    $region39: #{tpu_custom_call.1} parent=1 // pred_check_branch
      %3705 = sbr.rel (0) target = $region41
    $region40: #{tpu_custom_call.1} parent=1 // pred_region
      %3706 = dma.done [#allocation4], 128
    $region41: #{tpu_custom_call.1} parent=1 // pred_fallthru
      _
    %3707 = vsyncpa [#allocation3], 1
    %3708 = vsyncpa [#allocation6], 1
    %3709 = vsyncpa [#allocation9], 1
    %3710 = vsyncpa [#allocation4], 1

// kernel: tpu_custom_call.1
$region0: #{tpu_custom_call.1}
  #allocation0 [shape = 'u32[]', space=smem, size = 0x4, offset = 0x4, fixed_abs, tag = 'smem constant byte address 0x4 - core index']
  #allocation1 [shape = 'u32[144,128]{1,0:T(1,128)}', space=vmem, size = 0x12000, scoped, tag = 'internal scratch']
  %s0 = inlined_call_operand.hbm [shape: bf16[8,640], index: 0, kind: input, shape index: {}]
  %s1 = inlined_call_operand.hbm [shape: bf16[640,640], index: 1, kind: input, shape index: {}]
  %s2 = inlined_call_operand.hbm [shape: bf16[640,640], index: 2, kind: input, shape index: {}]
  %s3 = inlined_call_operand.hbm [shape: f32[640,128], index: 3, kind: input, shape index: {}]
  %s4 = inlined_call_operand.hbm [shape: f32[8,128], index: 4, kind: output, shape index: {}]
  %s5 = sld [smem:[#allocation0]]
  $region42: #{tpu_custom_call.1} parent=0
    _
  %s7 = ssub.s32 1, %s5
  %s8 = scalar_select 0, %s7, %s5
  $region1: #{tpu_custom_call.1} parent=0
    #allocation2 [shape = 'u8[10240]{0}', space=vmem, size = 0x2800, scoped, tag = 'input window, operand 0, single buffered']
    #allocation3 [shape = 's32[1]{0}', space=sflag, size = 0x4, scoped, tag = 'scoped memory for tpu_custom_call.1']
    #allocation4 [shape = 's32[1]{0}', space=sflag, size = 0x4, scoped, tag = 'scoped memory for tpu_custom_call.1']
    #allocation5 [shape = 'u8[819200]{0}', space=vmem, size = 0xc8000, scoped, tag = 'input window, operand 1, single buffered']
    #allocation6 [shape = 's32[1]{0}', space=sflag, size = 0x4, scoped, tag = 'scoped memory for tpu_custom_call.1']
    #allocation7 [shape = 'u8[819200]{0}', space=vmem, size = 0xc8000, scoped, tag = 'input window, operand 2, single buffered']
    #allocation8 [shape = 'u8[327680]{0}', space=vmem, size = 0x50000, scoped, tag = 'input window, operand 3, single buffered']
    #allocation9 [shape = 's32[1]{0}', space=sflag, size = 0x4, scoped, tag = 'scoped memory for tpu_custom_call.1']
    #allocation10 [shape = 'u8[4096]{0}', space=vmem, size = 0x1000, scoped, tag = 'output window, operand 0, single buffered']
    %9 = vsyncpa [#allocation3], 0
    %10 = vsyncpa [#allocation6], 0
    %11 = vsyncpa [#allocation9], 0
    %12 = vsyncpa [#allocation4], 0
    // Predicated region
    $region2: #{tpu_custom_call.1} parent=1 // pred_check
      _
    $region3: #{tpu_custom_call.1} parent=1 // pred_check_branch
      %14 = sbr.rel (0) target = $region5
    $region4: #{tpu_custom_call.1} parent=1 // pred_region
      %s16 = ssub.s32 320, 320
      %17 = vsyncadd [#allocation3], %s16
      %s19 = sshll.u32 [#allocation2], 4
      %s20 = int_to_ptr.vmem [resolvable:$true] %s19
      %22 = dma.hbm_to_vmem [thread:$0]  %s0, 320, %s20, [#allocation3]
    $region5: #{tpu_custom_call.1} parent=1 // pred_fallthru
      _
    // Predicated region
    $region6: #{tpu_custom_call.1} parent=1 // pred_check
      _
    $region7: #{tpu_custom_call.1} parent=1 // pred_check_branch
      %24 = sbr.rel (0) target = $region9
    $region8: #{tpu_custom_call.1} parent=1 // pred_region
      %s26 = ssub.s32 25600, 25600
      %27 = vsyncadd [#allocation6], %s26
      %s28 = sshll.u32 [#allocation5], 4
      %s29 = int_to_ptr.vmem [resolvable:$true] %s28
      %34 = dma.hbm_to_vmem [thread:$0]  %s1, 25600, %s29, [#allocation6], 320, 320, 20
    $region9: #{tpu_custom_call.1} parent=1 // pred_fallthru
      _
    // Predicated region
    $region10: #{tpu_custom_call.1} parent=1 // pred_check
      _
    $region11: #{tpu_custom_call.1} parent=1 // pred_check_branch
      %36 = sbr.rel (0) target = $region13
    $region12: #{tpu_custom_call.1} parent=1 // pred_region
      %s38 = ssub.s32 25600, 25600
      %39 = vsyncadd [#allocation6], %s38
      %s40 = sshll.u32 [#allocation7], 4
      %s41 = int_to_ptr.vmem [resolvable:$true] %s40
      %46 = dma.hbm_to_vmem [thread:$0]  %s2, 25600, %s41, [#allocation6], 320, 320, 20
    $region13: #{tpu_custom_call.1} parent=1 // pred_fallthru
      _
    // Predicated region
    $region14: #{tpu_custom_call.1} parent=1 // pred_check
      _
    $region15: #{tpu_custom_call.1} parent=1 // pred_check_branch
      %48 = sbr.rel (0) target = $region17
    $region16: #{tpu_custom_call.1} parent=1 // pred_region
      %s50 = ssub.s32 10240, 10240
      %51 = vsyncadd [#allocation9], %s50
      %s52 = sshll.u32 [#allocation8], 4
      %s53 = int_to_ptr.vmem [resolvable:$true] %s52
      %58 = dma.hbm_to_vmem [thread:$0]  %s3, 10240, %s53, [#allocation9], 128, 128, 8
    $region17: #{tpu_custom_call.1} parent=1 // pred_fallthru
      _
    // Predicated region
    $region18: #{tpu_custom_call.1} parent=1 // pred_check
      _
    $region19: #{tpu_custom_call.1} parent=1 // pred_check_branch
      %60 = sbr.rel (0) target = $region21
    $region20: #{tpu_custom_call.1} parent=1 // pred_region
      %61 = dma.done [#allocation3], 320
    $region21: #{tpu_custom_call.1} parent=1 // pred_fallthru
      _
    // Predicated region
    $region22: #{tpu_custom_call.1} parent=1 // pred_check
      _
    $region23: #{tpu_custom_call.1} parent=1 // pred_check_branch
      %63 = sbr.rel (0) target = $region25
    $region24: #{tpu_custom_call.1} parent=1 // pred_region
      %64 = dma.done [#allocation6], 25600
    $region25: #{tpu_custom_call.1} parent=1 // pred_fallthru
      _
    // Predicated region
    $region26: #{tpu_custom_call.1} parent=1 // pred_check
      _
    $region27: #{tpu_custom_call.1} parent=1 // pred_check_branch
      %66 = sbr.rel (0) target = $region29
    $region28: #{tpu_custom_call.1} parent=1 // pred_region
      %67 = dma.done [#allocation6], 25600
    $region29: #{tpu_custom_call.1} parent=1 // pred_fallthru
      _
    // Predicated region
    $region30: #{tpu_custom_call.1} parent=1 // pred_check
      _
    $region31: #{tpu_custom_call.1} parent=1 // pred_check_branch
      %69 = sbr.rel (0) target = $region33
    $region32: #{tpu_custom_call.1} parent=1 // pred_region
      %70 = dma.done [#allocation9], 10240
    $region33: #{tpu_custom_call.1} parent=1 // pred_fallthru
      _
    %v72 = vld [vmem:[#allocation2] sm:$0xff]
    %v73 = vld [vmem:[#allocation2 + $0x8] sm:$0xff]
    %v74 = vld [vmem:[#allocation2 + $0x10] sm:$0xf]
    %v75 = vld [vmem:[#allocation5] sm:$0xff]
    %v76 = vld [vmem:[#allocation5 + $0x8] sm:$0xff]
    %v77 = vld [vmem:[#allocation5 + $0x10] sm:$0xf]
    %v78 = vld [vmem:[#allocation5 + $0x14] sm:$0xff]
    %v79 = vld [vmem:[#allocation5 + $0x1c] sm:$0xff]
    %v80 = vld [vmem:[#allocation5 + $0x24] sm:$0xf]
    %v81 = vld [vmem:[#allocation5 + $0x28] sm:$0xff]
    %v82 = vld [vmem:[#allocation5 + $0x30] sm:$0xff]
    %v83 = vld [vmem:[#allocation5 + $0x38] sm:$0xf]
    %v84 = vld [vmem:[#allocation5 + $0x3c] sm:$0xff]
    %v85 = vld [vmem:[#allocation5 + $0x44] sm:$0xff]
    %v86 = vld [vmem:[#allocation5 + $0x4c] sm:$0xf]
    %v87 = vld [vmem:[#allocation5 + $0x50] sm:$0xff]
    %v88 = vld [vmem:[#allocation5 + $0x58] sm:$0xff]
    %v89 = vld [vmem:[#allocation5 + $0x60] sm:$0xf]
    %v90 = vld [vmem:[#allocation5 + $0x64] sm:$0xff]
    %v91 = vld [vmem:[#allocation5 + $0x6c] sm:$0xff]
    %v92 = vld [vmem:[#allocation5 + $0x74] sm:$0xf]
    %v93 = vld [vmem:[#allocation5 + $0x78] sm:$0xff]
    %v94 = vld [vmem:[#allocation5 + $0x80] sm:$0xff]
    %v95 = vld [vmem:[#allocation5 + $0x88] sm:$0xf]
    %v96 = vld [vmem:[#allocation5 + $0x8c] sm:$0xff]
    %v97 = vld [vmem:[#allocation5 + $0x94] sm:$0xff]
    %v98 = vld [vmem:[#allocation5 + $0x9c] sm:$0xf]
    %v99 = vld [vmem:[#allocation5 + $0xa0] sm:$0xff]
    %v100 = vld [vmem:[#allocation5 + $0xa8] sm:$0xff]
    %v101 = vld [vmem:[#allocation5 + $0xb0] sm:$0xf]
    %v102 = vld [vmem:[#allocation5 + $0xb4] sm:$0xff]
    %v103 = vld [vmem:[#allocation5 + $0xbc] sm:$0xff]
    %v104 = vld [vmem:[#allocation5 + $0xc4] sm:$0xf]
    %v105 = vld [vmem:[#allocation5 + $0xc8] sm:$0xff]
    %v106 = vld [vmem:[#allocation5 + $0xd0] sm:$0xff]
    %v107 = vld [vmem:[#allocation5 + $0xd8] sm:$0xf]
    %v108 = vld [vmem:[#allocation5 + $0xdc] sm:$0xff]
    %v109 = vld [vmem:[#allocation5 + $0xe4] sm:$0xff]
    %v110 = vld [vmem:[#allocation5 + $0xec] sm:$0xf]
    %v111 = vld [vmem:[#allocation5 + $0xf0] sm:$0xff]
    %v112 = vld [vmem:[#allocation5 + $0xf8] sm:$0xff]
    %v113 = vld [vmem:[#allocation5 + $0x100] sm:$0xf]
    %v114 = vld [vmem:[#allocation5 + $0x104] sm:$0xff]
    %v115 = vld [vmem:[#allocation5 + $0x10c] sm:$0xff]
    %v116 = vld [vmem:[#allocation5 + $0x114] sm:$0xf]
    %v117 = vld [vmem:[#allocation5 + $0x118] sm:$0xff]
    %v118 = vld [vmem:[#allocation5 + $0x120] sm:$0xff]
    %v119 = vld [vmem:[#allocation5 + $0x128] sm:$0xf]
    %v120 = vld [vmem:[#allocation5 + $0x12c] sm:$0xff]
    %v121 = vld [vmem:[#allocation5 + $0x134] sm:$0xff]
    %v122 = vld [vmem:[#allocation5 + $0x13c] sm:$0xf]
    %v123 = vld [vmem:[#allocation5 + $0x140] sm:$0xff]
    %v124 = vld [vmem:[#allocation5 + $0x148] sm:$0xff]
    %v125 = vld [vmem:[#allocation5 + $0x150] sm:$0xf]
    %v126 = vld [vmem:[#allocation5 + $0x154] sm:$0xff]
    %v127 = vld [vmem:[#allocation5 + $0x15c] sm:$0xff]
    %v128 = vld [vmem:[#allocation5 + $0x164] sm:$0xf]
    %v129 = vld [vmem:[#allocation5 + $0x168] sm:$0xff]
    %v130 = vld [vmem:[#allocation5 + $0x170] sm:$0xff]
    %v131 = vld [vmem:[#allocation5 + $0x178] sm:$0xf]
    %v132 = vld [vmem:[#allocation5 + $0x17c] sm:$0xff]
    %v133 = vld [vmem:[#allocation5 + $0x184] sm:$0xff]
    %v134 = vld [vmem:[#allocation5 + $0x18c] sm:$0xf]
    %v135 = vld [vmem:[#allocation5 + $0x190] sm:$0xff]
    %v136 = vld [vmem:[#allocation5 + $0x198] sm:$0xff]
    %v137 = vld [vmem:[#allocation5 + $0x1a0] sm:$0xf]
    %v138 = vld [vmem:[#allocation5 + $0x1a4] sm:$0xff]
    %v139 = vld [vmem:[#allocation5 + $0x1ac] sm:$0xff]
    %v140 = vld [vmem:[#allocation5 + $0x1b4] sm:$0xf]
    %v141 = vld [vmem:[#allocation5 + $0x1b8] sm:$0xff]
    %v142 = vld [vmem:[#allocation5 + $0x1c0] sm:$0xff]
    %v143 = vld [vmem:[#allocation5 + $0x1c8] sm:$0xf]
    %v144 = vld [vmem:[#allocation5 + $0x1cc] sm:$0xff]
    %v145 = vld [vmem:[#allocation5 + $0x1d4] sm:$0xff]
    %v146 = vld [vmem:[#allocation5 + $0x1dc] sm:$0xf]
    %v147 = vld [vmem:[#allocation5 + $0x1e0] sm:$0xff]
    %v148 = vld [vmem:[#allocation5 + $0x1e8] sm:$0xff]
    %v149 = vld [vmem:[#allocation5 + $0x1f0] sm:$0xf]
    %v150 = vld [vmem:[#allocation5 + $0x1f4] sm:$0xff]
    %v151 = vld [vmem:[#allocation5 + $0x1fc] sm:$0xff]
    %v152 = vld [vmem:[#allocation5 + $0x204] sm:$0xf]
    %v153 = vld [vmem:[#allocation5 + $0x208] sm:$0xff]
    %v154 = vld [vmem:[#allocation5 + $0x210] sm:$0xff]
    %v155 = vld [vmem:[#allocation5 + $0x218] sm:$0xf]
    %v156 = vld [vmem:[#allocation5 + $0x21c] sm:$0xff]
    %v157 = vld [vmem:[#allocation5 + $0x224] sm:$0xff]
    %v158 = vld [vmem:[#allocation5 + $0x22c] sm:$0xf]
    %v159 = vld [vmem:[#allocation5 + $0x230] sm:$0xff]
    %v160 = vld [vmem:[#allocation5 + $0x238] sm:$0xff]
    %v161 = vld [vmem:[#allocation5 + $0x240] sm:$0xf]
    %v162 = vld [vmem:[#allocation5 + $0x244] sm:$0xff]
    %v163 = vld [vmem:[#allocation5 + $0x24c] sm:$0xff]
    %v164 = vld [vmem:[#allocation5 + $0x254] sm:$0xf]
    %v165 = vld [vmem:[#allocation5 + $0x258] sm:$0xff]
    %v166 = vld [vmem:[#allocation5 + $0x260] sm:$0xff]
    %v167 = vld [vmem:[#allocation5 + $0x268] sm:$0xf]
    %v168 = vld [vmem:[#allocation5 + $0x26c] sm:$0xff]
    %v169 = vld [vmem:[#allocation5 + $0x274] sm:$0xff]
    %v170 = vld [vmem:[#allocation5 + $0x27c] sm:$0xf]
    %v171 = vld [vmem:[#allocation5 + $0x280] sm:$0xff]
    %v172 = vld [vmem:[#allocation5 + $0x288] sm:$0xff]
    %v173 = vld [vmem:[#allocation5 + $0x290] sm:$0xf]
    %v174 = vld [vmem:[#allocation5 + $0x294] sm:$0xff]
    %v175 = vld [vmem:[#allocation5 + $0x29c] sm:$0xff]
    %v176 = vld [vmem:[#allocation5 + $0x2a4] sm:$0xf]
    %v177 = vld [vmem:[#allocation5 + $0x2a8] sm:$0xff]
    %v178 = vld [vmem:[#allocation5 + $0x2b0] sm:$0xff]
    %v179 = vld [vmem:[#allocation5 + $0x2b8] sm:$0xf]
    %v180 = vld [vmem:[#allocation5 + $0x2bc] sm:$0xff]
    %v181 = vld [vmem:[#allocation5 + $0x2c4] sm:$0xff]
    %v182 = vld [vmem:[#allocation5 + $0x2cc] sm:$0xf]
    %v183 = vld [vmem:[#allocation5 + $0x2d0] sm:$0xff]
    %v184 = vld [vmem:[#allocation5 + $0x2d8] sm:$0xff]
    %v185 = vld [vmem:[#allocation5 + $0x2e0] sm:$0xf]
    %v186 = vld [vmem:[#allocation5 + $0x2e4] sm:$0xff]
    %v187 = vld [vmem:[#allocation5 + $0x2ec] sm:$0xff]
    %v188 = vld [vmem:[#allocation5 + $0x2f4] sm:$0xf]
    %v189 = vld [vmem:[#allocation5 + $0x2f8] sm:$0xff]
    %v190 = vld [vmem:[#allocation5 + $0x300] sm:$0xff]
    %v191 = vld [vmem:[#allocation5 + $0x308] sm:$0xf]
    %v192 = vld [vmem:[#allocation5 + $0x30c] sm:$0xff]
    %v193 = vld [vmem:[#allocation5 + $0x314] sm:$0xff]
    %v194 = vld [vmem:[#allocation5 + $0x31c] sm:$0xf]
    %v195 = vld [vmem:[#allocation5 + $0x320] sm:$0xff]
    %v196 = vld [vmem:[#allocation5 + $0x328] sm:$0xff]
    %v197 = vld [vmem:[#allocation5 + $0x330] sm:$0xf]
    %v198 = vld [vmem:[#allocation5 + $0x334] sm:$0xff]
    %v199 = vld [vmem:[#allocation5 + $0x33c] sm:$0xff]
    %v200 = vld [vmem:[#allocation5 + $0x344] sm:$0xf]
    %v201 = vld [vmem:[#allocation5 + $0x348] sm:$0xff]
    %v202 = vld [vmem:[#allocation5 + $0x350] sm:$0xff]
    %v203 = vld [vmem:[#allocation5 + $0x358] sm:$0xf]
    %v204 = vld [vmem:[#allocation5 + $0x35c] sm:$0xff]
    %v205 = vld [vmem:[#allocation5 + $0x364] sm:$0xff]
    %v206 = vld [vmem:[#allocation5 + $0x36c] sm:$0xf]
    %v207 = vld [vmem:[#allocation5 + $0x370] sm:$0xff]
    %v208 = vld [vmem:[#allocation5 + $0x378] sm:$0xff]
    %v209 = vld [vmem:[#allocation5 + $0x380] sm:$0xf]
    %v210 = vld [vmem:[#allocation5 + $0x384] sm:$0xff]
    %v211 = vld [vmem:[#allocation5 + $0x38c] sm:$0xff]
    %v212 = vld [vmem:[#allocation5 + $0x394] sm:$0xf]
    %v213 = vld [vmem:[#allocation5 + $0x398] sm:$0xff]
    %v214 = vld [vmem:[#allocation5 + $0x3a0] sm:$0xff]
    %v215 = vld [vmem:[#allocation5 + $0x3a8] sm:$0xf]
    %v216 = vld [vmem:[#allocation5 + $0x3ac] sm:$0xff]
    %v217 = vld [vmem:[#allocation5 + $0x3b4] sm:$0xff]
    %v218 = vld [vmem:[#allocation5 + $0x3bc] sm:$0xf]
    %v219 = vld [vmem:[#allocation5 + $0x3c0] sm:$0xff]
    %v220 = vld [vmem:[#allocation5 + $0x3c8] sm:$0xff]
    %v221 = vld [vmem:[#allocation5 + $0x3d0] sm:$0xf]
    %v222 = vld [vmem:[#allocation5 + $0x3d4] sm:$0xff]
    %v223 = vld [vmem:[#allocation5 + $0x3dc] sm:$0xff]
    %v224 = vld [vmem:[#allocation5 + $0x3e4] sm:$0xf]
    %v225 = vld [vmem:[#allocation5 + $0x3e8] sm:$0xff]
    %v226 = vld [vmem:[#allocation5 + $0x3f0] sm:$0xff]
    %v227 = vld [vmem:[#allocation5 + $0x3f8] sm:$0xf]
    %v228 = vld [vmem:[#allocation5 + $0x3fc] sm:$0xff]
    %v229 = vld [vmem:[#allocation5 + $0x404] sm:$0xff]
    %v230 = vld [vmem:[#allocation5 + $0x40c] sm:$0xf]
    %v231 = vld [vmem:[#allocation5 + $0x410] sm:$0xff]
    %v232 = vld [vmem:[#allocation5 + $0x418] sm:$0xff]
    %v233 = vld [vmem:[#allocation5 + $0x420] sm:$0xf]
    %v234 = vld [vmem:[#allocation5 + $0x424] sm:$0xff]
    %v235 = vld [vmem:[#allocation5 + $0x42c] sm:$0xff]
    %v236 = vld [vmem:[#allocation5 + $0x434] sm:$0xf]
    %v237 = vld [vmem:[#allocation5 + $0x438] sm:$0xff]
    %v238 = vld [vmem:[#allocation5 + $0x440] sm:$0xff]
    %v239 = vld [vmem:[#allocation5 + $0x448] sm:$0xf]
    %v240 = vld [vmem:[#allocation5 + $0x44c] sm:$0xff]
    %v241 = vld [vmem:[#allocation5 + $0x454] sm:$0xff]
    %v242 = vld [vmem:[#allocation5 + $0x45c] sm:$0xf]
    %v243 = vld [vmem:[#allocation5 + $0x460] sm:$0xff]
    %v244 = vld [vmem:[#allocation5 + $0x468] sm:$0xff]
    %v245 = vld [vmem:[#allocation5 + $0x470] sm:$0xf]
    %v246 = vld [vmem:[#allocation5 + $0x474] sm:$0xff]
    %v247 = vld [vmem:[#allocation5 + $0x47c] sm:$0xff]
    %v248 = vld [vmem:[#allocation5 + $0x484] sm:$0xf]
    %v249 = vld [vmem:[#allocation5 + $0x488] sm:$0xff]
    %v250 = vld [vmem:[#allocation5 + $0x490] sm:$0xff]
    %v251 = vld [vmem:[#allocation5 + $0x498] sm:$0xf]
    %v252 = vld [vmem:[#allocation5 + $0x49c] sm:$0xff]
    %v253 = vld [vmem:[#allocation5 + $0x4a4] sm:$0xff]
    %v254 = vld [vmem:[#allocation5 + $0x4ac] sm:$0xf]
    %v255 = vld [vmem:[#allocation5 + $0x4b0] sm:$0xff]
    %v256 = vld [vmem:[#allocation5 + $0x4b8] sm:$0xff]
    %v257 = vld [vmem:[#allocation5 + $0x4c0] sm:$0xf]
    %v258 = vld [vmem:[#allocation5 + $0x4c4] sm:$0xff]
    %v259 = vld [vmem:[#allocation5 + $0x4cc] sm:$0xff]
    %v260 = vld [vmem:[#allocation5 + $0x4d4] sm:$0xf]
    %v261 = vld [vmem:[#allocation5 + $0x4d8] sm:$0xff]
    %v262 = vld [vmem:[#allocation5 + $0x4e0] sm:$0xff]
    %v263 = vld [vmem:[#allocation5 + $0x4e8] sm:$0xf]
    %v264 = vld [vmem:[#allocation5 + $0x4ec] sm:$0xff]
    %v265 = vld [vmem:[#allocation5 + $0x4f4] sm:$0xff]
    %v266 = vld [vmem:[#allocation5 + $0x4fc] sm:$0xf]
    %v267 = vld [vmem:[#allocation5 + $0x500] sm:$0xff]
    %v268 = vld [vmem:[#allocation5 + $0x508] sm:$0xff]
    %v269 = vld [vmem:[#allocation5 + $0x510] sm:$0xf]
    %v270 = vld [vmem:[#allocation5 + $0x514] sm:$0xff]
    %v271 = vld [vmem:[#allocation5 + $0x51c] sm:$0xff]
    %v272 = vld [vmem:[#allocation5 + $0x524] sm:$0xf]
    %v273 = vld [vmem:[#allocation5 + $0x528] sm:$0xff]
    %v274 = vld [vmem:[#allocation5 + $0x530] sm:$0xff]
    %v275 = vld [vmem:[#allocation5 + $0x538] sm:$0xf]
    %v276 = vld [vmem:[#allocation5 + $0x53c] sm:$0xff]
    %v277 = vld [vmem:[#allocation5 + $0x544] sm:$0xff]
    %v278 = vld [vmem:[#allocation5 + $0x54c] sm:$0xf]
    %v279 = vld [vmem:[#allocation5 + $0x550] sm:$0xff]
    %v280 = vld [vmem:[#allocation5 + $0x558] sm:$0xff]
    %v281 = vld [vmem:[#allocation5 + $0x560] sm:$0xf]
    %v282 = vld [vmem:[#allocation5 + $0x564] sm:$0xff]
    %v283 = vld [vmem:[#allocation5 + $0x56c] sm:$0xff]
    %v284 = vld [vmem:[#allocation5 + $0x574] sm:$0xf]
    %v285 = vld [vmem:[#allocation5 + $0x578] sm:$0xff]
    %v286 = vld [vmem:[#allocation5 + $0x580] sm:$0xff]
    %v287 = vld [vmem:[#allocation5 + $0x588] sm:$0xf]
    %v288 = vld [vmem:[#allocation5 + $0x58c] sm:$0xff]
    %v289 = vld [vmem:[#allocation5 + $0x594] sm:$0xff]
    %v290 = vld [vmem:[#allocation5 + $0x59c] sm:$0xf]
    %v291 = vld [vmem:[#allocation5 + $0x5a0] sm:$0xff]
    %v292 = vld [vmem:[#allocation5 + $0x5a8] sm:$0xff]
    %v293 = vld [vmem:[#allocation5 + $0x5b0] sm:$0xf]
    %v294 = vld [vmem:[#allocation5 + $0x5b4] sm:$0xff]
    %v295 = vld [vmem:[#allocation5 + $0x5bc] sm:$0xff]
    %v296 = vld [vmem:[#allocation5 + $0x5c4] sm:$0xf]
    %v297 = vld [vmem:[#allocation5 + $0x5c8] sm:$0xff]
    %v298 = vld [vmem:[#allocation5 + $0x5d0] sm:$0xff]
    %v299 = vld [vmem:[#allocation5 + $0x5d8] sm:$0xf]
    %v300 = vld [vmem:[#allocation5 + $0x5dc] sm:$0xff]
    %v301 = vld [vmem:[#allocation5 + $0x5e4] sm:$0xff]
    %v302 = vld [vmem:[#allocation5 + $0x5ec] sm:$0xf]
    %v303 = vld [vmem:[#allocation5 + $0x5f0] sm:$0xff]
    %v304 = vld [vmem:[#allocation5 + $0x5f8] sm:$0xff]
    %v305 = vld [vmem:[#allocation5 + $0x600] sm:$0xf]
    %v306 = vld [vmem:[#allocation5 + $0x604] sm:$0xff]
    %v307 = vld [vmem:[#allocation5 + $0x60c] sm:$0xff]
    %v308 = vld [vmem:[#allocation5 + $0x614] sm:$0xf]
    %v309 = vld [vmem:[#allocation5 + $0x618] sm:$0xff]
    %v310 = vld [vmem:[#allocation5 + $0x620] sm:$0xff]
    %v311 = vld [vmem:[#allocation5 + $0x628] sm:$0xf]
    %v312 = vld [vmem:[#allocation5 + $0x62c] sm:$0xff]
    %v313 = vld [vmem:[#allocation5 + $0x634] sm:$0xff]
    %v314 = vld [vmem:[#allocation5 + $0x63c] sm:$0xf]
    %v318 = vunpack.c.l.b16 %v72
    %v319 = vunpack.c.h.b16 %v72
    %v320 = vunpack.c.l.b16 %v73
    %v321 = vunpack.c.h.b16 %v73
    %v322 = vunpack.c.l.b16 %v74
    %v323 = vpack.c.b16 %v318, %v318
    %v324 = vpack.c.b16 %v319, %v319
    %v325 = vpack.c.b16 %v320, %v320
    %v326 = vpack.c.b16 %v321, %v321
    %v327 = vpack.c.b16 %v322, %v322
    %v573 = vunpack.c.l.b16 %v75
    %v574 = vunpack.c.h.b16 %v75
    %v575 = vunpack.c.l.b16 %v76
    %v576 = vunpack.c.h.b16 %v76
    %v577 = vunpack.c.l.b16 %v77
    %v578 = vunpack.c.l.b16 %v78
    %v579 = vunpack.c.h.b16 %v78
    %v580 = vunpack.c.l.b16 %v79
    %v581 = vunpack.c.h.b16 %v79
    %v582 = vunpack.c.l.b16 %v80
    %v583 = vunpack.c.l.b16 %v81
    %v584 = vunpack.c.h.b16 %v81
    %v585 = vunpack.c.l.b16 %v82
    %v586 = vunpack.c.h.b16 %v82
    %v587 = vunpack.c.l.b16 %v83
    %v588 = vunpack.c.l.b16 %v84
    %v589 = vunpack.c.h.b16 %v84
    %v590 = vunpack.c.l.b16 %v85
    %v591 = vunpack.c.h.b16 %v85
    %v592 = vunpack.c.l.b16 %v86
    %v593 = vunpack.c.l.b16 %v87
    %v594 = vunpack.c.h.b16 %v87
    %v595 = vunpack.c.l.b16 %v88
    %v596 = vunpack.c.h.b16 %v88
    %v597 = vunpack.c.l.b16 %v89
    %v598 = vunpack.c.l.b16 %v90
    %v599 = vunpack.c.h.b16 %v90
    %v600 = vunpack.c.l.b16 %v91
    %v601 = vunpack.c.h.b16 %v91
    %v602 = vunpack.c.l.b16 %v92
    %v603 = vunpack.c.l.b16 %v93
    %v604 = vunpack.c.h.b16 %v93
    %v605 = vunpack.c.l.b16 %v94
    %v606 = vunpack.c.h.b16 %v94
    %v607 = vunpack.c.l.b16 %v95
    %v608 = vunpack.c.l.b16 %v96
    %v609 = vunpack.c.h.b16 %v96
    %v610 = vunpack.c.l.b16 %v97
    %v611 = vunpack.c.h.b16 %v97
    %v612 = vunpack.c.l.b16 %v98
    %v613 = vunpack.c.l.b16 %v99
    %v614 = vunpack.c.h.b16 %v99
    %v615 = vunpack.c.l.b16 %v100
    %v616 = vunpack.c.h.b16 %v100
    %v617 = vunpack.c.l.b16 %v101
    %v618 = vunpack.c.l.b16 %v102
    %v619 = vunpack.c.h.b16 %v102
    %v620 = vunpack.c.l.b16 %v103
    %v621 = vunpack.c.h.b16 %v103
    %v622 = vunpack.c.l.b16 %v104
    %v623 = vunpack.c.l.b16 %v105
    %v624 = vunpack.c.h.b16 %v105
    %v625 = vunpack.c.l.b16 %v106
    %v626 = vunpack.c.h.b16 %v106
    %v627 = vunpack.c.l.b16 %v107
    %v628 = vunpack.c.l.b16 %v108
    %v629 = vunpack.c.h.b16 %v108
    %v630 = vunpack.c.l.b16 %v109
    %v631 = vunpack.c.h.b16 %v109
    %v632 = vunpack.c.l.b16 %v110
    %v633 = vunpack.c.l.b16 %v111
    %v634 = vunpack.c.h.b16 %v111
    %v635 = vunpack.c.l.b16 %v112
    %v636 = vunpack.c.h.b16 %v112
    %v637 = vunpack.c.l.b16 %v113
    %v638 = vunpack.c.l.b16 %v114
    %v639 = vunpack.c.h.b16 %v114
    %v640 = vunpack.c.l.b16 %v115
    %v641 = vunpack.c.h.b16 %v115
    %v642 = vunpack.c.l.b16 %v116
    %v643 = vunpack.c.l.b16 %v117
    %v644 = vunpack.c.h.b16 %v117
    %v645 = vunpack.c.l.b16 %v118
    %v646 = vunpack.c.h.b16 %v118
    %v647 = vunpack.c.l.b16 %v119
    %v648 = vunpack.c.l.b16 %v120
    %v649 = vunpack.c.h.b16 %v120
    %v650 = vunpack.c.l.b16 %v121
    %v651 = vunpack.c.h.b16 %v121
    %v652 = vunpack.c.l.b16 %v122
    %v653 = vunpack.c.l.b16 %v123
    %v654 = vunpack.c.h.b16 %v123
    %v655 = vunpack.c.l.b16 %v124
    %v656 = vunpack.c.h.b16 %v124
    %v657 = vunpack.c.l.b16 %v125
    %v658 = vunpack.c.l.b16 %v126
    %v659 = vunpack.c.h.b16 %v126
    %v660 = vunpack.c.l.b16 %v127
    %v661 = vunpack.c.h.b16 %v127
    %v662 = vunpack.c.l.b16 %v128
    %v663 = vunpack.c.l.b16 %v129
    %v664 = vunpack.c.h.b16 %v129
    %v665 = vunpack.c.l.b16 %v130
    %v666 = vunpack.c.h.b16 %v130
    %v667 = vunpack.c.l.b16 %v131
    %v668 = vunpack.c.l.b16 %v132
    %v669 = vunpack.c.h.b16 %v132
    %v670 = vunpack.c.l.b16 %v133
    %v671 = vunpack.c.h.b16 %v133
    %v672 = vunpack.c.l.b16 %v134
    %v673 = vunpack.c.l.b16 %v135
    %v674 = vunpack.c.h.b16 %v135
    %v675 = vunpack.c.l.b16 %v136
    %v676 = vunpack.c.h.b16 %v136
    %v677 = vunpack.c.l.b16 %v137
    %v678 = vunpack.c.l.b16 %v138
    %v679 = vunpack.c.h.b16 %v138
    %v680 = vunpack.c.l.b16 %v139
    %v681 = vunpack.c.h.b16 %v139
    %v682 = vunpack.c.l.b16 %v140
    %v683 = vunpack.c.l.b16 %v141
    %v684 = vunpack.c.h.b16 %v141
    %v685 = vunpack.c.l.b16 %v142
    %v686 = vunpack.c.h.b16 %v142
    %v687 = vunpack.c.l.b16 %v143
    %v688 = vunpack.c.l.b16 %v144
    %v689 = vunpack.c.h.b16 %v144
    %v690 = vunpack.c.l.b16 %v145
    %v691 = vunpack.c.h.b16 %v145
    %v692 = vunpack.c.l.b16 %v146
    %v693 = vunpack.c.l.b16 %v147
    %v694 = vunpack.c.h.b16 %v147
    %v695 = vunpack.c.l.b16 %v148
    %v696 = vunpack.c.h.b16 %v148
    %v697 = vunpack.c.l.b16 %v149
    %v698 = vunpack.c.l.b16 %v150
    %v699 = vunpack.c.h.b16 %v150
    %v700 = vunpack.c.l.b16 %v151
    %v701 = vunpack.c.h.b16 %v151
    %v702 = vunpack.c.l.b16 %v152
    %v703 = vunpack.c.l.b16 %v153
    %v704 = vunpack.c.h.b16 %v153
    %v705 = vunpack.c.l.b16 %v154
    %v706 = vunpack.c.h.b16 %v154
    %v707 = vunpack.c.l.b16 %v155
    %v708 = vunpack.c.l.b16 %v156
    %v709 = vunpack.c.h.b16 %v156
    %v710 = vunpack.c.l.b16 %v157
    %v711 = vunpack.c.h.b16 %v157
    %v712 = vunpack.c.l.b16 %v158
    %v713 = vunpack.c.l.b16 %v159
    %v714 = vunpack.c.h.b16 %v159
    %v715 = vunpack.c.l.b16 %v160
    %v716 = vunpack.c.h.b16 %v160
    %v717 = vunpack.c.l.b16 %v161
    %v718 = vunpack.c.l.b16 %v162
    %v719 = vunpack.c.h.b16 %v162
    %v720 = vunpack.c.l.b16 %v163
    %v721 = vunpack.c.h.b16 %v163
    %v722 = vunpack.c.l.b16 %v164
    %v723 = vunpack.c.l.b16 %v165
    %v724 = vunpack.c.h.b16 %v165
    %v725 = vunpack.c.l.b16 %v166
    %v726 = vunpack.c.h.b16 %v166
    %v727 = vunpack.c.l.b16 %v167
    %v728 = vunpack.c.l.b16 %v168
    %v729 = vunpack.c.h.b16 %v168
    %v730 = vunpack.c.l.b16 %v169
    %v731 = vunpack.c.h.b16 %v169
    %v732 = vunpack.c.l.b16 %v170
    %v733 = vunpack.c.l.b16 %v171
    %v734 = vunpack.c.h.b16 %v171
    %v735 = vunpack.c.l.b16 %v172
    %v736 = vunpack.c.h.b16 %v172
    %v737 = vunpack.c.l.b16 %v173
    %v738 = vunpack.c.l.b16 %v174
    %v739 = vunpack.c.h.b16 %v174
    %v740 = vunpack.c.l.b16 %v175
    %v741 = vunpack.c.h.b16 %v175
    %v742 = vunpack.c.l.b16 %v176
    %v743 = vunpack.c.l.b16 %v177
    %v744 = vunpack.c.h.b16 %v177
    %v745 = vunpack.c.l.b16 %v178
    %v746 = vunpack.c.h.b16 %v178
    %v747 = vunpack.c.l.b16 %v179
    %v748 = vunpack.c.l.b16 %v180
    %v749 = vunpack.c.h.b16 %v180
    %v750 = vunpack.c.l.b16 %v181
    %v751 = vunpack.c.h.b16 %v181
    %v752 = vunpack.c.l.b16 %v182
    %v753 = vunpack.c.l.b16 %v183
    %v754 = vunpack.c.h.b16 %v183
    %v755 = vunpack.c.l.b16 %v184
    %v756 = vunpack.c.h.b16 %v184
    %v757 = vunpack.c.l.b16 %v185
    %v758 = vunpack.c.l.b16 %v186
    %v759 = vunpack.c.h.b16 %v186
    %v760 = vunpack.c.l.b16 %v187
    %v761 = vunpack.c.h.b16 %v187
    %v762 = vunpack.c.l.b16 %v188
    %v763 = vunpack.c.l.b16 %v189
    %v764 = vunpack.c.h.b16 %v189
    %v765 = vunpack.c.l.b16 %v190
    %v766 = vunpack.c.h.b16 %v190
    %v767 = vunpack.c.l.b16 %v191
    %v768 = vunpack.c.l.b16 %v192
    %v769 = vunpack.c.h.b16 %v192
    %v770 = vunpack.c.l.b16 %v193
    %v771 = vunpack.c.h.b16 %v193
    %v772 = vunpack.c.l.b16 %v194
    %v773 = vunpack.c.l.b16 %v195
    %v774 = vunpack.c.h.b16 %v195
    %v775 = vunpack.c.l.b16 %v196
    %v776 = vunpack.c.h.b16 %v196
    %v777 = vunpack.c.l.b16 %v197
    %v778 = vunpack.c.l.b16 %v198
    %v779 = vunpack.c.h.b16 %v198
    %v780 = vunpack.c.l.b16 %v199
    %v781 = vunpack.c.h.b16 %v199
    %v782 = vunpack.c.l.b16 %v200
    %v783 = vunpack.c.l.b16 %v201
    %v784 = vunpack.c.h.b16 %v201
    %v785 = vunpack.c.l.b16 %v202
    %v786 = vunpack.c.h.b16 %v202
    %v787 = vunpack.c.l.b16 %v203
    %v788 = vunpack.c.l.b16 %v204
    %v789 = vunpack.c.h.b16 %v204
    %v790 = vunpack.c.l.b16 %v205
    %v791 = vunpack.c.h.b16 %v205
    %v792 = vunpack.c.l.b16 %v206
    %v793 = vunpack.c.l.b16 %v207
    %v794 = vunpack.c.h.b16 %v207
    %v795 = vunpack.c.l.b16 %v208
    %v796 = vunpack.c.h.b16 %v208
    %v797 = vunpack.c.l.b16 %v209
    %v798 = vunpack.c.l.b16 %v210
    %v799 = vunpack.c.h.b16 %v210
    %v800 = vunpack.c.l.b16 %v211
    %v801 = vunpack.c.h.b16 %v211
    %v802 = vunpack.c.l.b16 %v212
    %v803 = vunpack.c.l.b16 %v213
    %v804 = vunpack.c.h.b16 %v213
    %v805 = vunpack.c.l.b16 %v214
    %v806 = vunpack.c.h.b16 %v214
    %v807 = vunpack.c.l.b16 %v215
    %v808 = vunpack.c.l.b16 %v216
    %v809 = vunpack.c.h.b16 %v216
    %v810 = vunpack.c.l.b16 %v217
    %v811 = vunpack.c.h.b16 %v217
    %v812 = vunpack.c.l.b16 %v218
    %v813 = vunpack.c.l.b16 %v219
    %v814 = vunpack.c.h.b16 %v219
    %v815 = vunpack.c.l.b16 %v220
    %v816 = vunpack.c.h.b16 %v220
    %v817 = vunpack.c.l.b16 %v221
    %v818 = vunpack.c.l.b16 %v222
    %v819 = vunpack.c.h.b16 %v222
    %v820 = vunpack.c.l.b16 %v223
    %v821 = vunpack.c.h.b16 %v223
    %v822 = vunpack.c.l.b16 %v224
    %v823 = vunpack.c.l.b16 %v225
    %v824 = vunpack.c.h.b16 %v225
    %v825 = vunpack.c.l.b16 %v226
    %v826 = vunpack.c.h.b16 %v226
    %v827 = vunpack.c.l.b16 %v227
    %v828 = vunpack.c.l.b16 %v228
    %v829 = vunpack.c.h.b16 %v228
    %v830 = vunpack.c.l.b16 %v229
    %v831 = vunpack.c.h.b16 %v229
    %v832 = vunpack.c.l.b16 %v230
    %v833 = vunpack.c.l.b16 %v231
    %v834 = vunpack.c.h.b16 %v231
    %v835 = vunpack.c.l.b16 %v232
    %v836 = vunpack.c.h.b16 %v232
    %v837 = vunpack.c.l.b16 %v233
    %v838 = vunpack.c.l.b16 %v234
    %v839 = vunpack.c.h.b16 %v234
    %v840 = vunpack.c.l.b16 %v235
    %v841 = vunpack.c.h.b16 %v235
    %v842 = vunpack.c.l.b16 %v236
    %v843 = vunpack.c.l.b16 %v237
    %v844 = vunpack.c.h.b16 %v237
    %v845 = vunpack.c.l.b16 %v238
    %v846 = vunpack.c.h.b16 %v238
    %v847 = vunpack.c.l.b16 %v239
    %v848 = vunpack.c.l.b16 %v240
    %v849 = vunpack.c.h.b16 %v240
    %v850 = vunpack.c.l.b16 %v241
    %v851 = vunpack.c.h.b16 %v241
    %v852 = vunpack.c.l.b16 %v242
    %v853 = vunpack.c.l.b16 %v243
    %v854 = vunpack.c.h.b16 %v243
    %v855 = vunpack.c.l.b16 %v244
    %v856 = vunpack.c.h.b16 %v244
    %v857 = vunpack.c.l.b16 %v245
    %v858 = vunpack.c.l.b16 %v246
    %v859 = vunpack.c.h.b16 %v246
    %v860 = vunpack.c.l.b16 %v247
    %v861 = vunpack.c.h.b16 %v247
    %v862 = vunpack.c.l.b16 %v248
    %v863 = vunpack.c.l.b16 %v249
    %v864 = vunpack.c.h.b16 %v249
    %v865 = vunpack.c.l.b16 %v250
    %v866 = vunpack.c.h.b16 %v250
    %v867 = vunpack.c.l.b16 %v251
    %v868 = vunpack.c.l.b16 %v252
    %v869 = vunpack.c.h.b16 %v252
    %v870 = vunpack.c.l.b16 %v253
    %v871 = vunpack.c.h.b16 %v253
    %v872 = vunpack.c.l.b16 %v254
    %v873 = vunpack.c.l.b16 %v255
    %v874 = vunpack.c.h.b16 %v255
    %v875 = vunpack.c.l.b16 %v256
    %v876 = vunpack.c.h.b16 %v256
    %v877 = vunpack.c.l.b16 %v257
    %v878 = vunpack.c.l.b16 %v258
    %v879 = vunpack.c.h.b16 %v258
    %v880 = vunpack.c.l.b16 %v259
    %v881 = vunpack.c.h.b16 %v259
    %v882 = vunpack.c.l.b16 %v260
    %v883 = vunpack.c.l.b16 %v261
    %v884 = vunpack.c.h.b16 %v261
    %v885 = vunpack.c.l.b16 %v262
    %v886 = vunpack.c.h.b16 %v262
    %v887 = vunpack.c.l.b16 %v263
    %v888 = vunpack.c.l.b16 %v264
    %v889 = vunpack.c.h.b16 %v264
    %v890 = vunpack.c.l.b16 %v265
    %v891 = vunpack.c.h.b16 %v265
    %v892 = vunpack.c.l.b16 %v266
    %v893 = vunpack.c.l.b16 %v267
    %v894 = vunpack.c.h.b16 %v267
    %v895 = vunpack.c.l.b16 %v268
    %v896 = vunpack.c.h.b16 %v268
    %v897 = vunpack.c.l.b16 %v269
    %v898 = vunpack.c.l.b16 %v270
    %v899 = vunpack.c.h.b16 %v270
    %v900 = vunpack.c.l.b16 %v271
    %v901 = vunpack.c.h.b16 %v271
    %v902 = vunpack.c.l.b16 %v272
    %v903 = vunpack.c.l.b16 %v273
    %v904 = vunpack.c.h.b16 %v273
    %v905 = vunpack.c.l.b16 %v274
    %v906 = vunpack.c.h.b16 %v274
    %v907 = vunpack.c.l.b16 %v275
    %v908 = vunpack.c.l.b16 %v276
    %v909 = vunpack.c.h.b16 %v276
    %v910 = vunpack.c.l.b16 %v277
    %v911 = vunpack.c.h.b16 %v277
    %v912 = vunpack.c.l.b16 %v278
    %v913 = vunpack.c.l.b16 %v279
    %v914 = vunpack.c.h.b16 %v279
    %v915 = vunpack.c.l.b16 %v280
    %v916 = vunpack.c.h.b16 %v280
    %v917 = vunpack.c.l.b16 %v281
    %v918 = vunpack.c.l.b16 %v282
    %v919 = vunpack.c.h.b16 %v282
    %v920 = vunpack.c.l.b16 %v283
    %v921 = vunpack.c.h.b16 %v283
    %v922 = vunpack.c.l.b16 %v284
    %v923 = vunpack.c.l.b16 %v285
    %v924 = vunpack.c.h.b16 %v285
    %v925 = vunpack.c.l.b16 %v286
    %v926 = vunpack.c.h.b16 %v286
    %v927 = vunpack.c.l.b16 %v287
    %v928 = vunpack.c.l.b16 %v288
    %v929 = vunpack.c.h.b16 %v288
    %v930 = vunpack.c.l.b16 %v289
    %v931 = vunpack.c.h.b16 %v289
    %v932 = vunpack.c.l.b16 %v290
    %v933 = vunpack.c.l.b16 %v291
    %v934 = vunpack.c.h.b16 %v291
    %v935 = vunpack.c.l.b16 %v292
    %v936 = vunpack.c.h.b16 %v292
    %v937 = vunpack.c.l.b16 %v293
    %v938 = vunpack.c.l.b16 %v294
    %v939 = vunpack.c.h.b16 %v294
    %v940 = vunpack.c.l.b16 %v295
    %v941 = vunpack.c.h.b16 %v295
    %v942 = vunpack.c.l.b16 %v296
    %v943 = vunpack.c.l.b16 %v297
    %v944 = vunpack.c.h.b16 %v297
    %v945 = vunpack.c.l.b16 %v298
    %v946 = vunpack.c.h.b16 %v298
    %v947 = vunpack.c.l.b16 %v299
    %v948 = vunpack.c.l.b16 %v300
    %v949 = vunpack.c.h.b16 %v300
    %v950 = vunpack.c.l.b16 %v301
    %v951 = vunpack.c.h.b16 %v301
    %v952 = vunpack.c.l.b16 %v302
    %v953 = vunpack.c.l.b16 %v303
    %v954 = vunpack.c.h.b16 %v303
    %v955 = vunpack.c.l.b16 %v304
    %v956 = vunpack.c.h.b16 %v304
    %v957 = vunpack.c.l.b16 %v305
    %v958 = vunpack.c.l.b16 %v306
    %v959 = vunpack.c.h.b16 %v306
    %v960 = vunpack.c.l.b16 %v307
    %v961 = vunpack.c.h.b16 %v307
    %v962 = vunpack.c.l.b16 %v308
    %v963 = vunpack.c.l.b16 %v309
    %v964 = vunpack.c.h.b16 %v309
    %v965 = vunpack.c.l.b16 %v310
    %v966 = vunpack.c.h.b16 %v310
    %v967 = vunpack.c.l.b16 %v311
    %v968 = vunpack.c.l.b16 %v312
    %v969 = vunpack.c.h.b16 %v312
    %v970 = vunpack.c.l.b16 %v313
    %v971 = vunpack.c.h.b16 %v313
    %v972 = vunpack.c.l.b16 %v314
    %v973 = vpack.c.b16 %v578, %v573
    %v974 = vpack.c.b16 %v579, %v574
    %v975 = vpack.c.b16 %v580, %v575
    %v976 = vpack.c.b16 %v581, %v576
    %v977 = vpack.c.b16 %v582, %v577
    %v978 = vpack.c.b16 %v588, %v583
    %v979 = vpack.c.b16 %v589, %v584
    %v980 = vpack.c.b16 %v590, %v585
    %v981 = vpack.c.b16 %v591, %v586
    %v982 = vpack.c.b16 %v592, %v587
    %v983 = vpack.c.b16 %v598, %v593
    %v984 = vpack.c.b16 %v599, %v594
    %v985 = vpack.c.b16 %v600, %v595
    %v986 = vpack.c.b16 %v601, %v596
    %v987 = vpack.c.b16 %v602, %v597
    %v988 = vpack.c.b16 %v608, %v603
    %v989 = vpack.c.b16 %v609, %v604
    %v990 = vpack.c.b16 %v610, %v605
    %v991 = vpack.c.b16 %v611, %v606
    %v992 = vpack.c.b16 %v612, %v607
    %v993 = vpack.c.b16 %v618, %v613
    %v994 = vpack.c.b16 %v619, %v614
    %v995 = vpack.c.b16 %v620, %v615
    %v996 = vpack.c.b16 %v621, %v616
    %v997 = vpack.c.b16 %v622, %v617
    %v998 = vpack.c.b16 %v628, %v623
    %v999 = vpack.c.b16 %v629, %v624
    %v1000 = vpack.c.b16 %v630, %v625
    %v1001 = vpack.c.b16 %v631, %v626
    %v1002 = vpack.c.b16 %v632, %v627
    %v1003 = vpack.c.b16 %v638, %v633
    %v1004 = vpack.c.b16 %v639, %v634
    %v1005 = vpack.c.b16 %v640, %v635
    %v1006 = vpack.c.b16 %v641, %v636
    %v1007 = vpack.c.b16 %v642, %v637
    %v1008 = vpack.c.b16 %v648, %v643
    %v1009 = vpack.c.b16 %v649, %v644
    %v1010 = vpack.c.b16 %v650, %v645
    %v1011 = vpack.c.b16 %v651, %v646
    %v1012 = vpack.c.b16 %v652, %v647
    %v1013 = vpack.c.b16 %v658, %v653
    %v1014 = vpack.c.b16 %v659, %v654
    %v1015 = vpack.c.b16 %v660, %v655
    %v1016 = vpack.c.b16 %v661, %v656
    %v1017 = vpack.c.b16 %v662, %v657
    %v1018 = vpack.c.b16 %v668, %v663
    %v1019 = vpack.c.b16 %v669, %v664
    %v1020 = vpack.c.b16 %v670, %v665
    %v1021 = vpack.c.b16 %v671, %v666
    %v1022 = vpack.c.b16 %v672, %v667
    %v1023 = vpack.c.b16 %v678, %v673
    %v1024 = vpack.c.b16 %v679, %v674
    %v1025 = vpack.c.b16 %v680, %v675
    %v1026 = vpack.c.b16 %v681, %v676
    %v1027 = vpack.c.b16 %v682, %v677
    %v1028 = vpack.c.b16 %v688, %v683
    %v1029 = vpack.c.b16 %v689, %v684
    %v1030 = vpack.c.b16 %v690, %v685
    %v1031 = vpack.c.b16 %v691, %v686
    %v1032 = vpack.c.b16 %v692, %v687
    %v1033 = vpack.c.b16 %v698, %v693
    %v1034 = vpack.c.b16 %v699, %v694
    %v1035 = vpack.c.b16 %v700, %v695
    %v1036 = vpack.c.b16 %v701, %v696
    %v1037 = vpack.c.b16 %v702, %v697
    %v1038 = vpack.c.b16 %v708, %v703
    %v1039 = vpack.c.b16 %v709, %v704
    %v1040 = vpack.c.b16 %v710, %v705
    %v1041 = vpack.c.b16 %v711, %v706
    %v1042 = vpack.c.b16 %v712, %v707
    %v1043 = vpack.c.b16 %v718, %v713
    %v1044 = vpack.c.b16 %v719, %v714
    %v1045 = vpack.c.b16 %v720, %v715
    %v1046 = vpack.c.b16 %v721, %v716
    %v1047 = vpack.c.b16 %v722, %v717
    %v1048 = vpack.c.b16 %v728, %v723
    %v1049 = vpack.c.b16 %v729, %v724
    %v1050 = vpack.c.b16 %v730, %v725
    %v1051 = vpack.c.b16 %v731, %v726
    %v1052 = vpack.c.b16 %v732, %v727
    %v1053 = vpack.c.b16 %v738, %v733
    %v1054 = vpack.c.b16 %v739, %v734
    %v1055 = vpack.c.b16 %v740, %v735
    %v1056 = vpack.c.b16 %v741, %v736
    %v1057 = vpack.c.b16 %v742, %v737
    %v1058 = vpack.c.b16 %v748, %v743
    %v1059 = vpack.c.b16 %v749, %v744
    %v1060 = vpack.c.b16 %v750, %v745
    %v1061 = vpack.c.b16 %v751, %v746
    %v1062 = vpack.c.b16 %v752, %v747
    %v1063 = vpack.c.b16 %v758, %v753
    %v1064 = vpack.c.b16 %v759, %v754
    %v1065 = vpack.c.b16 %v760, %v755
    %v1066 = vpack.c.b16 %v761, %v756
    %v1067 = vpack.c.b16 %v762, %v757
    %v1068 = vpack.c.b16 %v768, %v763
    %v1069 = vpack.c.b16 %v769, %v764
    %v1070 = vpack.c.b16 %v770, %v765
    %v1071 = vpack.c.b16 %v771, %v766
    %v1072 = vpack.c.b16 %v772, %v767
    %v1073 = vpack.c.b16 %v778, %v773
    %v1074 = vpack.c.b16 %v779, %v774
    %v1075 = vpack.c.b16 %v780, %v775
    %v1076 = vpack.c.b16 %v781, %v776
    %v1077 = vpack.c.b16 %v782, %v777
    %v1078 = vpack.c.b16 %v788, %v783
    %v1079 = vpack.c.b16 %v789, %v784
    %v1080 = vpack.c.b16 %v790, %v785
    %v1081 = vpack.c.b16 %v791, %v786
    %v1082 = vpack.c.b16 %v792, %v787
    %v1083 = vpack.c.b16 %v798, %v793
    %v1084 = vpack.c.b16 %v799, %v794
    %v1085 = vpack.c.b16 %v800, %v795
    %v1086 = vpack.c.b16 %v801, %v796
    %v1087 = vpack.c.b16 %v802, %v797
    %v1088 = vpack.c.b16 %v808, %v803
    %v1089 = vpack.c.b16 %v809, %v804
    %v1090 = vpack.c.b16 %v810, %v805
    %v1091 = vpack.c.b16 %v811, %v806
    %v1092 = vpack.c.b16 %v812, %v807
    %v1093 = vpack.c.b16 %v818, %v813
    %v1094 = vpack.c.b16 %v819, %v814
    %v1095 = vpack.c.b16 %v820, %v815
    %v1096 = vpack.c.b16 %v821, %v816
    %v1097 = vpack.c.b16 %v822, %v817
    %v1098 = vpack.c.b16 %v828, %v823
    %v1099 = vpack.c.b16 %v829, %v824
    %v1100 = vpack.c.b16 %v830, %v825
    %v1101 = vpack.c.b16 %v831, %v826
    %v1102 = vpack.c.b16 %v832, %v827
    %v1103 = vpack.c.b16 %v838, %v833
    %v1104 = vpack.c.b16 %v839, %v834
    %v1105 = vpack.c.b16 %v840, %v835
    %v1106 = vpack.c.b16 %v841, %v836
    %v1107 = vpack.c.b16 %v842, %v837
    %v1108 = vpack.c.b16 %v848, %v843
    %v1109 = vpack.c.b16 %v849, %v844
    %v1110 = vpack.c.b16 %v850, %v845
    %v1111 = vpack.c.b16 %v851, %v846
    %v1112 = vpack.c.b16 %v852, %v847
    %v1113 = vpack.c.b16 %v858, %v853
    %v1114 = vpack.c.b16 %v859, %v854
    %v1115 = vpack.c.b16 %v860, %v855
    %v1116 = vpack.c.b16 %v861, %v856
    %v1117 = vpack.c.b16 %v862, %v857
    %v1118 = vpack.c.b16 %v868, %v863
    %v1119 = vpack.c.b16 %v869, %v864
    %v1120 = vpack.c.b16 %v870, %v865
    %v1121 = vpack.c.b16 %v871, %v866
    %v1122 = vpack.c.b16 %v872, %v867
    %v1123 = vpack.c.b16 %v878, %v873
    %v1124 = vpack.c.b16 %v879, %v874
    %v1125 = vpack.c.b16 %v880, %v875
    %v1126 = vpack.c.b16 %v881, %v876
    %v1127 = vpack.c.b16 %v882, %v877
    %v1128 = vpack.c.b16 %v888, %v883
    %v1129 = vpack.c.b16 %v889, %v884
    %v1130 = vpack.c.b16 %v890, %v885
    %v1131 = vpack.c.b16 %v891, %v886
    %v1132 = vpack.c.b16 %v892, %v887
    %v1133 = vpack.c.b16 %v898, %v893
    %v1134 = vpack.c.b16 %v899, %v894
    %v1135 = vpack.c.b16 %v900, %v895
    %v1136 = vpack.c.b16 %v901, %v896
    %v1137 = vpack.c.b16 %v902, %v897
    %v1138 = vpack.c.b16 %v908, %v903
    %v1139 = vpack.c.b16 %v909, %v904
    %v1140 = vpack.c.b16 %v910, %v905
    %v1141 = vpack.c.b16 %v911, %v906
    %v1142 = vpack.c.b16 %v912, %v907
    %v1143 = vpack.c.b16 %v918, %v913
    %v1144 = vpack.c.b16 %v919, %v914
    %v1145 = vpack.c.b16 %v920, %v915
    %v1146 = vpack.c.b16 %v921, %v916
    %v1147 = vpack.c.b16 %v922, %v917
    %v1148 = vpack.c.b16 %v928, %v923
    %v1149 = vpack.c.b16 %v929, %v924
    %v1150 = vpack.c.b16 %v930, %v925
    %v1151 = vpack.c.b16 %v931, %v926
    %v1152 = vpack.c.b16 %v932, %v927
    %v1153 = vpack.c.b16 %v938, %v933
    %v1154 = vpack.c.b16 %v939, %v934
    %v1155 = vpack.c.b16 %v940, %v935
    %v1156 = vpack.c.b16 %v941, %v936
    %v1157 = vpack.c.b16 %v942, %v937
    %v1158 = vpack.c.b16 %v948, %v943
    %v1159 = vpack.c.b16 %v949, %v944
    %v1160 = vpack.c.b16 %v950, %v945
    %v1161 = vpack.c.b16 %v951, %v946
    %v1162 = vpack.c.b16 %v952, %v947
    %v1163 = vpack.c.b16 %v958, %v953
    %v1164 = vpack.c.b16 %v959, %v954
    %v1165 = vpack.c.b16 %v960, %v955
    %v1166 = vpack.c.b16 %v961, %v956
    %v1167 = vpack.c.b16 %v962, %v957
    %v1168 = vpack.c.b16 %v968, %v963
    %v1169 = vpack.c.b16 %v969, %v964
    %v1170 = vpack.c.b16 %v970, %v965
    %v1171 = vpack.c.b16 %v971, %v966
    %v1172 = vpack.c.b16 %v972, %v967
    %1373 = vmatprep.subr.bf16.mxu0 %v1009
    %1374 = vmatpush1.bf16.msra.mxu0 %v1008
    %1375 = vmatprep.subr.bf16.mxu0 %v1004
    %1376 = vmatpush1.bf16.msra.mxu0 %v1003
    %1377 = vmatprep.subr.bf16.mxu0 %v999
    %1378 = vmatpush1.bf16.msra.mxu0 %v998
    %1379 = vmatprep.subr.bf16.mxu0 %v994
    %1380 = vmatpush1.bf16.msra.mxu0 %v993
    %1381 = vmatprep.subr.bf16.mxu0 %v989
    %1382 = vmatpush1.bf16.msra.mxu0 %v988
    %1383 = vmatprep.subr.bf16.mxu0 %v984
    %1384 = vmatpush1.bf16.msra.mxu0 %v983
    %1385 = vmatprep.subr.bf16.mxu0 %v979
    %1386 = vmatpush1.bf16.msra.mxu0 %v978
    %1387 = vmatprep.subr.bf16.mxu0 %v974
    %1388 = vmatpush1.bf16.msra.mxu0 %v973
    %1389 = vmatprep.subr.bf16.mxu0 %v1049
    %1390 = vmatpush2.bf16.msra.mxu0 %v1048
    %1391 = vmatprep.subr.bf16.mxu0 %v1044
    %1392 = vmatpush2.bf16.msra.mxu0 %v1043
    %1393 = vmatprep.subr.bf16.mxu0 %v1039
    %1394 = vmatpush2.bf16.msra.mxu0 %v1038
    %1395 = vmatprep.subr.bf16.mxu0 %v1034
    %1396 = vmatpush2.bf16.msra.mxu0 %v1033
    %1397 = vmatprep.subr.bf16.mxu0 %v1029
    %1398 = vmatpush2.bf16.msra.mxu0 %v1028
    %1399 = vmatprep.subr.bf16.mxu0 %v1024
    %1400 = vmatpush2.bf16.msra.mxu0 %v1023
    %1401 = vmatprep.subr.bf16.mxu0 %v1019
    %1402 = vmatpush2.bf16.msra.mxu0 %v1018
    %1403 = vmatprep.subr.bf16.mxu0 %v1014
    %1404 = vmatpush2.bf16.msra.mxu0 %v1013
    %1405 = vmatprep.mubr.bf16.mxu0 %v324
    %1406 = vmatmul.mubr.bf16.gmra.mxu0 %v323
    %v1407 = vpop.f32.mrf.mxu0
    %v1408 = vadd.f32 0.0, %v1407
    %v1409 = vpop.f32.mrf.mxu0
    %v1410 = vadd.f32 0.0, %v1409
    %v1411 = vpop.f32.mrf.mxu0
    %v1412 = vpop.f32.mrf.mxu0
    %1413 = vdwg.mxu0
    %1414 = vmatprep.subr.bf16.mxu0 %v1089
    %1415 = vmatpush1.bf16.msra.mxu0 %v1088
    %1416 = vmatprep.subr.bf16.mxu0 %v1084
    %1417 = vmatpush1.bf16.msra.mxu0 %v1083
    %1418 = vmatprep.subr.bf16.mxu0 %v1079
    %1419 = vmatpush1.bf16.msra.mxu0 %v1078
    %1420 = vmatprep.subr.bf16.mxu0 %v1074
    %1421 = vmatpush1.bf16.msra.mxu0 %v1073
    %1422 = vmatprep.subr.bf16.mxu0 %v1069
    %1423 = vmatpush1.bf16.msra.mxu0 %v1068
    %1424 = vmatprep.subr.bf16.mxu0 %v1064
    %1425 = vmatpush1.bf16.msra.mxu0 %v1063
    %1426 = vmatprep.subr.bf16.mxu0 %v1059
    %1427 = vmatpush1.bf16.msra.mxu0 %v1058
    %1428 = vmatprep.subr.bf16.mxu0 %v1054
    %1429 = vmatpush1.bf16.msra.mxu0 %v1053
    %1430 = vmatprep.subr.bf16.mxu0 %v1129
    %1431 = vmatpush2.bf16.msra.mxu0 %v1128
    %1432 = vmatprep.subr.bf16.mxu0 %v1124
    %1433 = vmatpush2.bf16.msra.mxu0 %v1123
    %1434 = vmatprep.subr.bf16.mxu0 %v1119
    %1435 = vmatpush2.bf16.msra.mxu0 %v1118
    %1436 = vmatprep.subr.bf16.mxu0 %v1114
    %1437 = vmatpush2.bf16.msra.mxu0 %v1113
    %1438 = vmatprep.subr.bf16.mxu0 %v1109
    %1439 = vmatpush2.bf16.msra.mxu0 %v1108
    %1440 = vmatprep.subr.bf16.mxu0 %v1104
    %1441 = vmatpush2.bf16.msra.mxu0 %v1103
    %1442 = vmatprep.subr.bf16.mxu0 %v1099
    %1443 = vmatpush2.bf16.msra.mxu0 %v1098
    %1444 = vmatprep.subr.bf16.mxu0 %v1094
    %1445 = vmatpush2.bf16.msra.mxu0 %v1093
    %1446 = vmatprep.mubr.bf16.mxu0 %v326
    %1447 = vmatmul.mubr.bf16.gmra.mxu0 %v325
    %v1448 = vpop.f32.mrf.mxu0
    %v1449 = vadd.f32 %v1408, %v1448
    %v1450 = vpop.f32.mrf.mxu0
    %v1451 = vadd.f32 %v1410, %v1450
    %v1452 = vpop.f32.mrf.mxu0
    %v1453 = vpop.f32.mrf.mxu0
    %1454 = vdwg.mxu0
    %1455 = vmatprep.subr.bf16.mxu0 %v1169
    %1456 = vmatpush1.bf16.msra.mxu0 %v1168
    %1457 = vmatprep.subr.bf16.mxu0 %v1164
    %1458 = vmatpush1.bf16.msra.mxu0 %v1163
    %1459 = vmatprep.subr.bf16.mxu0 %v1159
    %1460 = vmatpush1.bf16.msra.mxu0 %v1158
    %1461 = vmatprep.subr.bf16.mxu0 %v1154
    %1462 = vmatpush1.bf16.msra.mxu0 %v1153
    %1463 = vmatprep.subr.bf16.mxu0 %v1149
    %1464 = vmatpush1.bf16.msra.mxu0 %v1148
    %1465 = vmatprep.subr.bf16.mxu0 %v1144
    %1466 = vmatpush1.bf16.msra.mxu0 %v1143
    %1467 = vmatprep.subr.bf16.mxu0 %v1139
    %1468 = vmatpush1.bf16.msra.mxu0 %v1138
    %1469 = vmatprep.subr.bf16.mxu0 %v1134
    %1470 = vmatpush1.bf16.msra.mxu0 %v1133
    %1471 = vmatprep.subr.bf16.mxu0 0
    %1472 = vmatpush2.bf16.msra.mxu0 0
    %1473 = vmatprep.subr.bf16.mxu0 0
    %1474 = vmatpush2.bf16.msra.mxu0 0
    %1475 = vmatprep.subr.bf16.mxu0 0
    %1476 = vmatpush2.bf16.msra.mxu0 0
    %1477 = vmatprep.subr.bf16.mxu0 0
    %1478 = vmatpush2.bf16.msra.mxu0 0
    %1479 = vmatprep.subr.bf16.mxu0 0
    %1480 = vmatpush2.bf16.msra.mxu0 0
    %1481 = vmatprep.subr.bf16.mxu0 0
    %1482 = vmatpush2.bf16.msra.mxu0 0
    %1483 = vmatprep.subr.bf16.mxu0 0
    %1484 = vmatpush2.bf16.msra.mxu0 0
    %1485 = vmatprep.subr.bf16.mxu0 0
    %1486 = vmatpush2.bf16.msra.mxu0 0
    %1487 = vmatprep.mubr.bf16.mxu0 0
    %1488 = vmatmul.mubr.bf16.gmra.mxu0 %v327
    %v1489 = vpop.f32.mrf.mxu0
    %v1490 = vadd.f32 %v1449, %v1489
    %v1491 = vpop.f32.mrf.mxu0
    %v1492 = vadd.f32 %v1451, %v1491
    %v1493 = vpop.f32.mrf.mxu0
    %v1494 = vpop.f32.mrf.mxu0
    %1495 = vdwg.mxu0
    %1496 = vmatprep.subr.bf16.mxu0 %v1011
    %1497 = vmatpush1.bf16.msra.mxu0 %v1010
    %1498 = vmatprep.subr.bf16.mxu0 %v1006
    %1499 = vmatpush1.bf16.msra.mxu0 %v1005
    %1500 = vmatprep.subr.bf16.mxu0 %v1001
    %1501 = vmatpush1.bf16.msra.mxu0 %v1000
    %1502 = vmatprep.subr.bf16.mxu0 %v996
    %1503 = vmatpush1.bf16.msra.mxu0 %v995
    %1504 = vmatprep.subr.bf16.mxu0 %v991
    %1505 = vmatpush1.bf16.msra.mxu0 %v990
    %1506 = vmatprep.subr.bf16.mxu0 %v986
    %1507 = vmatpush1.bf16.msra.mxu0 %v985
    %1508 = vmatprep.subr.bf16.mxu0 %v981
    %1509 = vmatpush1.bf16.msra.mxu0 %v980
    %1510 = vmatprep.subr.bf16.mxu0 %v976
    %1511 = vmatpush1.bf16.msra.mxu0 %v975
    %1512 = vmatprep.subr.bf16.mxu0 %v1051
    %1513 = vmatpush2.bf16.msra.mxu0 %v1050
    %1514 = vmatprep.subr.bf16.mxu0 %v1046
    %1515 = vmatpush2.bf16.msra.mxu0 %v1045
    %1516 = vmatprep.subr.bf16.mxu0 %v1041
    %1517 = vmatpush2.bf16.msra.mxu0 %v1040
    %1518 = vmatprep.subr.bf16.mxu0 %v1036
    %1519 = vmatpush2.bf16.msra.mxu0 %v1035
    %1520 = vmatprep.subr.bf16.mxu0 %v1031
    %1521 = vmatpush2.bf16.msra.mxu0 %v1030
    %1522 = vmatprep.subr.bf16.mxu0 %v1026
    %1523 = vmatpush2.bf16.msra.mxu0 %v1025
    %1524 = vmatprep.subr.bf16.mxu0 %v1021
    %1525 = vmatpush2.bf16.msra.mxu0 %v1020
    %1526 = vmatprep.subr.bf16.mxu0 %v1016
    %1527 = vmatpush2.bf16.msra.mxu0 %v1015
    %1528 = vmatprep.mubr.bf16.mxu0 %v324
    %1529 = vmatmul.mubr.bf16.gmra.mxu0 %v323
    %v1530 = vpop.f32.mrf.mxu0
    %v1531 = vadd.f32 0.0, %v1530
    %v1532 = vpop.f32.mrf.mxu0
    %v1533 = vadd.f32 0.0, %v1532
    %v1534 = vpop.f32.mrf.mxu0
    %v1535 = vpop.f32.mrf.mxu0
    %1536 = vdwg.mxu0
    %1537 = vmatprep.subr.bf16.mxu0 %v1091
    %1538 = vmatpush1.bf16.msra.mxu0 %v1090
    %1539 = vmatprep.subr.bf16.mxu0 %v1086
    %1540 = vmatpush1.bf16.msra.mxu0 %v1085
    %1541 = vmatprep.subr.bf16.mxu0 %v1081
    %1542 = vmatpush1.bf16.msra.mxu0 %v1080
    %1543 = vmatprep.subr.bf16.mxu0 %v1076
    %1544 = vmatpush1.bf16.msra.mxu0 %v1075
    %1545 = vmatprep.subr.bf16.mxu0 %v1071
    %1546 = vmatpush1.bf16.msra.mxu0 %v1070
    %1547 = vmatprep.subr.bf16.mxu0 %v1066
    %1548 = vmatpush1.bf16.msra.mxu0 %v1065
    %1549 = vmatprep.subr.bf16.mxu0 %v1061
    %1550 = vmatpush1.bf16.msra.mxu0 %v1060
    %1551 = vmatprep.subr.bf16.mxu0 %v1056
    %1552 = vmatpush1.bf16.msra.mxu0 %v1055
    %1553 = vmatprep.subr.bf16.mxu0 %v1131
    %1554 = vmatpush2.bf16.msra.mxu0 %v1130
    %1555 = vmatprep.subr.bf16.mxu0 %v1126
    %1556 = vmatpush2.bf16.msra.mxu0 %v1125
    %1557 = vmatprep.subr.bf16.mxu0 %v1121
    %1558 = vmatpush2.bf16.msra.mxu0 %v1120
    %1559 = vmatprep.subr.bf16.mxu0 %v1116
    %1560 = vmatpush2.bf16.msra.mxu0 %v1115
    %1561 = vmatprep.subr.bf16.mxu0 %v1111
    %1562 = vmatpush2.bf16.msra.mxu0 %v1110
    %1563 = vmatprep.subr.bf16.mxu0 %v1106
    %1564 = vmatpush2.bf16.msra.mxu0 %v1105
    %1565 = vmatprep.subr.bf16.mxu0 %v1101
    %1566 = vmatpush2.bf16.msra.mxu0 %v1100
    %1567 = vmatprep.subr.bf16.mxu0 %v1096
    %1568 = vmatpush2.bf16.msra.mxu0 %v1095
    %1569 = vmatprep.mubr.bf16.mxu0 %v326
    %1570 = vmatmul.mubr.bf16.gmra.mxu0 %v325
    %v1571 = vpop.f32.mrf.mxu0
    %v1572 = vadd.f32 %v1531, %v1571
    %v1573 = vpop.f32.mrf.mxu0
    %v1574 = vadd.f32 %v1533, %v1573
    %v1575 = vpop.f32.mrf.mxu0
    %v1576 = vpop.f32.mrf.mxu0
    %1577 = vdwg.mxu0
    %1578 = vmatprep.subr.bf16.mxu0 %v1171
    %1579 = vmatpush1.bf16.msra.mxu0 %v1170
    %1580 = vmatprep.subr.bf16.mxu0 %v1166
    %1581 = vmatpush1.bf16.msra.mxu0 %v1165
    %1582 = vmatprep.subr.bf16.mxu0 %v1161
    %1583 = vmatpush1.bf16.msra.mxu0 %v1160
    %1584 = vmatprep.subr.bf16.mxu0 %v1156
    %1585 = vmatpush1.bf16.msra.mxu0 %v1155
    %1586 = vmatprep.subr.bf16.mxu0 %v1151
    %1587 = vmatpush1.bf16.msra.mxu0 %v1150
    %1588 = vmatprep.subr.bf16.mxu0 %v1146
    %1589 = vmatpush1.bf16.msra.mxu0 %v1145
    %1590 = vmatprep.subr.bf16.mxu0 %v1141
    %1591 = vmatpush1.bf16.msra.mxu0 %v1140
    %1592 = vmatprep.subr.bf16.mxu0 %v1136
    %1593 = vmatpush1.bf16.msra.mxu0 %v1135
    %1594 = vmatprep.subr.bf16.mxu0 0
    %1595 = vmatpush2.bf16.msra.mxu0 0
    %1596 = vmatprep.subr.bf16.mxu0 0
    %1597 = vmatpush2.bf16.msra.mxu0 0
    %1598 = vmatprep.subr.bf16.mxu0 0
    %1599 = vmatpush2.bf16.msra.mxu0 0
    %1600 = vmatprep.subr.bf16.mxu0 0
    %1601 = vmatpush2.bf16.msra.mxu0 0
    %1602 = vmatprep.subr.bf16.mxu0 0
    %1603 = vmatpush2.bf16.msra.mxu0 0
    %1604 = vmatprep.subr.bf16.mxu0 0
    %1605 = vmatpush2.bf16.msra.mxu0 0
    %1606 = vmatprep.subr.bf16.mxu0 0
    %1607 = vmatpush2.bf16.msra.mxu0 0
    %1608 = vmatprep.subr.bf16.mxu0 0
    %1609 = vmatpush2.bf16.msra.mxu0 0
    %1610 = vmatprep.mubr.bf16.mxu0 0
    %1611 = vmatmul.mubr.bf16.gmra.mxu0 %v327
    %v1612 = vpop.f32.mrf.mxu0
    %v1613 = vadd.f32 %v1572, %v1612
    %v1614 = vpop.f32.mrf.mxu0
    %v1615 = vadd.f32 %v1574, %v1614
    %v1616 = vpop.f32.mrf.mxu0
    %v1617 = vpop.f32.mrf.mxu0
    %1618 = vdwg.mxu0
    %1619 = vmatprep.subr.bf16.mxu0 0
    %1620 = vmatpush1.bf16.msra.mxu0 %v1012
    %1621 = vmatprep.subr.bf16.mxu0 0
    %1622 = vmatpush1.bf16.msra.mxu0 %v1007
    %1623 = vmatprep.subr.bf16.mxu0 0
    %1624 = vmatpush1.bf16.msra.mxu0 %v1002
    %1625 = vmatprep.subr.bf16.mxu0 0
    %1626 = vmatpush1.bf16.msra.mxu0 %v997
    %1627 = vmatprep.subr.bf16.mxu0 0
    %1628 = vmatpush1.bf16.msra.mxu0 %v992
    %1629 = vmatprep.subr.bf16.mxu0 0
    %1630 = vmatpush1.bf16.msra.mxu0 %v987
    %1631 = vmatprep.subr.bf16.mxu0 0
    %1632 = vmatpush1.bf16.msra.mxu0 %v982
    %1633 = vmatprep.subr.bf16.mxu0 0
    %1634 = vmatpush1.bf16.msra.mxu0 %v977
    %1635 = vmatprep.subr.bf16.mxu0 0
    %1636 = vmatpush2.bf16.msra.mxu0 %v1052
    %1637 = vmatprep.subr.bf16.mxu0 0
    %1638 = vmatpush2.bf16.msra.mxu0 %v1047
    %1639 = vmatprep.subr.bf16.mxu0 0
    %1640 = vmatpush2.bf16.msra.mxu0 %v1042
    %1641 = vmatprep.subr.bf16.mxu0 0
    %1642 = vmatpush2.bf16.msra.mxu0 %v1037
    %1643 = vmatprep.subr.bf16.mxu0 0
    %1644 = vmatpush2.bf16.msra.mxu0 %v1032
    %1645 = vmatprep.subr.bf16.mxu0 0
    %1646 = vmatpush2.bf16.msra.mxu0 %v1027
    %1647 = vmatprep.subr.bf16.mxu0 0
    %1648 = vmatpush2.bf16.msra.mxu0 %v1022
    %1649 = vmatprep.subr.bf16.mxu0 0
    %1650 = vmatpush2.bf16.msra.mxu0 %v1017
    %1651 = vmatprep.mubr.bf16.mxu0 %v324
    %1652 = vmatmul.mubr.bf16.gmra.mxu0 %v323
    %v1653 = vpop.f32.mrf.mxu0
    %v1654 = vadd.f32 0.0, %v1653
    %v1655 = vpop.f32.mrf.mxu0
    %v1656 = vpop.f32.mrf.mxu0
    %v1657 = vpop.f32.mrf.mxu0
    %1658 = vdwg.mxu0
    %1659 = vmatprep.subr.bf16.mxu0 0
    %1660 = vmatpush1.bf16.msra.mxu0 %v1092
    %1661 = vmatprep.subr.bf16.mxu0 0
    %1662 = vmatpush1.bf16.msra.mxu0 %v1087
    %1663 = vmatprep.subr.bf16.mxu0 0
    %1664 = vmatpush1.bf16.msra.mxu0 %v1082
    %1665 = vmatprep.subr.bf16.mxu0 0
    %1666 = vmatpush1.bf16.msra.mxu0 %v1077
    %1667 = vmatprep.subr.bf16.mxu0 0
    %1668 = vmatpush1.bf16.msra.mxu0 %v1072
    %1669 = vmatprep.subr.bf16.mxu0 0
    %1670 = vmatpush1.bf16.msra.mxu0 %v1067
    %1671 = vmatprep.subr.bf16.mxu0 0
    %1672 = vmatpush1.bf16.msra.mxu0 %v1062
    %1673 = vmatprep.subr.bf16.mxu0 0
    %1674 = vmatpush1.bf16.msra.mxu0 %v1057
    %1675 = vmatprep.subr.bf16.mxu0 0
    %1676 = vmatpush2.bf16.msra.mxu0 %v1132
    %1677 = vmatprep.subr.bf16.mxu0 0
    %1678 = vmatpush2.bf16.msra.mxu0 %v1127
    %1679 = vmatprep.subr.bf16.mxu0 0
    %1680 = vmatpush2.bf16.msra.mxu0 %v1122
    %1681 = vmatprep.subr.bf16.mxu0 0
    %1682 = vmatpush2.bf16.msra.mxu0 %v1117
    %1683 = vmatprep.subr.bf16.mxu0 0
    %1684 = vmatpush2.bf16.msra.mxu0 %v1112
    %1685 = vmatprep.subr.bf16.mxu0 0
    %1686 = vmatpush2.bf16.msra.mxu0 %v1107
    %1687 = vmatprep.subr.bf16.mxu0 0
    %1688 = vmatpush2.bf16.msra.mxu0 %v1102
    %1689 = vmatprep.subr.bf16.mxu0 0
    %1690 = vmatpush2.bf16.msra.mxu0 %v1097
    %1691 = vmatprep.mubr.bf16.mxu0 %v326
    %1692 = vmatmul.mubr.bf16.gmra.mxu0 %v325
    %v1693 = vpop.f32.mrf.mxu0
    %v1694 = vadd.f32 %v1654, %v1693
    %v1695 = vpop.f32.mrf.mxu0
    %v1696 = vpop.f32.mrf.mxu0
    %v1697 = vpop.f32.mrf.mxu0
    %1698 = vdwg.mxu0
    %1699 = vmatprep.subr.bf16.mxu0 0
    %1700 = vmatpush1.bf16.msra.mxu0 %v1172
    %1701 = vmatprep.subr.bf16.mxu0 0
    %1702 = vmatpush1.bf16.msra.mxu0 %v1167
    %1703 = vmatprep.subr.bf16.mxu0 0
    %1704 = vmatpush1.bf16.msra.mxu0 %v1162
    %1705 = vmatprep.subr.bf16.mxu0 0
    %1706 = vmatpush1.bf16.msra.mxu0 %v1157
    %1707 = vmatprep.subr.bf16.mxu0 0
    %1708 = vmatpush1.bf16.msra.mxu0 %v1152
    %1709 = vmatprep.subr.bf16.mxu0 0
    %1710 = vmatpush1.bf16.msra.mxu0 %v1147
    %1711 = vmatprep.subr.bf16.mxu0 0
    %1712 = vmatpush1.bf16.msra.mxu0 %v1142
    %1713 = vmatprep.subr.bf16.mxu0 0
    %1714 = vmatpush1.bf16.msra.mxu0 %v1137
    %1715 = vmatprep.subr.bf16.mxu0 0
    %1716 = vmatpush2.bf16.msra.mxu0 0
    %1717 = vmatprep.subr.bf16.mxu0 0
    %1718 = vmatpush2.bf16.msra.mxu0 0
    %1719 = vmatprep.subr.bf16.mxu0 0
    %1720 = vmatpush2.bf16.msra.mxu0 0
    %1721 = vmatprep.subr.bf16.mxu0 0
    %1722 = vmatpush2.bf16.msra.mxu0 0
    %1723 = vmatprep.subr.bf16.mxu0 0
    %1724 = vmatpush2.bf16.msra.mxu0 0
    %1725 = vmatprep.subr.bf16.mxu0 0
    %1726 = vmatpush2.bf16.msra.mxu0 0
    %1727 = vmatprep.subr.bf16.mxu0 0
    %1728 = vmatpush2.bf16.msra.mxu0 0
    %1729 = vmatprep.subr.bf16.mxu0 0
    %1730 = vmatpush2.bf16.msra.mxu0 0
    %1731 = vmatprep.mubr.bf16.mxu0 0
    %1732 = vmatmul.mubr.bf16.gmra.mxu0 %v327
    %v1733 = vpop.f32.mrf.mxu0
    %v1734 = vadd.f32 %v1694, %v1733
    %v1735 = vpop.f32.mrf.mxu0
    %v1736 = vpop.f32.mrf.mxu0
    %v1737 = vpop.f32.mrf.mxu0
    %1738 = vdwg.mxu0
    %v1739 = vmul.f32 %v1490, %v1490
    %v1740 = vmul.f32 %v1492, %v1492
    %v1741 = vmul.f32 %v1613, %v1613
    %v1742 = vmul.f32 %v1615, %v1615
    %v1743 = vmul.f32 %v1734, %v1734
    %v1744 = vld [vmem:[#allocation7] sm:$0xff]
    %v1745 = vld [vmem:[#allocation7 + $0x8] sm:$0xff]
    %v1746 = vld [vmem:[#allocation7 + $0x10] sm:$0xf]
    %v1747 = vld [vmem:[#allocation7 + $0x14] sm:$0xff]
    %v1748 = vld [vmem:[#allocation7 + $0x1c] sm:$0xff]
    %v1749 = vld [vmem:[#allocation7 + $0x24] sm:$0xf]
    %v1750 = vld [vmem:[#allocation7 + $0x28] sm:$0xff]
    %v1751 = vld [vmem:[#allocation7 + $0x30] sm:$0xff]
    %v1752 = vld [vmem:[#allocation7 + $0x38] sm:$0xf]
    %v1753 = vld [vmem:[#allocation7 + $0x3c] sm:$0xff]
    %v1754 = vld [vmem:[#allocation7 + $0x44] sm:$0xff]
    %v1755 = vld [vmem:[#allocation7 + $0x4c] sm:$0xf]
    %v1756 = vld [vmem:[#allocation7 + $0x50] sm:$0xff]
    %v1757 = vld [vmem:[#allocation7 + $0x58] sm:$0xff]
    %v1758 = vld [vmem:[#allocation7 + $0x60] sm:$0xf]
    %v1759 = vld [vmem:[#allocation7 + $0x64] sm:$0xff]
    %v1760 = vld [vmem:[#allocation7 + $0x6c] sm:$0xff]
    %v1761 = vld [vmem:[#allocation7 + $0x74] sm:$0xf]
    %v1762 = vld [vmem:[#allocation7 + $0x78] sm:$0xff]
    %v1763 = vld [vmem:[#allocation7 + $0x80] sm:$0xff]
    %v1764 = vld [vmem:[#allocation7 + $0x88] sm:$0xf]
    %v1765 = vld [vmem:[#allocation7 + $0x8c] sm:$0xff]
    %v1766 = vld [vmem:[#allocation7 + $0x94] sm:$0xff]
    %v1767 = vld [vmem:[#allocation7 + $0x9c] sm:$0xf]
    %v1768 = vld [vmem:[#allocation7 + $0xa0] sm:$0xff]
    %v1769 = vld [vmem:[#allocation7 + $0xa8] sm:$0xff]
    %v1770 = vld [vmem:[#allocation7 + $0xb0] sm:$0xf]
    %v1771 = vld [vmem:[#allocation7 + $0xb4] sm:$0xff]
    %v1772 = vld [vmem:[#allocation7 + $0xbc] sm:$0xff]
    %v1773 = vld [vmem:[#allocation7 + $0xc4] sm:$0xf]
    %v1774 = vld [vmem:[#allocation7 + $0xc8] sm:$0xff]
    %v1775 = vld [vmem:[#allocation7 + $0xd0] sm:$0xff]
    %v1776 = vld [vmem:[#allocation7 + $0xd8] sm:$0xf]
    %v1777 = vld [vmem:[#allocation7 + $0xdc] sm:$0xff]
    %v1778 = vld [vmem:[#allocation7 + $0xe4] sm:$0xff]
    %v1779 = vld [vmem:[#allocation7 + $0xec] sm:$0xf]
    %v1780 = vld [vmem:[#allocation7 + $0xf0] sm:$0xff]
    %v1781 = vld [vmem:[#allocation7 + $0xf8] sm:$0xff]
    %v1782 = vld [vmem:[#allocation7 + $0x100] sm:$0xf]
    %v1783 = vld [vmem:[#allocation7 + $0x104] sm:$0xff]
    %v1784 = vld [vmem:[#allocation7 + $0x10c] sm:$0xff]
    %v1785 = vld [vmem:[#allocation7 + $0x114] sm:$0xf]
    %v1786 = vld [vmem:[#allocation7 + $0x118] sm:$0xff]
    %v1787 = vld [vmem:[#allocation7 + $0x120] sm:$0xff]
    %v1788 = vld [vmem:[#allocation7 + $0x128] sm:$0xf]
    %v1789 = vld [vmem:[#allocation7 + $0x12c] sm:$0xff]
    %v1790 = vld [vmem:[#allocation7 + $0x134] sm:$0xff]
    %v1791 = vld [vmem:[#allocation7 + $0x13c] sm:$0xf]
    %v1792 = vld [vmem:[#allocation7 + $0x140] sm:$0xff]
    %v1793 = vld [vmem:[#allocation7 + $0x148] sm:$0xff]
    %v1794 = vld [vmem:[#allocation7 + $0x150] sm:$0xf]
    %v1795 = vld [vmem:[#allocation7 + $0x154] sm:$0xff]
    %v1796 = vld [vmem:[#allocation7 + $0x15c] sm:$0xff]
    %v1797 = vld [vmem:[#allocation7 + $0x164] sm:$0xf]
    %v1798 = vld [vmem:[#allocation7 + $0x168] sm:$0xff]
    %v1799 = vld [vmem:[#allocation7 + $0x170] sm:$0xff]
    %v1800 = vld [vmem:[#allocation7 + $0x178] sm:$0xf]
    %v1801 = vld [vmem:[#allocation7 + $0x17c] sm:$0xff]
    %v1802 = vld [vmem:[#allocation7 + $0x184] sm:$0xff]
    %v1803 = vld [vmem:[#allocation7 + $0x18c] sm:$0xf]
    %v1804 = vld [vmem:[#allocation7 + $0x190] sm:$0xff]
    %v1805 = vld [vmem:[#allocation7 + $0x198] sm:$0xff]
    %v1806 = vld [vmem:[#allocation7 + $0x1a0] sm:$0xf]
    %v1807 = vld [vmem:[#allocation7 + $0x1a4] sm:$0xff]
    %v1808 = vld [vmem:[#allocation7 + $0x1ac] sm:$0xff]
    %v1809 = vld [vmem:[#allocation7 + $0x1b4] sm:$0xf]
    %v1810 = vld [vmem:[#allocation7 + $0x1b8] sm:$0xff]
    %v1811 = vld [vmem:[#allocation7 + $0x1c0] sm:$0xff]
    %v1812 = vld [vmem:[#allocation7 + $0x1c8] sm:$0xf]
    %v1813 = vld [vmem:[#allocation7 + $0x1cc] sm:$0xff]
    %v1814 = vld [vmem:[#allocation7 + $0x1d4] sm:$0xff]
    %v1815 = vld [vmem:[#allocation7 + $0x1dc] sm:$0xf]
    %v1816 = vld [vmem:[#allocation7 + $0x1e0] sm:$0xff]
    %v1817 = vld [vmem:[#allocation7 + $0x1e8] sm:$0xff]
    %v1818 = vld [vmem:[#allocation7 + $0x1f0] sm:$0xf]
    %v1819 = vld [vmem:[#allocation7 + $0x1f4] sm:$0xff]
    %v1820 = vld [vmem:[#allocation7 + $0x1fc] sm:$0xff]
    %v1821 = vld [vmem:[#allocation7 + $0x204] sm:$0xf]
    %v1822 = vld [vmem:[#allocation7 + $0x208] sm:$0xff]
    %v1823 = vld [vmem:[#allocation7 + $0x210] sm:$0xff]
    %v1824 = vld [vmem:[#allocation7 + $0x218] sm:$0xf]
    %v1825 = vld [vmem:[#allocation7 + $0x21c] sm:$0xff]
    %v1826 = vld [vmem:[#allocation7 + $0x224] sm:$0xff]
    %v1827 = vld [vmem:[#allocation7 + $0x22c] sm:$0xf]
    %v1828 = vld [vmem:[#allocation7 + $0x230] sm:$0xff]
    %v1829 = vld [vmem:[#allocation7 + $0x238] sm:$0xff]
    %v1830 = vld [vmem:[#allocation7 + $0x240] sm:$0xf]
    %v1831 = vld [vmem:[#allocation7 + $0x244] sm:$0xff]
    %v1832 = vld [vmem:[#allocation7 + $0x24c] sm:$0xff]
    %v1833 = vld [vmem:[#allocation7 + $0x254] sm:$0xf]
    %v1834 = vld [vmem:[#allocation7 + $0x258] sm:$0xff]
    %v1835 = vld [vmem:[#allocation7 + $0x260] sm:$0xff]
    %v1836 = vld [vmem:[#allocation7 + $0x268] sm:$0xf]
    %v1837 = vld [vmem:[#allocation7 + $0x26c] sm:$0xff]
    %v1838 = vld [vmem:[#allocation7 + $0x274] sm:$0xff]
    %v1839 = vld [vmem:[#allocation7 + $0x27c] sm:$0xf]
    %v1840 = vld [vmem:[#allocation7 + $0x280] sm:$0xff]
    %v1841 = vld [vmem:[#allocation7 + $0x288] sm:$0xff]
    %v1842 = vld [vmem:[#allocation7 + $0x290] sm:$0xf]
    %v1843 = vld [vmem:[#allocation7 + $0x294] sm:$0xff]
    %v1844 = vld [vmem:[#allocation7 + $0x29c] sm:$0xff]
    %v1845 = vld [vmem:[#allocation7 + $0x2a4] sm:$0xf]
    %v1846 = vld [vmem:[#allocation7 + $0x2a8] sm:$0xff]
    %v1847 = vld [vmem:[#allocation7 + $0x2b0] sm:$0xff]
    %v1848 = vld [vmem:[#allocation7 + $0x2b8] sm:$0xf]
    %v1849 = vld [vmem:[#allocation7 + $0x2bc] sm:$0xff]
    %v1850 = vld [vmem:[#allocation7 + $0x2c4] sm:$0xff]
    %v1851 = vld [vmem:[#allocation7 + $0x2cc] sm:$0xf]
    %v1852 = vld [vmem:[#allocation7 + $0x2d0] sm:$0xff]
    %v1853 = vld [vmem:[#allocation7 + $0x2d8] sm:$0xff]
    %v1854 = vld [vmem:[#allocation7 + $0x2e0] sm:$0xf]
    %v1855 = vld [vmem:[#allocation7 + $0x2e4] sm:$0xff]
    %v1856 = vld [vmem:[#allocation7 + $0x2ec] sm:$0xff]
    %v1857 = vld [vmem:[#allocation7 + $0x2f4] sm:$0xf]
    %v1858 = vld [vmem:[#allocation7 + $0x2f8] sm:$0xff]
    %v1859 = vld [vmem:[#allocation7 + $0x300] sm:$0xff]
    %v1860 = vld [vmem:[#allocation7 + $0x308] sm:$0xf]
    %v1861 = vld [vmem:[#allocation7 + $0x30c] sm:$0xff]
    %v1862 = vld [vmem:[#allocation7 + $0x314] sm:$0xff]
    %v1863 = vld [vmem:[#allocation7 + $0x31c] sm:$0xf]
    %v1864 = vld [vmem:[#allocation7 + $0x320] sm:$0xff]
    %v1865 = vld [vmem:[#allocation7 + $0x328] sm:$0xff]
    %v1866 = vld [vmem:[#allocation7 + $0x330] sm:$0xf]
    %v1867 = vld [vmem:[#allocation7 + $0x334] sm:$0xff]
    %v1868 = vld [vmem:[#allocation7 + $0x33c] sm:$0xff]
    %v1869 = vld [vmem:[#allocation7 + $0x344] sm:$0xf]
    %v1870 = vld [vmem:[#allocation7 + $0x348] sm:$0xff]
    %v1871 = vld [vmem:[#allocation7 + $0x350] sm:$0xff]
    %v1872 = vld [vmem:[#allocation7 + $0x358] sm:$0xf]
    %v1873 = vld [vmem:[#allocation7 + $0x35c] sm:$0xff]
    %v1874 = vld [vmem:[#allocation7 + $0x364] sm:$0xff]
    %v1875 = vld [vmem:[#allocation7 + $0x36c] sm:$0xf]
    %v1876 = vld [vmem:[#allocation7 + $0x370] sm:$0xff]
    %v1877 = vld [vmem:[#allocation7 + $0x378] sm:$0xff]
    %v1878 = vld [vmem:[#allocation7 + $0x380] sm:$0xf]
    %v1879 = vld [vmem:[#allocation7 + $0x384] sm:$0xff]
    %v1880 = vld [vmem:[#allocation7 + $0x38c] sm:$0xff]
    %v1881 = vld [vmem:[#allocation7 + $0x394] sm:$0xf]
    %v1882 = vld [vmem:[#allocation7 + $0x398] sm:$0xff]
    %v1883 = vld [vmem:[#allocation7 + $0x3a0] sm:$0xff]
    %v1884 = vld [vmem:[#allocation7 + $0x3a8] sm:$0xf]
    %v1885 = vld [vmem:[#allocation7 + $0x3ac] sm:$0xff]
    %v1886 = vld [vmem:[#allocation7 + $0x3b4] sm:$0xff]
    %v1887 = vld [vmem:[#allocation7 + $0x3bc] sm:$0xf]
    %v1888 = vld [vmem:[#allocation7 + $0x3c0] sm:$0xff]
    %v1889 = vld [vmem:[#allocation7 + $0x3c8] sm:$0xff]
    %v1890 = vld [vmem:[#allocation7 + $0x3d0] sm:$0xf]
    %v1891 = vld [vmem:[#allocation7 + $0x3d4] sm:$0xff]
    %v1892 = vld [vmem:[#allocation7 + $0x3dc] sm:$0xff]
    %v1893 = vld [vmem:[#allocation7 + $0x3e4] sm:$0xf]
    %v1894 = vld [vmem:[#allocation7 + $0x3e8] sm:$0xff]
    %v1895 = vld [vmem:[#allocation7 + $0x3f0] sm:$0xff]
    %v1896 = vld [vmem:[#allocation7 + $0x3f8] sm:$0xf]
    %v1897 = vld [vmem:[#allocation7 + $0x3fc] sm:$0xff]
    %v1898 = vld [vmem:[#allocation7 + $0x404] sm:$0xff]
    %v1899 = vld [vmem:[#allocation7 + $0x40c] sm:$0xf]
    %v1900 = vld [vmem:[#allocation7 + $0x410] sm:$0xff]
    %v1901 = vld [vmem:[#allocation7 + $0x418] sm:$0xff]
    %v1902 = vld [vmem:[#allocation7 + $0x420] sm:$0xf]
    %v1903 = vld [vmem:[#allocation7 + $0x424] sm:$0xff]
    %v1904 = vld [vmem:[#allocation7 + $0x42c] sm:$0xff]
    %v1905 = vld [vmem:[#allocation7 + $0x434] sm:$0xf]
    %v1906 = vld [vmem:[#allocation7 + $0x438] sm:$0xff]
    %v1907 = vld [vmem:[#allocation7 + $0x440] sm:$0xff]
    %v1908 = vld [vmem:[#allocation7 + $0x448] sm:$0xf]
    %v1909 = vld [vmem:[#allocation7 + $0x44c] sm:$0xff]
    %v1910 = vld [vmem:[#allocation7 + $0x454] sm:$0xff]
    %v1911 = vld [vmem:[#allocation7 + $0x45c] sm:$0xf]
    %v1912 = vld [vmem:[#allocation7 + $0x460] sm:$0xff]
    %v1913 = vld [vmem:[#allocation7 + $0x468] sm:$0xff]
    %v1914 = vld [vmem:[#allocation7 + $0x470] sm:$0xf]
    %v1915 = vld [vmem:[#allocation7 + $0x474] sm:$0xff]
    %v1916 = vld [vmem:[#allocation7 + $0x47c] sm:$0xff]
    %v1917 = vld [vmem:[#allocation7 + $0x484] sm:$0xf]
    %v1918 = vld [vmem:[#allocation7 + $0x488] sm:$0xff]
    %v1919 = vld [vmem:[#allocation7 + $0x490] sm:$0xff]
    %v1920 = vld [vmem:[#allocation7 + $0x498] sm:$0xf]
    %v1921 = vld [vmem:[#allocation7 + $0x49c] sm:$0xff]
    %v1922 = vld [vmem:[#allocation7 + $0x4a4] sm:$0xff]
    %v1923 = vld [vmem:[#allocation7 + $0x4ac] sm:$0xf]
    %v1924 = vld [vmem:[#allocation7 + $0x4b0] sm:$0xff]
    %v1925 = vld [vmem:[#allocation7 + $0x4b8] sm:$0xff]
    %v1926 = vld [vmem:[#allocation7 + $0x4c0] sm:$0xf]
    %v1927 = vld [vmem:[#allocation7 + $0x4c4] sm:$0xff]
    %v1928 = vld [vmem:[#allocation7 + $0x4cc] sm:$0xff]
    %v1929 = vld [vmem:[#allocation7 + $0x4d4] sm:$0xf]
    %v1930 = vld [vmem:[#allocation7 + $0x4d8] sm:$0xff]
    %v1931 = vld [vmem:[#allocation7 + $0x4e0] sm:$0xff]
    %v1932 = vld [vmem:[#allocation7 + $0x4e8] sm:$0xf]
    %v1933 = vld [vmem:[#allocation7 + $0x4ec] sm:$0xff]
    %v1934 = vld [vmem:[#allocation7 + $0x4f4] sm:$0xff]
    %v1935 = vld [vmem:[#allocation7 + $0x4fc] sm:$0xf]
    %v1936 = vld [vmem:[#allocation7 + $0x500] sm:$0xff]
    %v1937 = vld [vmem:[#allocation7 + $0x508] sm:$0xff]
    %v1938 = vld [vmem:[#allocation7 + $0x510] sm:$0xf]
    %v1939 = vld [vmem:[#allocation7 + $0x514] sm:$0xff]
    %v1940 = vld [vmem:[#allocation7 + $0x51c] sm:$0xff]
    %v1941 = vld [vmem:[#allocation7 + $0x524] sm:$0xf]
    %v1942 = vld [vmem:[#allocation7 + $0x528] sm:$0xff]
    %v1943 = vld [vmem:[#allocation7 + $0x530] sm:$0xff]
    %v1944 = vld [vmem:[#allocation7 + $0x538] sm:$0xf]
    %v1945 = vld [vmem:[#allocation7 + $0x53c] sm:$0xff]
    %v1946 = vld [vmem:[#allocation7 + $0x544] sm:$0xff]
    %v1947 = vld [vmem:[#allocation7 + $0x54c] sm:$0xf]
    %v1948 = vld [vmem:[#allocation7 + $0x550] sm:$0xff]
    %v1949 = vld [vmem:[#allocation7 + $0x558] sm:$0xff]
    %v1950 = vld [vmem:[#allocation7 + $0x560] sm:$0xf]
    %v1951 = vld [vmem:[#allocation7 + $0x564] sm:$0xff]
    %v1952 = vld [vmem:[#allocation7 + $0x56c] sm:$0xff]
    %v1953 = vld [vmem:[#allocation7 + $0x574] sm:$0xf]
    %v1954 = vld [vmem:[#allocation7 + $0x578] sm:$0xff]
    %v1955 = vld [vmem:[#allocation7 + $0x580] sm:$0xff]
    %v1956 = vld [vmem:[#allocation7 + $0x588] sm:$0xf]
    %v1957 = vld [vmem:[#allocation7 + $0x58c] sm:$0xff]
    %v1958 = vld [vmem:[#allocation7 + $0x594] sm:$0xff]
    %v1959 = vld [vmem:[#allocation7 + $0x59c] sm:$0xf]
    %v1960 = vld [vmem:[#allocation7 + $0x5a0] sm:$0xff]
    %v1961 = vld [vmem:[#allocation7 + $0x5a8] sm:$0xff]
    %v1962 = vld [vmem:[#allocation7 + $0x5b0] sm:$0xf]
    %v1963 = vld [vmem:[#allocation7 + $0x5b4] sm:$0xff]
    %v1964 = vld [vmem:[#allocation7 + $0x5bc] sm:$0xff]
    %v1965 = vld [vmem:[#allocation7 + $0x5c4] sm:$0xf]
    %v1966 = vld [vmem:[#allocation7 + $0x5c8] sm:$0xff]
    %v1967 = vld [vmem:[#allocation7 + $0x5d0] sm:$0xff]
    %v1968 = vld [vmem:[#allocation7 + $0x5d8] sm:$0xf]
    %v1969 = vld [vmem:[#allocation7 + $0x5dc] sm:$0xff]
    %v1970 = vld [vmem:[#allocation7 + $0x5e4] sm:$0xff]
    %v1971 = vld [vmem:[#allocation7 + $0x5ec] sm:$0xf]
    %v1972 = vld [vmem:[#allocation7 + $0x5f0] sm:$0xff]
    %v1973 = vld [vmem:[#allocation7 + $0x5f8] sm:$0xff]
    %v1974 = vld [vmem:[#allocation7 + $0x600] sm:$0xf]
    %v1975 = vld [vmem:[#allocation7 + $0x604] sm:$0xff]
    %v1976 = vld [vmem:[#allocation7 + $0x60c] sm:$0xff]
    %v1977 = vld [vmem:[#allocation7 + $0x614] sm:$0xf]
    %v1978 = vld [vmem:[#allocation7 + $0x618] sm:$0xff]
    %v1979 = vld [vmem:[#allocation7 + $0x620] sm:$0xff]
    %v1980 = vld [vmem:[#allocation7 + $0x628] sm:$0xf]
    %v1981 = vld [vmem:[#allocation7 + $0x62c] sm:$0xff]
    %v1982 = vld [vmem:[#allocation7 + $0x634] sm:$0xff]
    %v1983 = vld [vmem:[#allocation7 + $0x63c] sm:$0xf]
    %v2224 = vunpack.c.l.b16 %v1744
    %v2225 = vunpack.c.h.b16 %v1744
    %v2226 = vunpack.c.l.b16 %v1745
    %v2227 = vunpack.c.h.b16 %v1745
    %v2228 = vunpack.c.l.b16 %v1746
    %v2229 = vunpack.c.l.b16 %v1747
    %v2230 = vunpack.c.h.b16 %v1747
    %v2231 = vunpack.c.l.b16 %v1748
    %v2232 = vunpack.c.h.b16 %v1748
    %v2233 = vunpack.c.l.b16 %v1749
    %v2234 = vunpack.c.l.b16 %v1750
    %v2235 = vunpack.c.h.b16 %v1750
    %v2236 = vunpack.c.l.b16 %v1751
    %v2237 = vunpack.c.h.b16 %v1751
    %v2238 = vunpack.c.l.b16 %v1752
    %v2239 = vunpack.c.l.b16 %v1753
    %v2240 = vunpack.c.h.b16 %v1753
    %v2241 = vunpack.c.l.b16 %v1754
    %v2242 = vunpack.c.h.b16 %v1754
    %v2243 = vunpack.c.l.b16 %v1755
    %v2244 = vunpack.c.l.b16 %v1756
    %v2245 = vunpack.c.h.b16 %v1756
    %v2246 = vunpack.c.l.b16 %v1757
    %v2247 = vunpack.c.h.b16 %v1757
    %v2248 = vunpack.c.l.b16 %v1758
    %v2249 = vunpack.c.l.b16 %v1759
    %v2250 = vunpack.c.h.b16 %v1759
    %v2251 = vunpack.c.l.b16 %v1760
    %v2252 = vunpack.c.h.b16 %v1760
    %v2253 = vunpack.c.l.b16 %v1761
    %v2254 = vunpack.c.l.b16 %v1762
    %v2255 = vunpack.c.h.b16 %v1762
    %v2256 = vunpack.c.l.b16 %v1763
    %v2257 = vunpack.c.h.b16 %v1763
    %v2258 = vunpack.c.l.b16 %v1764
    %v2259 = vunpack.c.l.b16 %v1765
    %v2260 = vunpack.c.h.b16 %v1765
    %v2261 = vunpack.c.l.b16 %v1766
    %v2262 = vunpack.c.h.b16 %v1766
    %v2263 = vunpack.c.l.b16 %v1767
    %v2264 = vunpack.c.l.b16 %v1768
    %v2265 = vunpack.c.h.b16 %v1768
    %v2266 = vunpack.c.l.b16 %v1769
    %v2267 = vunpack.c.h.b16 %v1769
    %v2268 = vunpack.c.l.b16 %v1770
    %v2269 = vunpack.c.l.b16 %v1771
    %v2270 = vunpack.c.h.b16 %v1771
    %v2271 = vunpack.c.l.b16 %v1772
    %v2272 = vunpack.c.h.b16 %v1772
    %v2273 = vunpack.c.l.b16 %v1773
    %v2274 = vunpack.c.l.b16 %v1774
    %v2275 = vunpack.c.h.b16 %v1774
    %v2276 = vunpack.c.l.b16 %v1775
    %v2277 = vunpack.c.h.b16 %v1775
    %v2278 = vunpack.c.l.b16 %v1776
    %v2279 = vunpack.c.l.b16 %v1777
    %v2280 = vunpack.c.h.b16 %v1777
    %v2281 = vunpack.c.l.b16 %v1778
    %v2282 = vunpack.c.h.b16 %v1778
    %v2283 = vunpack.c.l.b16 %v1779
    %v2284 = vunpack.c.l.b16 %v1780
    %v2285 = vunpack.c.h.b16 %v1780
    %v2286 = vunpack.c.l.b16 %v1781
    %v2287 = vunpack.c.h.b16 %v1781
    %v2288 = vunpack.c.l.b16 %v1782
    %v2289 = vunpack.c.l.b16 %v1783
    %v2290 = vunpack.c.h.b16 %v1783
    %v2291 = vunpack.c.l.b16 %v1784
    %v2292 = vunpack.c.h.b16 %v1784
    %v2293 = vunpack.c.l.b16 %v1785
    %v2294 = vunpack.c.l.b16 %v1786
    %v2295 = vunpack.c.h.b16 %v1786
    %v2296 = vunpack.c.l.b16 %v1787
    %v2297 = vunpack.c.h.b16 %v1787
    %v2298 = vunpack.c.l.b16 %v1788
    %v2299 = vunpack.c.l.b16 %v1789
    %v2300 = vunpack.c.h.b16 %v1789
    %v2301 = vunpack.c.l.b16 %v1790
    %v2302 = vunpack.c.h.b16 %v1790
    %v2303 = vunpack.c.l.b16 %v1791
    %v2304 = vunpack.c.l.b16 %v1792
    %v2305 = vunpack.c.h.b16 %v1792
    %v2306 = vunpack.c.l.b16 %v1793
    %v2307 = vunpack.c.h.b16 %v1793
    %v2308 = vunpack.c.l.b16 %v1794
    %v2309 = vunpack.c.l.b16 %v1795
    %v2310 = vunpack.c.h.b16 %v1795
    %v2311 = vunpack.c.l.b16 %v1796
    %v2312 = vunpack.c.h.b16 %v1796
    %v2313 = vunpack.c.l.b16 %v1797
    %v2314 = vunpack.c.l.b16 %v1798
    %v2315 = vunpack.c.h.b16 %v1798
    %v2316 = vunpack.c.l.b16 %v1799
    %v2317 = vunpack.c.h.b16 %v1799
    %v2318 = vunpack.c.l.b16 %v1800
    %v2319 = vunpack.c.l.b16 %v1801
    %v2320 = vunpack.c.h.b16 %v1801
    %v2321 = vunpack.c.l.b16 %v1802
    %v2322 = vunpack.c.h.b16 %v1802
    %v2323 = vunpack.c.l.b16 %v1803
    %v2324 = vunpack.c.l.b16 %v1804
    %v2325 = vunpack.c.h.b16 %v1804
    %v2326 = vunpack.c.l.b16 %v1805
    %v2327 = vunpack.c.h.b16 %v1805
    %v2328 = vunpack.c.l.b16 %v1806
    %v2329 = vunpack.c.l.b16 %v1807
    %v2330 = vunpack.c.h.b16 %v1807
    %v2331 = vunpack.c.l.b16 %v1808
    %v2332 = vunpack.c.h.b16 %v1808
    %v2333 = vunpack.c.l.b16 %v1809
    %v2334 = vunpack.c.l.b16 %v1810
    %v2335 = vunpack.c.h.b16 %v1810
    %v2336 = vunpack.c.l.b16 %v1811
    %v2337 = vunpack.c.h.b16 %v1811
    %v2338 = vunpack.c.l.b16 %v1812
    %v2339 = vunpack.c.l.b16 %v1813
    %v2340 = vunpack.c.h.b16 %v1813
    %v2341 = vunpack.c.l.b16 %v1814
    %v2342 = vunpack.c.h.b16 %v1814
    %v2343 = vunpack.c.l.b16 %v1815
    %v2344 = vunpack.c.l.b16 %v1816
    %v2345 = vunpack.c.h.b16 %v1816
    %v2346 = vunpack.c.l.b16 %v1817
    %v2347 = vunpack.c.h.b16 %v1817
    %v2348 = vunpack.c.l.b16 %v1818
    %v2349 = vunpack.c.l.b16 %v1819
    %v2350 = vunpack.c.h.b16 %v1819
    %v2351 = vunpack.c.l.b16 %v1820
    %v2352 = vunpack.c.h.b16 %v1820
    %v2353 = vunpack.c.l.b16 %v1821
    %v2354 = vunpack.c.l.b16 %v1822
    %v2355 = vunpack.c.h.b16 %v1822
    %v2356 = vunpack.c.l.b16 %v1823
    %v2357 = vunpack.c.h.b16 %v1823
    %v2358 = vunpack.c.l.b16 %v1824
    %v2359 = vunpack.c.l.b16 %v1825
    %v2360 = vunpack.c.h.b16 %v1825
    %v2361 = vunpack.c.l.b16 %v1826
    %v2362 = vunpack.c.h.b16 %v1826
    %v2363 = vunpack.c.l.b16 %v1827
    %v2364 = vunpack.c.l.b16 %v1828
    %v2365 = vunpack.c.h.b16 %v1828
    %v2366 = vunpack.c.l.b16 %v1829
    %v2367 = vunpack.c.h.b16 %v1829
    %v2368 = vunpack.c.l.b16 %v1830
    %v2369 = vunpack.c.l.b16 %v1831
    %v2370 = vunpack.c.h.b16 %v1831
    %v2371 = vunpack.c.l.b16 %v1832
    %v2372 = vunpack.c.h.b16 %v1832
    %v2373 = vunpack.c.l.b16 %v1833
    %v2374 = vunpack.c.l.b16 %v1834
    %v2375 = vunpack.c.h.b16 %v1834
    %v2376 = vunpack.c.l.b16 %v1835
    %v2377 = vunpack.c.h.b16 %v1835
    %v2378 = vunpack.c.l.b16 %v1836
    %v2379 = vunpack.c.l.b16 %v1837
    %v2380 = vunpack.c.h.b16 %v1837
    %v2381 = vunpack.c.l.b16 %v1838
    %v2382 = vunpack.c.h.b16 %v1838
    %v2383 = vunpack.c.l.b16 %v1839
    %v2384 = vunpack.c.l.b16 %v1840
    %v2385 = vunpack.c.h.b16 %v1840
    %v2386 = vunpack.c.l.b16 %v1841
    %v2387 = vunpack.c.h.b16 %v1841
    %v2388 = vunpack.c.l.b16 %v1842
    %v2389 = vunpack.c.l.b16 %v1843
    %v2390 = vunpack.c.h.b16 %v1843
    %v2391 = vunpack.c.l.b16 %v1844
    %v2392 = vunpack.c.h.b16 %v1844
    %v2393 = vunpack.c.l.b16 %v1845
    %v2394 = vunpack.c.l.b16 %v1846
    %v2395 = vunpack.c.h.b16 %v1846
    %v2396 = vunpack.c.l.b16 %v1847
    %v2397 = vunpack.c.h.b16 %v1847
    %v2398 = vunpack.c.l.b16 %v1848
    %v2399 = vunpack.c.l.b16 %v1849
    %v2400 = vunpack.c.h.b16 %v1849
    %v2401 = vunpack.c.l.b16 %v1850
    %v2402 = vunpack.c.h.b16 %v1850
    %v2403 = vunpack.c.l.b16 %v1851
    %v2404 = vunpack.c.l.b16 %v1852
    %v2405 = vunpack.c.h.b16 %v1852
    %v2406 = vunpack.c.l.b16 %v1853
    %v2407 = vunpack.c.h.b16 %v1853
    %v2408 = vunpack.c.l.b16 %v1854
    %v2409 = vunpack.c.l.b16 %v1855
    %v2410 = vunpack.c.h.b16 %v1855
    %v2411 = vunpack.c.l.b16 %v1856
    %v2412 = vunpack.c.h.b16 %v1856
    %v2413 = vunpack.c.l.b16 %v1857
    %v2414 = vunpack.c.l.b16 %v1858
    %v2415 = vunpack.c.h.b16 %v1858
    %v2416 = vunpack.c.l.b16 %v1859
    %v2417 = vunpack.c.h.b16 %v1859
    %v2418 = vunpack.c.l.b16 %v1860
    %v2419 = vunpack.c.l.b16 %v1861
    %v2420 = vunpack.c.h.b16 %v1861
    %v2421 = vunpack.c.l.b16 %v1862
    %v2422 = vunpack.c.h.b16 %v1862
    %v2423 = vunpack.c.l.b16 %v1863
    %v2424 = vunpack.c.l.b16 %v1864
    %v2425 = vunpack.c.h.b16 %v1864
    %v2426 = vunpack.c.l.b16 %v1865
    %v2427 = vunpack.c.h.b16 %v1865
    %v2428 = vunpack.c.l.b16 %v1866
    %v2429 = vunpack.c.l.b16 %v1867
    %v2430 = vunpack.c.h.b16 %v1867
    %v2431 = vunpack.c.l.b16 %v1868
    %v2432 = vunpack.c.h.b16 %v1868
    %v2433 = vunpack.c.l.b16 %v1869
    %v2434 = vunpack.c.l.b16 %v1870
    %v2435 = vunpack.c.h.b16 %v1870
    %v2436 = vunpack.c.l.b16 %v1871
    %v2437 = vunpack.c.h.b16 %v1871
    %v2438 = vunpack.c.l.b16 %v1872
    %v2439 = vunpack.c.l.b16 %v1873
    %v2440 = vunpack.c.h.b16 %v1873
    %v2441 = vunpack.c.l.b16 %v1874
    %v2442 = vunpack.c.h.b16 %v1874
    %v2443 = vunpack.c.l.b16 %v1875
    %v2444 = vunpack.c.l.b16 %v1876
    %v2445 = vunpack.c.h.b16 %v1876
    %v2446 = vunpack.c.l.b16 %v1877
    %v2447 = vunpack.c.h.b16 %v1877
    %v2448 = vunpack.c.l.b16 %v1878
    %v2449 = vunpack.c.l.b16 %v1879
    %v2450 = vunpack.c.h.b16 %v1879
    %v2451 = vunpack.c.l.b16 %v1880
    %v2452 = vunpack.c.h.b16 %v1880
    %v2453 = vunpack.c.l.b16 %v1881
    %v2454 = vunpack.c.l.b16 %v1882
    %v2455 = vunpack.c.h.b16 %v1882
    %v2456 = vunpack.c.l.b16 %v1883
    %v2457 = vunpack.c.h.b16 %v1883
    %v2458 = vunpack.c.l.b16 %v1884
    %v2459 = vunpack.c.l.b16 %v1885
    %v2460 = vunpack.c.h.b16 %v1885
    %v2461 = vunpack.c.l.b16 %v1886
    %v2462 = vunpack.c.h.b16 %v1886
    %v2463 = vunpack.c.l.b16 %v1887
    %v2464 = vunpack.c.l.b16 %v1888
    %v2465 = vunpack.c.h.b16 %v1888
    %v2466 = vunpack.c.l.b16 %v1889
    %v2467 = vunpack.c.h.b16 %v1889
    %v2468 = vunpack.c.l.b16 %v1890
    %v2469 = vunpack.c.l.b16 %v1891
    %v2470 = vunpack.c.h.b16 %v1891
    %v2471 = vunpack.c.l.b16 %v1892
    %v2472 = vunpack.c.h.b16 %v1892
    %v2473 = vunpack.c.l.b16 %v1893
    %v2474 = vunpack.c.l.b16 %v1894
    %v2475 = vunpack.c.h.b16 %v1894
    %v2476 = vunpack.c.l.b16 %v1895
    %v2477 = vunpack.c.h.b16 %v1895
    %v2478 = vunpack.c.l.b16 %v1896
    %v2479 = vunpack.c.l.b16 %v1897
    %v2480 = vunpack.c.h.b16 %v1897
    %v2481 = vunpack.c.l.b16 %v1898
    %v2482 = vunpack.c.h.b16 %v1898
    %v2483 = vunpack.c.l.b16 %v1899
    %v2484 = vunpack.c.l.b16 %v1900
    %v2485 = vunpack.c.h.b16 %v1900
    %v2486 = vunpack.c.l.b16 %v1901
    %v2487 = vunpack.c.h.b16 %v1901
    %v2488 = vunpack.c.l.b16 %v1902
    %v2489 = vunpack.c.l.b16 %v1903
    %v2490 = vunpack.c.h.b16 %v1903
    %v2491 = vunpack.c.l.b16 %v1904
    %v2492 = vunpack.c.h.b16 %v1904
    %v2493 = vunpack.c.l.b16 %v1905
    %v2494 = vunpack.c.l.b16 %v1906
    %v2495 = vunpack.c.h.b16 %v1906
    %v2496 = vunpack.c.l.b16 %v1907
    %v2497 = vunpack.c.h.b16 %v1907
    %v2498 = vunpack.c.l.b16 %v1908
    %v2499 = vunpack.c.l.b16 %v1909
    %v2500 = vunpack.c.h.b16 %v1909
    %v2501 = vunpack.c.l.b16 %v1910
    %v2502 = vunpack.c.h.b16 %v1910
    %v2503 = vunpack.c.l.b16 %v1911
    %v2504 = vunpack.c.l.b16 %v1912
    %v2505 = vunpack.c.h.b16 %v1912
    %v2506 = vunpack.c.l.b16 %v1913
    %v2507 = vunpack.c.h.b16 %v1913
    %v2508 = vunpack.c.l.b16 %v1914
    %v2509 = vunpack.c.l.b16 %v1915
    %v2510 = vunpack.c.h.b16 %v1915
    %v2511 = vunpack.c.l.b16 %v1916
    %v2512 = vunpack.c.h.b16 %v1916
    %v2513 = vunpack.c.l.b16 %v1917
    %v2514 = vunpack.c.l.b16 %v1918
    %v2515 = vunpack.c.h.b16 %v1918
    %v2516 = vunpack.c.l.b16 %v1919
    %v2517 = vunpack.c.h.b16 %v1919
    %v2518 = vunpack.c.l.b16 %v1920
    %v2519 = vunpack.c.l.b16 %v1921
    %v2520 = vunpack.c.h.b16 %v1921
    %v2521 = vunpack.c.l.b16 %v1922
    %v2522 = vunpack.c.h.b16 %v1922
    %v2523 = vunpack.c.l.b16 %v1923
    %v2524 = vunpack.c.l.b16 %v1924
    %v2525 = vunpack.c.h.b16 %v1924
    %v2526 = vunpack.c.l.b16 %v1925
    %v2527 = vunpack.c.h.b16 %v1925
    %v2528 = vunpack.c.l.b16 %v1926
    %v2529 = vunpack.c.l.b16 %v1927
    %v2530 = vunpack.c.h.b16 %v1927
    %v2531 = vunpack.c.l.b16 %v1928
    %v2532 = vunpack.c.h.b16 %v1928
    %v2533 = vunpack.c.l.b16 %v1929
    %v2534 = vunpack.c.l.b16 %v1930
    %v2535 = vunpack.c.h.b16 %v1930
    %v2536 = vunpack.c.l.b16 %v1931
    %v2537 = vunpack.c.h.b16 %v1931
    %v2538 = vunpack.c.l.b16 %v1932
    %v2539 = vunpack.c.l.b16 %v1933
    %v2540 = vunpack.c.h.b16 %v1933
    %v2541 = vunpack.c.l.b16 %v1934
    %v2542 = vunpack.c.h.b16 %v1934
    %v2543 = vunpack.c.l.b16 %v1935
    %v2544 = vunpack.c.l.b16 %v1936
    %v2545 = vunpack.c.h.b16 %v1936
    %v2546 = vunpack.c.l.b16 %v1937
    %v2547 = vunpack.c.h.b16 %v1937
    %v2548 = vunpack.c.l.b16 %v1938
    %v2549 = vunpack.c.l.b16 %v1939
    %v2550 = vunpack.c.h.b16 %v1939
    %v2551 = vunpack.c.l.b16 %v1940
    %v2552 = vunpack.c.h.b16 %v1940
    %v2553 = vunpack.c.l.b16 %v1941
    %v2554 = vunpack.c.l.b16 %v1942
    %v2555 = vunpack.c.h.b16 %v1942
    %v2556 = vunpack.c.l.b16 %v1943
    %v2557 = vunpack.c.h.b16 %v1943
    %v2558 = vunpack.c.l.b16 %v1944
    %v2559 = vunpack.c.l.b16 %v1945
    %v2560 = vunpack.c.h.b16 %v1945
    %v2561 = vunpack.c.l.b16 %v1946
    %v2562 = vunpack.c.h.b16 %v1946
    %v2563 = vunpack.c.l.b16 %v1947
    %v2564 = vunpack.c.l.b16 %v1948
    %v2565 = vunpack.c.h.b16 %v1948
    %v2566 = vunpack.c.l.b16 %v1949
    %v2567 = vunpack.c.h.b16 %v1949
    %v2568 = vunpack.c.l.b16 %v1950
    %v2569 = vunpack.c.l.b16 %v1951
    %v2570 = vunpack.c.h.b16 %v1951
    %v2571 = vunpack.c.l.b16 %v1952
    %v2572 = vunpack.c.h.b16 %v1952
    %v2573 = vunpack.c.l.b16 %v1953
    %v2574 = vunpack.c.l.b16 %v1954
    %v2575 = vunpack.c.h.b16 %v1954
    %v2576 = vunpack.c.l.b16 %v1955
    %v2577 = vunpack.c.h.b16 %v1955
    %v2578 = vunpack.c.l.b16 %v1956
    %v2579 = vunpack.c.l.b16 %v1957
    %v2580 = vunpack.c.h.b16 %v1957
    %v2581 = vunpack.c.l.b16 %v1958
    %v2582 = vunpack.c.h.b16 %v1958
    %v2583 = vunpack.c.l.b16 %v1959
    %v2584 = vunpack.c.l.b16 %v1960
    %v2585 = vunpack.c.h.b16 %v1960
    %v2586 = vunpack.c.l.b16 %v1961
    %v2587 = vunpack.c.h.b16 %v1961
    %v2588 = vunpack.c.l.b16 %v1962
    %v2589 = vunpack.c.l.b16 %v1963
    %v2590 = vunpack.c.h.b16 %v1963
    %v2591 = vunpack.c.l.b16 %v1964
    %v2592 = vunpack.c.h.b16 %v1964
    %v2593 = vunpack.c.l.b16 %v1965
    %v2594 = vunpack.c.l.b16 %v1966
    %v2595 = vunpack.c.h.b16 %v1966
    %v2596 = vunpack.c.l.b16 %v1967
    %v2597 = vunpack.c.h.b16 %v1967
    %v2598 = vunpack.c.l.b16 %v1968
    %v2599 = vunpack.c.l.b16 %v1969
    %v2600 = vunpack.c.h.b16 %v1969
    %v2601 = vunpack.c.l.b16 %v1970
    %v2602 = vunpack.c.h.b16 %v1970
    %v2603 = vunpack.c.l.b16 %v1971
    %v2604 = vunpack.c.l.b16 %v1972
    %v2605 = vunpack.c.h.b16 %v1972
    %v2606 = vunpack.c.l.b16 %v1973
    %v2607 = vunpack.c.h.b16 %v1973
    %v2608 = vunpack.c.l.b16 %v1974
    %v2609 = vunpack.c.l.b16 %v1975
    %v2610 = vunpack.c.h.b16 %v1975
    %v2611 = vunpack.c.l.b16 %v1976
    %v2612 = vunpack.c.h.b16 %v1976
    %v2613 = vunpack.c.l.b16 %v1977
    %v2614 = vunpack.c.l.b16 %v1978
    %v2615 = vunpack.c.h.b16 %v1978
    %v2616 = vunpack.c.l.b16 %v1979
    %v2617 = vunpack.c.h.b16 %v1979
    %v2618 = vunpack.c.l.b16 %v1980
    %v2619 = vunpack.c.l.b16 %v1981
    %v2620 = vunpack.c.h.b16 %v1981
    %v2621 = vunpack.c.l.b16 %v1982
    %v2622 = vunpack.c.h.b16 %v1982
    %v2623 = vunpack.c.l.b16 %v1983
    %v2624 = vpack.c.b16 %v2229, %v2224
    %v2625 = vpack.c.b16 %v2230, %v2225
    %v2626 = vpack.c.b16 %v2231, %v2226
    %v2627 = vpack.c.b16 %v2232, %v2227
    %v2628 = vpack.c.b16 %v2233, %v2228
    %v2629 = vpack.c.b16 %v2239, %v2234
    %v2630 = vpack.c.b16 %v2240, %v2235
    %v2631 = vpack.c.b16 %v2241, %v2236
    %v2632 = vpack.c.b16 %v2242, %v2237
    %v2633 = vpack.c.b16 %v2243, %v2238
    %v2634 = vpack.c.b16 %v2249, %v2244
    %v2635 = vpack.c.b16 %v2250, %v2245
    %v2636 = vpack.c.b16 %v2251, %v2246
    %v2637 = vpack.c.b16 %v2252, %v2247
    %v2638 = vpack.c.b16 %v2253, %v2248
    %v2639 = vpack.c.b16 %v2259, %v2254
    %v2640 = vpack.c.b16 %v2260, %v2255
    %v2641 = vpack.c.b16 %v2261, %v2256
    %v2642 = vpack.c.b16 %v2262, %v2257
    %v2643 = vpack.c.b16 %v2263, %v2258
    %v2644 = vpack.c.b16 %v2269, %v2264
    %v2645 = vpack.c.b16 %v2270, %v2265
    %v2646 = vpack.c.b16 %v2271, %v2266
    %v2647 = vpack.c.b16 %v2272, %v2267
    %v2648 = vpack.c.b16 %v2273, %v2268
    %v2649 = vpack.c.b16 %v2279, %v2274
    %v2650 = vpack.c.b16 %v2280, %v2275
    %v2651 = vpack.c.b16 %v2281, %v2276
    %v2652 = vpack.c.b16 %v2282, %v2277
    %v2653 = vpack.c.b16 %v2283, %v2278
    %v2654 = vpack.c.b16 %v2289, %v2284
    %v2655 = vpack.c.b16 %v2290, %v2285
    %v2656 = vpack.c.b16 %v2291, %v2286
    %v2657 = vpack.c.b16 %v2292, %v2287
    %v2658 = vpack.c.b16 %v2293, %v2288
    %v2659 = vpack.c.b16 %v2299, %v2294
    %v2660 = vpack.c.b16 %v2300, %v2295
    %v2661 = vpack.c.b16 %v2301, %v2296
    %v2662 = vpack.c.b16 %v2302, %v2297
    %v2663 = vpack.c.b16 %v2303, %v2298
    %v2664 = vpack.c.b16 %v2309, %v2304
    %v2665 = vpack.c.b16 %v2310, %v2305
    %v2666 = vpack.c.b16 %v2311, %v2306
    %v2667 = vpack.c.b16 %v2312, %v2307
    %v2668 = vpack.c.b16 %v2313, %v2308
    %v2669 = vpack.c.b16 %v2319, %v2314
    %v2670 = vpack.c.b16 %v2320, %v2315
    %v2671 = vpack.c.b16 %v2321, %v2316
    %v2672 = vpack.c.b16 %v2322, %v2317
    %v2673 = vpack.c.b16 %v2323, %v2318
    %v2674 = vpack.c.b16 %v2329, %v2324
    %v2675 = vpack.c.b16 %v2330, %v2325
    %v2676 = vpack.c.b16 %v2331, %v2326
    %v2677 = vpack.c.b16 %v2332, %v2327
    %v2678 = vpack.c.b16 %v2333, %v2328
    %v2679 = vpack.c.b16 %v2339, %v2334
    %v2680 = vpack.c.b16 %v2340, %v2335
    %v2681 = vpack.c.b16 %v2341, %v2336
    %v2682 = vpack.c.b16 %v2342, %v2337
    %v2683 = vpack.c.b16 %v2343, %v2338
    %v2684 = vpack.c.b16 %v2349, %v2344
    %v2685 = vpack.c.b16 %v2350, %v2345
    %v2686 = vpack.c.b16 %v2351, %v2346
    %v2687 = vpack.c.b16 %v2352, %v2347
    %v2688 = vpack.c.b16 %v2353, %v2348
    %v2689 = vpack.c.b16 %v2359, %v2354
    %v2690 = vpack.c.b16 %v2360, %v2355
    %v2691 = vpack.c.b16 %v2361, %v2356
    %v2692 = vpack.c.b16 %v2362, %v2357
    %v2693 = vpack.c.b16 %v2363, %v2358
    %v2694 = vpack.c.b16 %v2369, %v2364
    %v2695 = vpack.c.b16 %v2370, %v2365
    %v2696 = vpack.c.b16 %v2371, %v2366
    %v2697 = vpack.c.b16 %v2372, %v2367
    %v2698 = vpack.c.b16 %v2373, %v2368
    %v2699 = vpack.c.b16 %v2379, %v2374
    %v2700 = vpack.c.b16 %v2380, %v2375
    %v2701 = vpack.c.b16 %v2381, %v2376
    %v2702 = vpack.c.b16 %v2382, %v2377
    %v2703 = vpack.c.b16 %v2383, %v2378
    %v2704 = vpack.c.b16 %v2389, %v2384
    %v2705 = vpack.c.b16 %v2390, %v2385
    %v2706 = vpack.c.b16 %v2391, %v2386
    %v2707 = vpack.c.b16 %v2392, %v2387
    %v2708 = vpack.c.b16 %v2393, %v2388
    %v2709 = vpack.c.b16 %v2399, %v2394
    %v2710 = vpack.c.b16 %v2400, %v2395
    %v2711 = vpack.c.b16 %v2401, %v2396
    %v2712 = vpack.c.b16 %v2402, %v2397
    %v2713 = vpack.c.b16 %v2403, %v2398
    %v2714 = vpack.c.b16 %v2409, %v2404
    %v2715 = vpack.c.b16 %v2410, %v2405
    %v2716 = vpack.c.b16 %v2411, %v2406
    %v2717 = vpack.c.b16 %v2412, %v2407
    %v2718 = vpack.c.b16 %v2413, %v2408
    %v2719 = vpack.c.b16 %v2419, %v2414
    %v2720 = vpack.c.b16 %v2420, %v2415
    %v2721 = vpack.c.b16 %v2421, %v2416
    %v2722 = vpack.c.b16 %v2422, %v2417
    %v2723 = vpack.c.b16 %v2423, %v2418
    %v2724 = vpack.c.b16 %v2429, %v2424
    %v2725 = vpack.c.b16 %v2430, %v2425
    %v2726 = vpack.c.b16 %v2431, %v2426
    %v2727 = vpack.c.b16 %v2432, %v2427
    %v2728 = vpack.c.b16 %v2433, %v2428
    %v2729 = vpack.c.b16 %v2439, %v2434
    %v2730 = vpack.c.b16 %v2440, %v2435
    %v2731 = vpack.c.b16 %v2441, %v2436
    %v2732 = vpack.c.b16 %v2442, %v2437
    %v2733 = vpack.c.b16 %v2443, %v2438
    %v2734 = vpack.c.b16 %v2449, %v2444
    %v2735 = vpack.c.b16 %v2450, %v2445
    %v2736 = vpack.c.b16 %v2451, %v2446
    %v2737 = vpack.c.b16 %v2452, %v2447
    %v2738 = vpack.c.b16 %v2453, %v2448
    %v2739 = vpack.c.b16 %v2459, %v2454
    %v2740 = vpack.c.b16 %v2460, %v2455
    %v2741 = vpack.c.b16 %v2461, %v2456
    %v2742 = vpack.c.b16 %v2462, %v2457
    %v2743 = vpack.c.b16 %v2463, %v2458
    %v2744 = vpack.c.b16 %v2469, %v2464
    %v2745 = vpack.c.b16 %v2470, %v2465
    %v2746 = vpack.c.b16 %v2471, %v2466
    %v2747 = vpack.c.b16 %v2472, %v2467
    %v2748 = vpack.c.b16 %v2473, %v2468
    %v2749 = vpack.c.b16 %v2479, %v2474
    %v2750 = vpack.c.b16 %v2480, %v2475
    %v2751 = vpack.c.b16 %v2481, %v2476
    %v2752 = vpack.c.b16 %v2482, %v2477
    %v2753 = vpack.c.b16 %v2483, %v2478
    %v2754 = vpack.c.b16 %v2489, %v2484
    %v2755 = vpack.c.b16 %v2490, %v2485
    %v2756 = vpack.c.b16 %v2491, %v2486
    %v2757 = vpack.c.b16 %v2492, %v2487
    %v2758 = vpack.c.b16 %v2493, %v2488
    %v2759 = vpack.c.b16 %v2499, %v2494
    %v2760 = vpack.c.b16 %v2500, %v2495
    %v2761 = vpack.c.b16 %v2501, %v2496
    %v2762 = vpack.c.b16 %v2502, %v2497
    %v2763 = vpack.c.b16 %v2503, %v2498
    %v2764 = vpack.c.b16 %v2509, %v2504
    %v2765 = vpack.c.b16 %v2510, %v2505
    %v2766 = vpack.c.b16 %v2511, %v2506
    %v2767 = vpack.c.b16 %v2512, %v2507
    %v2768 = vpack.c.b16 %v2513, %v2508
    %v2769 = vpack.c.b16 %v2519, %v2514
    %v2770 = vpack.c.b16 %v2520, %v2515
    %v2771 = vpack.c.b16 %v2521, %v2516
    %v2772 = vpack.c.b16 %v2522, %v2517
    %v2773 = vpack.c.b16 %v2523, %v2518
    %v2774 = vpack.c.b16 %v2529, %v2524
    %v2775 = vpack.c.b16 %v2530, %v2525
    %v2776 = vpack.c.b16 %v2531, %v2526
    %v2777 = vpack.c.b16 %v2532, %v2527
    %v2778 = vpack.c.b16 %v2533, %v2528
    %v2779 = vpack.c.b16 %v2539, %v2534
    %v2780 = vpack.c.b16 %v2540, %v2535
    %v2781 = vpack.c.b16 %v2541, %v2536
    %v2782 = vpack.c.b16 %v2542, %v2537
    %v2783 = vpack.c.b16 %v2543, %v2538
    %v2784 = vpack.c.b16 %v2549, %v2544
    %v2785 = vpack.c.b16 %v2550, %v2545
    %v2786 = vpack.c.b16 %v2551, %v2546
    %v2787 = vpack.c.b16 %v2552, %v2547
    %v2788 = vpack.c.b16 %v2553, %v2548
    %v2789 = vpack.c.b16 %v2559, %v2554
    %v2790 = vpack.c.b16 %v2560, %v2555
    %v2791 = vpack.c.b16 %v2561, %v2556
    %v2792 = vpack.c.b16 %v2562, %v2557
    %v2793 = vpack.c.b16 %v2563, %v2558
    %v2794 = vpack.c.b16 %v2569, %v2564
    %v2795 = vpack.c.b16 %v2570, %v2565
    %v2796 = vpack.c.b16 %v2571, %v2566
    %v2797 = vpack.c.b16 %v2572, %v2567
    %v2798 = vpack.c.b16 %v2573, %v2568
    %v2799 = vpack.c.b16 %v2579, %v2574
    %v2800 = vpack.c.b16 %v2580, %v2575
    %v2801 = vpack.c.b16 %v2581, %v2576
    %v2802 = vpack.c.b16 %v2582, %v2577
    %v2803 = vpack.c.b16 %v2583, %v2578
    %v2804 = vpack.c.b16 %v2589, %v2584
    %v2805 = vpack.c.b16 %v2590, %v2585
    %v2806 = vpack.c.b16 %v2591, %v2586
    %v2807 = vpack.c.b16 %v2592, %v2587
    %v2808 = vpack.c.b16 %v2593, %v2588
    %v2809 = vpack.c.b16 %v2599, %v2594
    %v2810 = vpack.c.b16 %v2600, %v2595
    %v2811 = vpack.c.b16 %v2601, %v2596
    %v2812 = vpack.c.b16 %v2602, %v2597
    %v2813 = vpack.c.b16 %v2603, %v2598
    %v2814 = vpack.c.b16 %v2609, %v2604
    %v2815 = vpack.c.b16 %v2610, %v2605
    %v2816 = vpack.c.b16 %v2611, %v2606
    %v2817 = vpack.c.b16 %v2612, %v2607
    %v2818 = vpack.c.b16 %v2613, %v2608
    %v2819 = vpack.c.b16 %v2619, %v2614
    %v2820 = vpack.c.b16 %v2620, %v2615
    %v2821 = vpack.c.b16 %v2621, %v2616
    %v2822 = vpack.c.b16 %v2622, %v2617
    %v2823 = vpack.c.b16 %v2623, %v2618
    %3024 = vmatprep.subr.bf16.mxu0 %v2660
    %3025 = vmatpush1.bf16.msra.mxu0 %v2659
    %3026 = vmatprep.subr.bf16.mxu0 %v2655
    %3027 = vmatpush1.bf16.msra.mxu0 %v2654
    %3028 = vmatprep.subr.bf16.mxu0 %v2650
    %3029 = vmatpush1.bf16.msra.mxu0 %v2649
    %3030 = vmatprep.subr.bf16.mxu0 %v2645
    %3031 = vmatpush1.bf16.msra.mxu0 %v2644
    %3032 = vmatprep.subr.bf16.mxu0 %v2640
    %3033 = vmatpush1.bf16.msra.mxu0 %v2639
    %3034 = vmatprep.subr.bf16.mxu0 %v2635
    %3035 = vmatpush1.bf16.msra.mxu0 %v2634
    %3036 = vmatprep.subr.bf16.mxu0 %v2630
    %3037 = vmatpush1.bf16.msra.mxu0 %v2629
    %3038 = vmatprep.subr.bf16.mxu0 %v2625
    %3039 = vmatpush1.bf16.msra.mxu0 %v2624
    %3040 = vmatprep.subr.bf16.mxu0 %v2700
    %3041 = vmatpush2.bf16.msra.mxu0 %v2699
    %3042 = vmatprep.subr.bf16.mxu0 %v2695
    %3043 = vmatpush2.bf16.msra.mxu0 %v2694
    %3044 = vmatprep.subr.bf16.mxu0 %v2690
    %3045 = vmatpush2.bf16.msra.mxu0 %v2689
    %3046 = vmatprep.subr.bf16.mxu0 %v2685
    %3047 = vmatpush2.bf16.msra.mxu0 %v2684
    %3048 = vmatprep.subr.bf16.mxu0 %v2680
    %3049 = vmatpush2.bf16.msra.mxu0 %v2679
    %3050 = vmatprep.subr.bf16.mxu0 %v2675
    %3051 = vmatpush2.bf16.msra.mxu0 %v2674
    %3052 = vmatprep.subr.bf16.mxu0 %v2670
    %3053 = vmatpush2.bf16.msra.mxu0 %v2669
    %3054 = vmatprep.subr.bf16.mxu0 %v2665
    %3055 = vmatpush2.bf16.msra.mxu0 %v2664
    %3056 = vmatprep.mubr.bf16.mxu0 %v324
    %3057 = vmatmul.mubr.bf16.gmra.mxu0 %v323
    %v3058 = vpop.f32.mrf.mxu0
    %v3059 = vadd.f32 0.0, %v3058
    %v3060 = vpop.f32.mrf.mxu0
    %v3061 = vadd.f32 0.0, %v3060
    %v3062 = vpop.f32.mrf.mxu0
    %v3063 = vpop.f32.mrf.mxu0
    %3064 = vdwg.mxu0
    %3065 = vmatprep.subr.bf16.mxu0 %v2740
    %3066 = vmatpush1.bf16.msra.mxu0 %v2739
    %3067 = vmatprep.subr.bf16.mxu0 %v2735
    %3068 = vmatpush1.bf16.msra.mxu0 %v2734
    %3069 = vmatprep.subr.bf16.mxu0 %v2730
    %3070 = vmatpush1.bf16.msra.mxu0 %v2729
    %3071 = vmatprep.subr.bf16.mxu0 %v2725
    %3072 = vmatpush1.bf16.msra.mxu0 %v2724
    %3073 = vmatprep.subr.bf16.mxu0 %v2720
    %3074 = vmatpush1.bf16.msra.mxu0 %v2719
    %3075 = vmatprep.subr.bf16.mxu0 %v2715
    %3076 = vmatpush1.bf16.msra.mxu0 %v2714
    %3077 = vmatprep.subr.bf16.mxu0 %v2710
    %3078 = vmatpush1.bf16.msra.mxu0 %v2709
    %3079 = vmatprep.subr.bf16.mxu0 %v2705
    %3080 = vmatpush1.bf16.msra.mxu0 %v2704
    %3081 = vmatprep.subr.bf16.mxu0 %v2780
    %3082 = vmatpush2.bf16.msra.mxu0 %v2779
    %3083 = vmatprep.subr.bf16.mxu0 %v2775
    %3084 = vmatpush2.bf16.msra.mxu0 %v2774
    %3085 = vmatprep.subr.bf16.mxu0 %v2770
    %3086 = vmatpush2.bf16.msra.mxu0 %v2769
    %3087 = vmatprep.subr.bf16.mxu0 %v2765
    %3088 = vmatpush2.bf16.msra.mxu0 %v2764
    %3089 = vmatprep.subr.bf16.mxu0 %v2760
    %3090 = vmatpush2.bf16.msra.mxu0 %v2759
    %3091 = vmatprep.subr.bf16.mxu0 %v2755
    %3092 = vmatpush2.bf16.msra.mxu0 %v2754
    %3093 = vmatprep.subr.bf16.mxu0 %v2750
    %3094 = vmatpush2.bf16.msra.mxu0 %v2749
    %3095 = vmatprep.subr.bf16.mxu0 %v2745
    %3096 = vmatpush2.bf16.msra.mxu0 %v2744
    %3097 = vmatprep.mubr.bf16.mxu0 %v326
    %3098 = vmatmul.mubr.bf16.gmra.mxu0 %v325
    %v3099 = vpop.f32.mrf.mxu0
    %v3100 = vadd.f32 %v3059, %v3099
    %v3101 = vpop.f32.mrf.mxu0
    %v3102 = vadd.f32 %v3061, %v3101
    %v3103 = vpop.f32.mrf.mxu0
    %v3104 = vpop.f32.mrf.mxu0
    %3105 = vdwg.mxu0
    %3106 = vmatprep.subr.bf16.mxu0 %v2820
    %3107 = vmatpush1.bf16.msra.mxu0 %v2819
    %3108 = vmatprep.subr.bf16.mxu0 %v2815
    %3109 = vmatpush1.bf16.msra.mxu0 %v2814
    %3110 = vmatprep.subr.bf16.mxu0 %v2810
    %3111 = vmatpush1.bf16.msra.mxu0 %v2809
    %3112 = vmatprep.subr.bf16.mxu0 %v2805
    %3113 = vmatpush1.bf16.msra.mxu0 %v2804
    %3114 = vmatprep.subr.bf16.mxu0 %v2800
    %3115 = vmatpush1.bf16.msra.mxu0 %v2799
    %3116 = vmatprep.subr.bf16.mxu0 %v2795
    %3117 = vmatpush1.bf16.msra.mxu0 %v2794
    %3118 = vmatprep.subr.bf16.mxu0 %v2790
    %3119 = vmatpush1.bf16.msra.mxu0 %v2789
    %3120 = vmatprep.subr.bf16.mxu0 %v2785
    %3121 = vmatpush1.bf16.msra.mxu0 %v2784
    %3122 = vmatprep.subr.bf16.mxu0 0
    %3123 = vmatpush2.bf16.msra.mxu0 0
    %3124 = vmatprep.subr.bf16.mxu0 0
    %3125 = vmatpush2.bf16.msra.mxu0 0
    %3126 = vmatprep.subr.bf16.mxu0 0
    %3127 = vmatpush2.bf16.msra.mxu0 0
    %3128 = vmatprep.subr.bf16.mxu0 0
    %3129 = vmatpush2.bf16.msra.mxu0 0
    %3130 = vmatprep.subr.bf16.mxu0 0
    %3131 = vmatpush2.bf16.msra.mxu0 0
    %3132 = vmatprep.subr.bf16.mxu0 0
    %3133 = vmatpush2.bf16.msra.mxu0 0
    %3134 = vmatprep.subr.bf16.mxu0 0
    %3135 = vmatpush2.bf16.msra.mxu0 0
    %3136 = vmatprep.subr.bf16.mxu0 0
    %3137 = vmatpush2.bf16.msra.mxu0 0
    %3138 = vmatprep.mubr.bf16.mxu0 0
    %3139 = vmatmul.mubr.bf16.gmra.mxu0 %v327
    %v3140 = vpop.f32.mrf.mxu0
    %v3141 = vadd.f32 %v3100, %v3140
    %v3142 = vpop.f32.mrf.mxu0
    %v3143 = vadd.f32 %v3102, %v3142
    %v3144 = vpop.f32.mrf.mxu0
    %v3145 = vpop.f32.mrf.mxu0
    %3146 = vdwg.mxu0
    %3147 = vmatprep.subr.bf16.mxu0 %v2662
    %3148 = vmatpush1.bf16.msra.mxu0 %v2661
    %3149 = vmatprep.subr.bf16.mxu0 %v2657
    %3150 = vmatpush1.bf16.msra.mxu0 %v2656
    %3151 = vmatprep.subr.bf16.mxu0 %v2652
    %3152 = vmatpush1.bf16.msra.mxu0 %v2651
    %3153 = vmatprep.subr.bf16.mxu0 %v2647
    %3154 = vmatpush1.bf16.msra.mxu0 %v2646
    %3155 = vmatprep.subr.bf16.mxu0 %v2642
    %3156 = vmatpush1.bf16.msra.mxu0 %v2641
    %3157 = vmatprep.subr.bf16.mxu0 %v2637
    %3158 = vmatpush1.bf16.msra.mxu0 %v2636
    %3159 = vmatprep.subr.bf16.mxu0 %v2632
    %3160 = vmatpush1.bf16.msra.mxu0 %v2631
    %3161 = vmatprep.subr.bf16.mxu0 %v2627
    %3162 = vmatpush1.bf16.msra.mxu0 %v2626
    %3163 = vmatprep.subr.bf16.mxu0 %v2702
    %3164 = vmatpush2.bf16.msra.mxu0 %v2701
    %3165 = vmatprep.subr.bf16.mxu0 %v2697
    %3166 = vmatpush2.bf16.msra.mxu0 %v2696
    %3167 = vmatprep.subr.bf16.mxu0 %v2692
    %3168 = vmatpush2.bf16.msra.mxu0 %v2691
    %3169 = vmatprep.subr.bf16.mxu0 %v2687
    %3170 = vmatpush2.bf16.msra.mxu0 %v2686
    %3171 = vmatprep.subr.bf16.mxu0 %v2682
    %3172 = vmatpush2.bf16.msra.mxu0 %v2681
    %3173 = vmatprep.subr.bf16.mxu0 %v2677
    %3174 = vmatpush2.bf16.msra.mxu0 %v2676
    %3175 = vmatprep.subr.bf16.mxu0 %v2672
    %3176 = vmatpush2.bf16.msra.mxu0 %v2671
    %3177 = vmatprep.subr.bf16.mxu0 %v2667
    %3178 = vmatpush2.bf16.msra.mxu0 %v2666
    %3179 = vmatprep.mubr.bf16.mxu0 %v324
    %3180 = vmatmul.mubr.bf16.gmra.mxu0 %v323
    %v3181 = vpop.f32.mrf.mxu0
    %v3182 = vadd.f32 0.0, %v3181
    %v3183 = vpop.f32.mrf.mxu0
    %v3184 = vadd.f32 0.0, %v3183
    %v3185 = vpop.f32.mrf.mxu0
    %v3186 = vpop.f32.mrf.mxu0
    %3187 = vdwg.mxu0
    %3188 = vmatprep.subr.bf16.mxu0 %v2742
    %3189 = vmatpush1.bf16.msra.mxu0 %v2741
    %3190 = vmatprep.subr.bf16.mxu0 %v2737
    %3191 = vmatpush1.bf16.msra.mxu0 %v2736
    %3192 = vmatprep.subr.bf16.mxu0 %v2732
    %3193 = vmatpush1.bf16.msra.mxu0 %v2731
    %3194 = vmatprep.subr.bf16.mxu0 %v2727
    %3195 = vmatpush1.bf16.msra.mxu0 %v2726
    %3196 = vmatprep.subr.bf16.mxu0 %v2722
    %3197 = vmatpush1.bf16.msra.mxu0 %v2721
    %3198 = vmatprep.subr.bf16.mxu0 %v2717
    %3199 = vmatpush1.bf16.msra.mxu0 %v2716
    %3200 = vmatprep.subr.bf16.mxu0 %v2712
    %3201 = vmatpush1.bf16.msra.mxu0 %v2711
    %3202 = vmatprep.subr.bf16.mxu0 %v2707
    %3203 = vmatpush1.bf16.msra.mxu0 %v2706
    %3204 = vmatprep.subr.bf16.mxu0 %v2782
    %3205 = vmatpush2.bf16.msra.mxu0 %v2781
    %3206 = vmatprep.subr.bf16.mxu0 %v2777
    %3207 = vmatpush2.bf16.msra.mxu0 %v2776
    %3208 = vmatprep.subr.bf16.mxu0 %v2772
    %3209 = vmatpush2.bf16.msra.mxu0 %v2771
    %3210 = vmatprep.subr.bf16.mxu0 %v2767
    %3211 = vmatpush2.bf16.msra.mxu0 %v2766
    %3212 = vmatprep.subr.bf16.mxu0 %v2762
    %3213 = vmatpush2.bf16.msra.mxu0 %v2761
    %3214 = vmatprep.subr.bf16.mxu0 %v2757
    %3215 = vmatpush2.bf16.msra.mxu0 %v2756
    %3216 = vmatprep.subr.bf16.mxu0 %v2752
    %3217 = vmatpush2.bf16.msra.mxu0 %v2751
    %3218 = vmatprep.subr.bf16.mxu0 %v2747
    %3219 = vmatpush2.bf16.msra.mxu0 %v2746
    %3220 = vmatprep.mubr.bf16.mxu0 %v326
    %3221 = vmatmul.mubr.bf16.gmra.mxu0 %v325
    %v3222 = vpop.f32.mrf.mxu0
    %v3223 = vadd.f32 %v3182, %v3222
    %v3224 = vpop.f32.mrf.mxu0
    %v3225 = vadd.f32 %v3184, %v3224
    %v3226 = vpop.f32.mrf.mxu0
    %v3227 = vpop.f32.mrf.mxu0
    %3228 = vdwg.mxu0
    %3229 = vmatprep.subr.bf16.mxu0 %v2822
    %3230 = vmatpush1.bf16.msra.mxu0 %v2821
    %3231 = vmatprep.subr.bf16.mxu0 %v2817
    %3232 = vmatpush1.bf16.msra.mxu0 %v2816
    %3233 = vmatprep.subr.bf16.mxu0 %v2812
    %3234 = vmatpush1.bf16.msra.mxu0 %v2811
    %3235 = vmatprep.subr.bf16.mxu0 %v2807
    %3236 = vmatpush1.bf16.msra.mxu0 %v2806
    %3237 = vmatprep.subr.bf16.mxu0 %v2802
    %3238 = vmatpush1.bf16.msra.mxu0 %v2801
    %3239 = vmatprep.subr.bf16.mxu0 %v2797
    %3240 = vmatpush1.bf16.msra.mxu0 %v2796
    %3241 = vmatprep.subr.bf16.mxu0 %v2792
    %3242 = vmatpush1.bf16.msra.mxu0 %v2791
    %3243 = vmatprep.subr.bf16.mxu0 %v2787
    %3244 = vmatpush1.bf16.msra.mxu0 %v2786
    %3245 = vmatprep.subr.bf16.mxu0 0
    %3246 = vmatpush2.bf16.msra.mxu0 0
    %3247 = vmatprep.subr.bf16.mxu0 0
    %3248 = vmatpush2.bf16.msra.mxu0 0
    %3249 = vmatprep.subr.bf16.mxu0 0
    %3250 = vmatpush2.bf16.msra.mxu0 0
    %3251 = vmatprep.subr.bf16.mxu0 0
    %3252 = vmatpush2.bf16.msra.mxu0 0
    %3253 = vmatprep.subr.bf16.mxu0 0
    %3254 = vmatpush2.bf16.msra.mxu0 0
    %3255 = vmatprep.subr.bf16.mxu0 0
    %3256 = vmatpush2.bf16.msra.mxu0 0
    %3257 = vmatprep.subr.bf16.mxu0 0
    %3258 = vmatpush2.bf16.msra.mxu0 0
    %3259 = vmatprep.subr.bf16.mxu0 0
    %3260 = vmatpush2.bf16.msra.mxu0 0
    %3261 = vmatprep.mubr.bf16.mxu0 0
    %3262 = vmatmul.mubr.bf16.gmra.mxu0 %v327
    %v3263 = vpop.f32.mrf.mxu0
    %v3264 = vadd.f32 %v3223, %v3263
    %v3265 = vpop.f32.mrf.mxu0
    %v3266 = vadd.f32 %v3225, %v3265
    %v3267 = vpop.f32.mrf.mxu0
    %v3268 = vpop.f32.mrf.mxu0
    %3269 = vdwg.mxu0
    %3270 = vmatprep.subr.bf16.mxu0 0
    %3271 = vmatpush1.bf16.msra.mxu0 %v2663
    %3272 = vmatprep.subr.bf16.mxu0 0
    %3273 = vmatpush1.bf16.msra.mxu0 %v2658
    %3274 = vmatprep.subr.bf16.mxu0 0
    %3275 = vmatpush1.bf16.msra.mxu0 %v2653
    %3276 = vmatprep.subr.bf16.mxu0 0
    %3277 = vmatpush1.bf16.msra.mxu0 %v2648
    %3278 = vmatprep.subr.bf16.mxu0 0
    %3279 = vmatpush1.bf16.msra.mxu0 %v2643
    %3280 = vmatprep.subr.bf16.mxu0 0
    %3281 = vmatpush1.bf16.msra.mxu0 %v2638
    %3282 = vmatprep.subr.bf16.mxu0 0
    %3283 = vmatpush1.bf16.msra.mxu0 %v2633
    %3284 = vmatprep.subr.bf16.mxu0 0
    %3285 = vmatpush1.bf16.msra.mxu0 %v2628
    %3286 = vmatprep.subr.bf16.mxu0 0
    %3287 = vmatpush2.bf16.msra.mxu0 %v2703
    %3288 = vmatprep.subr.bf16.mxu0 0
    %3289 = vmatpush2.bf16.msra.mxu0 %v2698
    %3290 = vmatprep.subr.bf16.mxu0 0
    %3291 = vmatpush2.bf16.msra.mxu0 %v2693
    %3292 = vmatprep.subr.bf16.mxu0 0
    %3293 = vmatpush2.bf16.msra.mxu0 %v2688
    %3294 = vmatprep.subr.bf16.mxu0 0
    %3295 = vmatpush2.bf16.msra.mxu0 %v2683
    %3296 = vmatprep.subr.bf16.mxu0 0
    %3297 = vmatpush2.bf16.msra.mxu0 %v2678
    %3298 = vmatprep.subr.bf16.mxu0 0
    %3299 = vmatpush2.bf16.msra.mxu0 %v2673
    %3300 = vmatprep.subr.bf16.mxu0 0
    %3301 = vmatpush2.bf16.msra.mxu0 %v2668
    %3302 = vmatprep.mubr.bf16.mxu0 %v324
    %3303 = vmatmul.mubr.bf16.gmra.mxu0 %v323
    %v3304 = vpop.f32.mrf.mxu0
    %v3305 = vadd.f32 0.0, %v3304
    %v3306 = vpop.f32.mrf.mxu0
    %v3307 = vpop.f32.mrf.mxu0
    %v3308 = vpop.f32.mrf.mxu0
    %3309 = vdwg.mxu0
    %3310 = vmatprep.subr.bf16.mxu0 0
    %3311 = vmatpush1.bf16.msra.mxu0 %v2743
    %3312 = vmatprep.subr.bf16.mxu0 0
    %3313 = vmatpush1.bf16.msra.mxu0 %v2738
    %3314 = vmatprep.subr.bf16.mxu0 0
    %3315 = vmatpush1.bf16.msra.mxu0 %v2733
    %3316 = vmatprep.subr.bf16.mxu0 0
    %3317 = vmatpush1.bf16.msra.mxu0 %v2728
    %3318 = vmatprep.subr.bf16.mxu0 0
    %3319 = vmatpush1.bf16.msra.mxu0 %v2723
    %3320 = vmatprep.subr.bf16.mxu0 0
    %3321 = vmatpush1.bf16.msra.mxu0 %v2718
    %3322 = vmatprep.subr.bf16.mxu0 0
    %3323 = vmatpush1.bf16.msra.mxu0 %v2713
    %3324 = vmatprep.subr.bf16.mxu0 0
    %3325 = vmatpush1.bf16.msra.mxu0 %v2708
    %3326 = vmatprep.subr.bf16.mxu0 0
    %3327 = vmatpush2.bf16.msra.mxu0 %v2783
    %3328 = vmatprep.subr.bf16.mxu0 0
    %3329 = vmatpush2.bf16.msra.mxu0 %v2778
    %3330 = vmatprep.subr.bf16.mxu0 0
    %3331 = vmatpush2.bf16.msra.mxu0 %v2773
    %3332 = vmatprep.subr.bf16.mxu0 0
    %3333 = vmatpush2.bf16.msra.mxu0 %v2768
    %3334 = vmatprep.subr.bf16.mxu0 0
    %3335 = vmatpush2.bf16.msra.mxu0 %v2763
    %3336 = vmatprep.subr.bf16.mxu0 0
    %3337 = vmatpush2.bf16.msra.mxu0 %v2758
    %3338 = vmatprep.subr.bf16.mxu0 0
    %3339 = vmatpush2.bf16.msra.mxu0 %v2753
    %3340 = vmatprep.subr.bf16.mxu0 0
    %3341 = vmatpush2.bf16.msra.mxu0 %v2748
    %3342 = vmatprep.mubr.bf16.mxu0 %v326
    %3343 = vmatmul.mubr.bf16.gmra.mxu0 %v325
    %v3344 = vpop.f32.mrf.mxu0
    %v3345 = vadd.f32 %v3305, %v3344
    %v3346 = vpop.f32.mrf.mxu0
    %v3347 = vpop.f32.mrf.mxu0
    %v3348 = vpop.f32.mrf.mxu0
    %3349 = vdwg.mxu0
    %3350 = vmatprep.subr.bf16.mxu0 0
    %3351 = vmatpush1.bf16.msra.mxu0 %v2823
    %3352 = vmatprep.subr.bf16.mxu0 0
    %3353 = vmatpush1.bf16.msra.mxu0 %v2818
    %3354 = vmatprep.subr.bf16.mxu0 0
    %3355 = vmatpush1.bf16.msra.mxu0 %v2813
    %3356 = vmatprep.subr.bf16.mxu0 0
    %3357 = vmatpush1.bf16.msra.mxu0 %v2808
    %3358 = vmatprep.subr.bf16.mxu0 0
    %3359 = vmatpush1.bf16.msra.mxu0 %v2803
    %3360 = vmatprep.subr.bf16.mxu0 0
    %3361 = vmatpush1.bf16.msra.mxu0 %v2798
    %3362 = vmatprep.subr.bf16.mxu0 0
    %3363 = vmatpush1.bf16.msra.mxu0 %v2793
    %3364 = vmatprep.subr.bf16.mxu0 0
    %3365 = vmatpush1.bf16.msra.mxu0 %v2788
    %3366 = vmatprep.subr.bf16.mxu0 0
    %3367 = vmatpush2.bf16.msra.mxu0 0
    %3368 = vmatprep.subr.bf16.mxu0 0
    %3369 = vmatpush2.bf16.msra.mxu0 0
    %3370 = vmatprep.subr.bf16.mxu0 0
    %3371 = vmatpush2.bf16.msra.mxu0 0
    %3372 = vmatprep.subr.bf16.mxu0 0
    %3373 = vmatpush2.bf16.msra.mxu0 0
    %3374 = vmatprep.subr.bf16.mxu0 0
    %3375 = vmatpush2.bf16.msra.mxu0 0
    %3376 = vmatprep.subr.bf16.mxu0 0
    %3377 = vmatpush2.bf16.msra.mxu0 0
    %3378 = vmatprep.subr.bf16.mxu0 0
    %3379 = vmatpush2.bf16.msra.mxu0 0
    %3380 = vmatprep.subr.bf16.mxu0 0
    %3381 = vmatpush2.bf16.msra.mxu0 0
    %3382 = vmatprep.mubr.bf16.mxu0 0
    %3383 = vmatmul.mubr.bf16.gmra.mxu0 %v327
    %v3384 = vpop.f32.mrf.mxu0
    %v3385 = vadd.f32 %v3345, %v3384
    %v3386 = vpop.f32.mrf.mxu0
    %v3387 = vpop.f32.mrf.mxu0
    %v3388 = vpop.f32.mrf.mxu0
    %3389 = vdwg.mxu0
    %v3390 = vmul.f32 %v3141, %v3141
    %v3391 = vmul.f32 %v3143, %v3143
    %v3392 = vmul.f32 %v3264, %v3264
    %v3393 = vmul.f32 %v3266, %v3266
    %v3394 = vmul.f32 %v3385, %v3385
    %v3395 = vadd.f32 %v1739, %v3390
    %v3396 = vadd.f32 %v1740, %v3391
    %v3397 = vadd.f32 %v1741, %v3392
    %v3398 = vadd.f32 %v1742, %v3393
    %v3399 = vadd.f32 %v1743, %v3394
    %v3400 = vld [vmem:[#allocation8] sm:$0xff]
    %v3401 = vld [vmem:[#allocation8 + $0x8] sm:$0xff]
    %v3402 = vld [vmem:[#allocation8 + $0x10] sm:$0xff]
    %v3403 = vld [vmem:[#allocation8 + $0x18] sm:$0xff]
    %v3404 = vld [vmem:[#allocation8 + $0x20] sm:$0xff]
    %v3405 = vld [vmem:[#allocation8 + $0x28] sm:$0xff]
    %v3406 = vld [vmem:[#allocation8 + $0x30] sm:$0xff]
    %v3407 = vld [vmem:[#allocation8 + $0x38] sm:$0xff]
    %v3408 = vld [vmem:[#allocation8 + $0x40] sm:$0xff]
    %v3409 = vld [vmem:[#allocation8 + $0x48] sm:$0xff]
    %v3410 = vld [vmem:[#allocation8 + $0x50] sm:$0xff]
    %v3411 = vld [vmem:[#allocation8 + $0x58] sm:$0xff]
    %v3412 = vld [vmem:[#allocation8 + $0x60] sm:$0xff]
    %v3413 = vld [vmem:[#allocation8 + $0x68] sm:$0xff]
    %v3414 = vld [vmem:[#allocation8 + $0x70] sm:$0xff]
    %v3415 = vld [vmem:[#allocation8 + $0x78] sm:$0xff]
    %v3416 = vld [vmem:[#allocation8 + $0x80] sm:$0xff]
    %v3417 = vld [vmem:[#allocation8 + $0x88] sm:$0xff]
    %v3418 = vld [vmem:[#allocation8 + $0x90] sm:$0xff]
    %v3419 = vld [vmem:[#allocation8 + $0x98] sm:$0xff]
    %v3420 = vld [vmem:[#allocation8 + $0xa0] sm:$0xff]
    %v3421 = vld [vmem:[#allocation8 + $0xa8] sm:$0xff]
    %v3422 = vld [vmem:[#allocation8 + $0xb0] sm:$0xff]
    %v3423 = vld [vmem:[#allocation8 + $0xb8] sm:$0xff]
    %v3424 = vld [vmem:[#allocation8 + $0xc0] sm:$0xff]
    %v3425 = vld [vmem:[#allocation8 + $0xc8] sm:$0xff]
    %v3426 = vld [vmem:[#allocation8 + $0xd0] sm:$0xff]
    %v3427 = vld [vmem:[#allocation8 + $0xd8] sm:$0xff]
    %v3428 = vld [vmem:[#allocation8 + $0xe0] sm:$0xff]
    %v3429 = vld [vmem:[#allocation8 + $0xe8] sm:$0xff]
    %v3430 = vld [vmem:[#allocation8 + $0xf0] sm:$0xff]
    %v3431 = vld [vmem:[#allocation8 + $0xf8] sm:$0xff]
    %v3432 = vld [vmem:[#allocation8 + $0x100] sm:$0xff]
    %v3433 = vld [vmem:[#allocation8 + $0x108] sm:$0xff]
    %v3434 = vld [vmem:[#allocation8 + $0x110] sm:$0xff]
    %v3435 = vld [vmem:[#allocation8 + $0x118] sm:$0xff]
    %v3436 = vld [vmem:[#allocation8 + $0x120] sm:$0xff]
    %v3437 = vld [vmem:[#allocation8 + $0x128] sm:$0xff]
    %v3438 = vld [vmem:[#allocation8 + $0x130] sm:$0xff]
    %v3439 = vld [vmem:[#allocation8 + $0x138] sm:$0xff]
    %v3440 = vld [vmem:[#allocation8 + $0x140] sm:$0xff]
    %v3441 = vld [vmem:[#allocation8 + $0x148] sm:$0xff]
    %v3442 = vld [vmem:[#allocation8 + $0x150] sm:$0xff]
    %v3443 = vld [vmem:[#allocation8 + $0x158] sm:$0xff]
    %v3444 = vld [vmem:[#allocation8 + $0x160] sm:$0xff]
    %v3445 = vld [vmem:[#allocation8 + $0x168] sm:$0xff]
    %v3446 = vld [vmem:[#allocation8 + $0x170] sm:$0xff]
    %v3447 = vld [vmem:[#allocation8 + $0x178] sm:$0xff]
    %v3448 = vld [vmem:[#allocation8 + $0x180] sm:$0xff]
    %v3449 = vld [vmem:[#allocation8 + $0x188] sm:$0xff]
    %v3450 = vld [vmem:[#allocation8 + $0x190] sm:$0xff]
    %v3451 = vld [vmem:[#allocation8 + $0x198] sm:$0xff]
    %v3452 = vld [vmem:[#allocation8 + $0x1a0] sm:$0xff]
    %v3453 = vld [vmem:[#allocation8 + $0x1a8] sm:$0xff]
    %v3454 = vld [vmem:[#allocation8 + $0x1b0] sm:$0xff]
    %v3455 = vld [vmem:[#allocation8 + $0x1b8] sm:$0xff]
    %v3456 = vld [vmem:[#allocation8 + $0x1c0] sm:$0xff]
    %v3457 = vld [vmem:[#allocation8 + $0x1c8] sm:$0xff]
    %v3458 = vld [vmem:[#allocation8 + $0x1d0] sm:$0xff]
    %v3459 = vld [vmem:[#allocation8 + $0x1d8] sm:$0xff]
    %v3460 = vld [vmem:[#allocation8 + $0x1e0] sm:$0xff]
    %v3461 = vld [vmem:[#allocation8 + $0x1e8] sm:$0xff]
    %v3462 = vld [vmem:[#allocation8 + $0x1f0] sm:$0xff]
    %v3463 = vld [vmem:[#allocation8 + $0x1f8] sm:$0xff]
    %v3464 = vld [vmem:[#allocation8 + $0x200] sm:$0xff]
    %v3465 = vld [vmem:[#allocation8 + $0x208] sm:$0xff]
    %v3466 = vld [vmem:[#allocation8 + $0x210] sm:$0xff]
    %v3467 = vld [vmem:[#allocation8 + $0x218] sm:$0xff]
    %v3468 = vld [vmem:[#allocation8 + $0x220] sm:$0xff]
    %v3469 = vld [vmem:[#allocation8 + $0x228] sm:$0xff]
    %v3470 = vld [vmem:[#allocation8 + $0x230] sm:$0xff]
    %v3471 = vld [vmem:[#allocation8 + $0x238] sm:$0xff]
    %v3472 = vld [vmem:[#allocation8 + $0x240] sm:$0xff]
    %v3473 = vld [vmem:[#allocation8 + $0x248] sm:$0xff]
    %v3474 = vld [vmem:[#allocation8 + $0x250] sm:$0xff]
    %v3475 = vld [vmem:[#allocation8 + $0x258] sm:$0xff]
    %v3476 = vld [vmem:[#allocation8 + $0x260] sm:$0xff]
    %v3477 = vld [vmem:[#allocation8 + $0x268] sm:$0xff]
    %v3478 = vld [vmem:[#allocation8 + $0x270] sm:$0xff]
    %v3479 = vld [vmem:[#allocation8 + $0x278] sm:$0xff]
    %3480 = vmatprep.subr.mxu0 0.0
    %3481 = vmatpush1.msra.mxu0 %v3415
    %3482 = vmatprep.subr.mxu0 0.0
    %3483 = vmatpush1.msra.mxu0 %v3414
    %3484 = vmatprep.subr.mxu0 0.0
    %3485 = vmatpush1.msra.mxu0 %v3413
    %3486 = vmatprep.subr.mxu0 0.0
    %3487 = vmatpush1.msra.mxu0 %v3412
    %3488 = vmatprep.subr.mxu0 0.0
    %3489 = vmatpush1.msra.mxu0 %v3411
    %3490 = vmatprep.subr.mxu0 0.0
    %3491 = vmatpush1.msra.mxu0 %v3410
    %3492 = vmatprep.subr.mxu0 0.0
    %3493 = vmatpush1.msra.mxu0 %v3409
    %3494 = vmatprep.subr.mxu0 0.0
    %3495 = vmatpush1.msra.mxu0 %v3408
    %3496 = vmatprep.subr.mxu0 0.0
    %3497 = vmatpush1.msra.mxu0 %v3407
    %3498 = vmatprep.subr.mxu0 0.0
    %3499 = vmatpush1.msra.mxu0 %v3406
    %3500 = vmatprep.subr.mxu0 0.0
    %3501 = vmatpush1.msra.mxu0 %v3405
    %3502 = vmatprep.subr.mxu0 0.0
    %3503 = vmatpush1.msra.mxu0 %v3404
    %3504 = vmatprep.subr.mxu0 0.0
    %3505 = vmatpush1.msra.mxu0 %v3403
    %3506 = vmatprep.subr.mxu0 0.0
    %3507 = vmatpush1.msra.mxu0 %v3402
    %3508 = vmatprep.subr.mxu0 0.0
    %3509 = vmatpush1.msra.mxu0 %v3401
    %3510 = vmatprep.subr.mxu0 0.0
    %3511 = vmatpush1.msra.mxu0 %v3400
    %3512 = vmatprep.subr.mxu0 0.0
    %3513 = vmatpush2.msra.mxu0 %v3431
    %3514 = vmatprep.subr.mxu0 0.0
    %3515 = vmatpush2.msra.mxu0 %v3430
    %3516 = vmatprep.subr.mxu0 0.0
    %3517 = vmatpush2.msra.mxu0 %v3429
    %3518 = vmatprep.subr.mxu0 0.0
    %3519 = vmatpush2.msra.mxu0 %v3428
    %3520 = vmatprep.subr.mxu0 0.0
    %3521 = vmatpush2.msra.mxu0 %v3427
    %3522 = vmatprep.subr.mxu0 0.0
    %3523 = vmatpush2.msra.mxu0 %v3426
    %3524 = vmatprep.subr.mxu0 0.0
    %3525 = vmatpush2.msra.mxu0 %v3425
    %3526 = vmatprep.subr.mxu0 0.0
    %3527 = vmatpush2.msra.mxu0 %v3424
    %3528 = vmatprep.subr.mxu0 0.0
    %3529 = vmatpush2.msra.mxu0 %v3423
    %3530 = vmatprep.subr.mxu0 0.0
    %3531 = vmatpush2.msra.mxu0 %v3422
    %3532 = vmatprep.subr.mxu0 0.0
    %3533 = vmatpush2.msra.mxu0 %v3421
    %3534 = vmatprep.subr.mxu0 0.0
    %3535 = vmatpush2.msra.mxu0 %v3420
    %3536 = vmatprep.subr.mxu0 0.0
    %3537 = vmatpush2.msra.mxu0 %v3419
    %3538 = vmatprep.subr.mxu0 0.0
    %3539 = vmatpush2.msra.mxu0 %v3418
    %3540 = vmatprep.subr.mxu0 0.0
    %3541 = vmatpush2.msra.mxu0 %v3417
    %3542 = vmatprep.subr.mxu0 0.0
    %3543 = vmatpush2.msra.mxu0 %v3416
    %3544 = vmatprep.mubr.f32.mxu0 %v3396
    %3545 = vmatmul.mubr.f32.gmra.mxu0 %v3395
    %v3546 = vpop.f32.mrf.mxu0
    %v3547 = vadd.f32 0.0, %v3546
    %v3548 = vpop.f32.mrf.mxu0
    %3549 = vdwg.mxu0
    %3550 = vmatprep.subr.mxu0 0.0
    %3551 = vmatpush1.msra.mxu0 %v3447
    %3552 = vmatprep.subr.mxu0 0.0
    %3553 = vmatpush1.msra.mxu0 %v3446
    %3554 = vmatprep.subr.mxu0 0.0
    %3555 = vmatpush1.msra.mxu0 %v3445
    %3556 = vmatprep.subr.mxu0 0.0
    %3557 = vmatpush1.msra.mxu0 %v3444
    %3558 = vmatprep.subr.mxu0 0.0
    %3559 = vmatpush1.msra.mxu0 %v3443
    %3560 = vmatprep.subr.mxu0 0.0
    %3561 = vmatpush1.msra.mxu0 %v3442
    %3562 = vmatprep.subr.mxu0 0.0
    %3563 = vmatpush1.msra.mxu0 %v3441
    %3564 = vmatprep.subr.mxu0 0.0
    %3565 = vmatpush1.msra.mxu0 %v3440
    %3566 = vmatprep.subr.mxu0 0.0
    %3567 = vmatpush1.msra.mxu0 %v3439
    %3568 = vmatprep.subr.mxu0 0.0
    %3569 = vmatpush1.msra.mxu0 %v3438
    %3570 = vmatprep.subr.mxu0 0.0
    %3571 = vmatpush1.msra.mxu0 %v3437
    %3572 = vmatprep.subr.mxu0 0.0
    %3573 = vmatpush1.msra.mxu0 %v3436
    %3574 = vmatprep.subr.mxu0 0.0
    %3575 = vmatpush1.msra.mxu0 %v3435
    %3576 = vmatprep.subr.mxu0 0.0
    %3577 = vmatpush1.msra.mxu0 %v3434
    %3578 = vmatprep.subr.mxu0 0.0
    %3579 = vmatpush1.msra.mxu0 %v3433
    %3580 = vmatprep.subr.mxu0 0.0
    %3581 = vmatpush1.msra.mxu0 %v3432
    %3582 = vmatprep.subr.mxu0 0.0
    %3583 = vmatpush2.msra.mxu0 %v3463
    %3584 = vmatprep.subr.mxu0 0.0
    %3585 = vmatpush2.msra.mxu0 %v3462
    %3586 = vmatprep.subr.mxu0 0.0
    %3587 = vmatpush2.msra.mxu0 %v3461
    %3588 = vmatprep.subr.mxu0 0.0
    %3589 = vmatpush2.msra.mxu0 %v3460
    %3590 = vmatprep.subr.mxu0 0.0
    %3591 = vmatpush2.msra.mxu0 %v3459
    %3592 = vmatprep.subr.mxu0 0.0
    %3593 = vmatpush2.msra.mxu0 %v3458
    %3594 = vmatprep.subr.mxu0 0.0
    %3595 = vmatpush2.msra.mxu0 %v3457
    %3596 = vmatprep.subr.mxu0 0.0
    %3597 = vmatpush2.msra.mxu0 %v3456
    %3598 = vmatprep.subr.mxu0 0.0
    %3599 = vmatpush2.msra.mxu0 %v3455
    %3600 = vmatprep.subr.mxu0 0.0
    %3601 = vmatpush2.msra.mxu0 %v3454
    %3602 = vmatprep.subr.mxu0 0.0
    %3603 = vmatpush2.msra.mxu0 %v3453
    %3604 = vmatprep.subr.mxu0 0.0
    %3605 = vmatpush2.msra.mxu0 %v3452
    %3606 = vmatprep.subr.mxu0 0.0
    %3607 = vmatpush2.msra.mxu0 %v3451
    %3608 = vmatprep.subr.mxu0 0.0
    %3609 = vmatpush2.msra.mxu0 %v3450
    %3610 = vmatprep.subr.mxu0 0.0
    %3611 = vmatpush2.msra.mxu0 %v3449
    %3612 = vmatprep.subr.mxu0 0.0
    %3613 = vmatpush2.msra.mxu0 %v3448
    %3614 = vmatprep.mubr.f32.mxu0 %v3398
    %3615 = vmatmul.mubr.f32.gmra.mxu0 %v3397
    %v3616 = vpop.f32.mrf.mxu0
    %v3617 = vadd.f32 %v3547, %v3616
    %v3618 = vpop.f32.mrf.mxu0
    %3619 = vdwg.mxu0
    %3620 = vmatprep.subr.mxu0 0.0
    %3621 = vmatpush1.msra.mxu0 %v3479
    %3622 = vmatprep.subr.mxu0 0.0
    %3623 = vmatpush1.msra.mxu0 %v3478
    %3624 = vmatprep.subr.mxu0 0.0
    %3625 = vmatpush1.msra.mxu0 %v3477
    %3626 = vmatprep.subr.mxu0 0.0
    %3627 = vmatpush1.msra.mxu0 %v3476
    %3628 = vmatprep.subr.mxu0 0.0
    %3629 = vmatpush1.msra.mxu0 %v3475
    %3630 = vmatprep.subr.mxu0 0.0
    %3631 = vmatpush1.msra.mxu0 %v3474
    %3632 = vmatprep.subr.mxu0 0.0
    %3633 = vmatpush1.msra.mxu0 %v3473
    %3634 = vmatprep.subr.mxu0 0.0
    %3635 = vmatpush1.msra.mxu0 %v3472
    %3636 = vmatprep.subr.mxu0 0.0
    %3637 = vmatpush1.msra.mxu0 %v3471
    %3638 = vmatprep.subr.mxu0 0.0
    %3639 = vmatpush1.msra.mxu0 %v3470
    %3640 = vmatprep.subr.mxu0 0.0
    %3641 = vmatpush1.msra.mxu0 %v3469
    %3642 = vmatprep.subr.mxu0 0.0
    %3643 = vmatpush1.msra.mxu0 %v3468
    %3644 = vmatprep.subr.mxu0 0.0
    %3645 = vmatpush1.msra.mxu0 %v3467
    %3646 = vmatprep.subr.mxu0 0.0
    %3647 = vmatpush1.msra.mxu0 %v3466
    %3648 = vmatprep.subr.mxu0 0.0
    %3649 = vmatpush1.msra.mxu0 %v3465
    %3650 = vmatprep.subr.mxu0 0.0
    %3651 = vmatpush1.msra.mxu0 %v3464
    %3652 = vmatprep.subr.mxu0 0.0
    %3653 = vmatpush2.msra.mxu0 0.0
    %3654 = vmatprep.subr.mxu0 0.0
    %3655 = vmatpush2.msra.mxu0 0.0
    %3656 = vmatprep.subr.mxu0 0.0
    %3657 = vmatpush2.msra.mxu0 0.0
    %3658 = vmatprep.subr.mxu0 0.0
    %3659 = vmatpush2.msra.mxu0 0.0
    %3660 = vmatprep.subr.mxu0 0.0
    %3661 = vmatpush2.msra.mxu0 0.0
    %3662 = vmatprep.subr.mxu0 0.0
    %3663 = vmatpush2.msra.mxu0 0.0
    %3664 = vmatprep.subr.mxu0 0.0
    %3665 = vmatpush2.msra.mxu0 0.0
    %3666 = vmatprep.subr.mxu0 0.0
    %3667 = vmatpush2.msra.mxu0 0.0
    %3668 = vmatprep.subr.mxu0 0.0
    %3669 = vmatpush2.msra.mxu0 0.0
    %3670 = vmatprep.subr.mxu0 0.0
    %3671 = vmatpush2.msra.mxu0 0.0
    %3672 = vmatprep.subr.mxu0 0.0
    %3673 = vmatpush2.msra.mxu0 0.0
    %3674 = vmatprep.subr.mxu0 0.0
    %3675 = vmatpush2.msra.mxu0 0.0
    %3676 = vmatprep.subr.mxu0 0.0
    %3677 = vmatpush2.msra.mxu0 0.0
    %3678 = vmatprep.subr.mxu0 0.0
    %3679 = vmatpush2.msra.mxu0 0.0
    %3680 = vmatprep.subr.mxu0 0.0
    %3681 = vmatpush2.msra.mxu0 0.0
    %3682 = vmatprep.subr.mxu0 0.0
    %3683 = vmatpush2.msra.mxu0 0.0
    %3684 = vmatprep.mubr.f32.mxu0 0.0
    %3685 = vmatmul.mubr.f32.gmra.mxu0 %v3399
    %v3686 = vpop.f32.mrf.mxu0
    %v3687 = vadd.f32 %v3617, %v3686
    %v3688 = vpop.f32.mrf.mxu0
    %3689 = vdwg.mxu0
    %v3690 = vmax.f32 %v3687, 1.1920929e-07
    %v3691 = vlog2.pop %v3690
    %v3692 = vmul.f32 %v3691, 0.6931472
    %3693 = vst [vmem:[#allocation10] sm:$0xff] %v3692
    // Predicated region
    $region34: #{tpu_custom_call.1} parent=1 // pred_check
      _
    $region35: #{tpu_custom_call.1} parent=1 // pred_check_branch
      %3695 = sbr.rel (0) target = $region37
    $region36: #{tpu_custom_call.1} parent=1 // pred_region
      %s3697 = ssub.s32 128, 128
      %3698 = vsyncadd [#allocation4], %s3697
      %s3700 = sshll.u32 [#allocation10], 4
      %s3701 = int_to_ptr.vmem [resolvable:$true] %s3700
      %3703 = dma.vmem_to_hbm [thread:$0]  %s3701, 128, %s4, [#allocation4]
    $region37: #{tpu_custom_call.1} parent=1 // pred_fallthru
      _
    // Predicated region
    $region38: #{tpu_custom_call.1} parent=1 // pred_check
      _
    $region39: #{tpu_custom_call.1} parent=1 // pred_check_branch
      %3705 = sbr.rel (0) target = $region41
    $region40: #{tpu_custom_call.1} parent=1 // pred_region
      %3706 = dma.done [#allocation4], 128
    $region41: #{tpu_custom_call.1} parent=1 // pred_fallthru
      _
    %3707 = vsyncpa [#allocation3], 1
    %3708 = vsyncpa [#allocation6], 1
    %3709 = vsyncpa [#allocation9], 1
    %3710 = vsyncpa [#allocation4], 1

</llo_original>
